<compile_context>
chip_gen: v7x
topology: tpu7x:2x2x1
jax: 0.10.0
libtpu: 0.0.40
codegen_flags: <defaults>
</compile_context>

<pallas_src>
import numpy as np
import jax
import jax.numpy as jnp
from jax.experimental import pallas as pl
from jax.experimental.pallas import tpu as pltpu

K = 4          # conv kernel size (fixed by the module)
BN_EPS = 1e-5  # PyTorch BatchNorm2d default eps
LANE = 128


def _round_up(v, m):
    return ((v + m - 1) // m) * m


# ------------- kernel 1: fused LeakyReLU + down conv + ReLU + up conv + BN partials
def _make_fused_kernel(h2, w2, c_in, inner_pad, co_pad):
    m_rows = h2 * w2
    kk_cin = K * K * c_in

    def kernel(xph_ref, w1_ref, wup_ref, z_ref, stats_ref, yp_ref, dlhs_ref):
        # xph_ref : (1, 4, h2+1, w2+1, c_in)  f32  parity planes of padded input
        # w1_ref  : (16*c_in, inner_pad)      bf16 tap-stacked down-conv weight
        # wup_ref : (4, 4*inner_pad, co_pad)  bf16 per-phase tap-stacked up-conv weight
        # z_ref   : (1, 4, h2*w2, co_pad)     f32  un-normalized transpose-conv output
        # stats_ref:(1, 2, co_pad)            f32  per-sample (sum, sumsq)
        # yp_ref  : (h2+2, w2+2, inner_pad)   f32  VMEM scratch: zero-halo inner act
        # dlhs_ref: (h2, w2, 16*c_in)         f32  VMEM scratch: tap-stacked down LHS
        x = xph_ref[0]                                   # (4, h2+1, w2+1, c_in)
        x = jnp.where(x > 0, x, 0.2 * x)                 # LeakyReLU(0.2), once, f32

        # ---- down conv (k=4, s=2, p=1): gather the 16 shifted taps along the
        #      contraction dim into one LHS, then a single MXU matmul.
        for kh in range(K):
            for kw in range(K):
                p = 2 * (kh % 2) + (kw % 2)
                dh, dw = kh // 2, kw // 2
                t = kh * K + kw
                dlhs_ref[:, :, t * c_in:(t + 1) * c_in] = (
                    x[p, dh:dh + h2, dw:dw + w2, :])
        lhs = dlhs_ref[...].reshape(m_rows, kk_cin).astype(jnp.bfloat16)  # 1 cast
        y = jnp.dot(lhs, w1_ref[...], preferred_element_type=jnp.float32)
        y = jnp.maximum(y, 0.0)                          # ReLU, f32  (m_rows, inner_pad)

        # ---- inner activation stays in VMEM; zero only the 1-element halo
        #      (interior fully overwritten each grid step -> no cross-step state).
        zero_row = jnp.zeros((1, w2 + 2, inner_pad), jnp.float32)
        zero_col = jnp.zeros((h2 + 2, 1, inner_pad), jnp.float32)
        yp_ref[0:1, :, :] = zero_row
        yp_ref[h2 + 1:h2 + 2, :, :] = zero_row
        yp_ref[:, 0:1, :] = zero_col
        yp_ref[:, w2 + 1:w2 + 2, :] = zero_col
        yp_ref[1:1 + h2, 1:1 + w2, :] = y.reshape(h2, w2, inner_pad)

        # ---- transpose conv (k=4, s=2, p=1) as 4 dense output phases; per phase
        #      the 4 live 2x2 taps are stacked along the contraction -> 1 matmul.
        tot_s = jnp.zeros((1, co_pad), jnp.float32)
        tot_ss = jnp.zeros((1, co_pad), jnp.float32)
        for ph in range(2):
            for pw in range(2):
                taps = [yp_ref[ph + dh:ph + dh + h2, pw + dw:pw + dw + w2, :]
                        for dh in range(2) for dw in range(2)]
                ulhs = jnp.concatenate(taps, axis=-1)    # (h2, w2, 4*inner_pad), aligned
                ulhs = ulhs.reshape(m_rows, 4 * inner_pad).astype(jnp.bfloat16)
                zf = jnp.dot(ulhs, wup_ref[2 * ph + pw],
                             preferred_element_type=jnp.float32)   # (m_rows, co_pad)
                z_ref[0, 2 * ph + pw] = zf               # lane-dense store
                tot_s = tot_s + jnp.sum(zf, axis=0, keepdims=True)
                tot_ss = tot_ss + jnp.sum(zf * zf, axis=0, keepdims=True)
        stats_ref[0, 0:1, :] = tot_s
        stats_ref[0, 1:2, :] = tot_ss

    return kernel


def fused_down_up(x_phases, w1, wup, h2, w2, c_in, inner_pad, co_pad):
    n = x_phases.shape[0]
    m_rows = h2 * w2
    kernel = _make_fused_kernel(h2, w2, c_in, inner_pad, co_pad)
    flops = (2 * n * m_rows * (K * K * c_in) * inner_pad
             + 2 * n * 4 * m_rows * (4 * inner_pad) * co_pad)
    bytes_accessed = (x_phases.size * 4 + w1.size * 2 + wup.size * 2
                      + n * 4 * m_rows * co_pad * 4 + n * 2 * co_pad * 4)
    return pl.pallas_call(
        kernel,
        out_shape=(
            jax.ShapeDtypeStruct((n, 4, m_rows, co_pad), jnp.float32),
            jax.ShapeDtypeStruct((n, 2, co_pad), jnp.float32),
        ),
        grid=(n,),
        in_specs=[
            pl.BlockSpec((1, 4, h2 + 1, w2 + 1, c_in),
                         lambda b: (b, 0, 0, 0, 0)),
            pl.BlockSpec((K * K * c_in, inner_pad), lambda b: (0, 0)),
            pl.BlockSpec((4, 4 * inner_pad, co_pad), lambda b: (0, 0, 0)),
        ],
        out_specs=(
            pl.BlockSpec((1, 4, m_rows, co_pad), lambda b: (b, 0, 0, 0)),
            pl.BlockSpec((1, 2, co_pad), lambda b: (b, 0, 0)),
        ),
        scratch_shapes=[
            pltpu.VMEM((h2 + 2, w2 + 2, inner_pad), jnp.float32),
            pltpu.VMEM((h2, w2, K * K * c_in), jnp.float32),
        ],
        compiler_params=pltpu.CompilerParams(
            dimension_semantics=("parallel",),
            vmem_limit_bytes=32 * 1024 * 1024),
        cost_estimate=pl.CostEstimate(flops=flops, transcendentals=0,
                                      bytes_accessed=bytes_accessed),
    )(x_phases, w1, wup)


# ------------- kernel 2: BN normalize + de-interleave + skip-connection concat
def _make_norm_concat_kernel(h2, w2, c_in, outer_nc, co_pad):
    def kernel(z_ref, x_ref, scale_ref, shift_ref, o_ref):
        # z_ref    : (1, 4, h2*w2, co_pad)     f32   raw transpose-conv output
        # x_ref    : (1, 4, h2+1, w2+1, c_in)  f32   parity planes of padded input
        # scale/shift: (1, co_pad)             f32   folded BN scale / shift
        # o_ref    : (1, 2, 2, h2, w2, c_in+outer_nc)  "phase"-layout concat output
        sc = scale_ref[...]
        sh = shift_ref[...]
        for p in range(4):
            ph, pw = p // 2, p % 2
            zn = z_ref[0, p] * sc + sh                        # (m_rows, co_pad)
            zn = zn.reshape(h2, w2, co_pad)
            o_ref[0, ph, pw, :, :, c_in:] = zn[:, :, :outer_nc]
            # skip connection: de-interleave x from the (already loaded) padded
            # parity planes; phase (ph,pw) lives in plane 3-p at offset (ph,pw).
            o_ref[0, ph, pw, :, :, :c_in] = (
                x_ref[0, 3 - p, ph:ph + h2, pw:pw + w2, :])
    return kernel


def bn_normalize_concat(z_packed, xph, scale, shift, h2, w2, c_in, outer_nc, co_pad):
    n = z_packed.shape[0]
    m_rows = h2 * w2
    c_total = c_in + outer_nc
    kernel = _make_norm_concat_kernel(h2, w2, c_in, outer_nc, co_pad)
    return pl.pallas_call(
        kernel,
        out_shape=jax.ShapeDtypeStruct((n, 2, 2, h2, w2, c_total), jnp.float32),
        grid=(n,),
        in_specs=[
            pl.BlockSpec((1, 4, m_rows, co_pad), lambda b: (b, 0, 0, 0)),
            pl.BlockSpec((1, 4, h2 + 1, w2 + 1, c_in),
                         lambda b: (b, 0, 0, 0, 0)),
            pl.BlockSpec((1, co_pad), lambda b: (0, 0)),
            pl.BlockSpec((1, co_pad), lambda b: (0, 0)),
        ],
        out_specs=pl.BlockSpec((1, 2, 2, h2, w2, c_total),
                               lambda b: (b, 0, 0, 0, 0, 0)),
        compiler_params=pltpu.CompilerParams(
            dimension_semantics=("parallel",),
            vmem_limit_bytes=32 * 1024 * 1024),
    )(z_packed, xph, scale, shift)


# ------------------------- JAX wrapper (layout plumbing only) -------------- #

def unet_innermost_forward(x_nchw, w_down, w_up, gamma, beta):
    n, c_in, h, w = x_nchw.shape
    inner_nc = w_down.shape[0]
    outer_nc = w_up.shape[1]
    h2, w2 = h // 2, w // 2
    inner_pad = _round_up(inner_nc, LANE)
    co_pad = _round_up(outer_nc, LANE)
    c_total = c_in + outer_nc

    # NCHW -> NHWC, pad=1, then parity-deinterleave into 4 phase planes;
    # plane p = 2*(row%2) + (col%2), each plane is (h2+1, w2+1, c_in).
    x = jnp.transpose(x_nchw, (0, 2, 3, 1)).astype(jnp.float32)
    xp = jnp.pad(x, ((0, 0), (1, 1), (1, 1), (0, 0)))
    xph = xp.reshape(n, h2 + 1, 2, w2 + 1, 2, c_in)
    xph = jnp.transpose(xph, (0, 2, 4, 1, 3, 5)).reshape(n, 4, h2 + 1, w2 + 1, c_in)

    # Down-conv weight, tap-stacked along the contraction dim:
    # (kh, kw, c_in, inner) -> (16*c_in, inner_pad), bf16, inner padded to lanes.
    w1 = jnp.transpose(w_down, (2, 3, 1, 0)).reshape(K * K * c_in, inner_nc)
    w1 = jnp.pad(w1, ((0, 0), (0, inner_pad - inner_nc))).astype(jnp.bfloat16)

    # Transpose-conv weight: per output phase (ph,pw) the 4 live 2x2 taps
    # (kh=3-2*dh-ph, kw=3-2*dw-pw) stacked along the contraction dim:
    # (4, 4*inner_pad, co_pad), bf16, both channel dims zero-padded to lanes.
    phase_mats = []
    for ph in range(2):
        for pw in range(2):
            tap_mats = []
            for dh in range(2):
                for dw in range(2):
                    kh = 3 - 2 * dh - ph
                    kw = 3 - 2 * dw - pw
                    m = jnp.pad(w_up[:, :, kh, kw],
                                ((0, inner_pad - inner_nc),
                                 (0, co_pad - outer_nc)))
                    tap_mats.append(m)
            phase_mats.append(jnp.concatenate(tap_mats, axis=0))
    wup = jnp.stack(phase_mats, axis=0).astype(jnp.bfloat16)

    # kernel 1: fused LeakyReLU + conv + ReLU + transpose conv + BN partial sums
    z_packed, stats = fused_down_up(xph, w1, wup, h2, w2, c_in, inner_pad, co_pad)

    # BN finalize (per-channel, tiny) in f32.
    # Note: E[x^2]-E[x]^2 in f32 can cancel for very large batches/magnitudes;
    # acceptable for training-mode BN at these scales.
    total = jnp.sum(stats, axis=0)                        # (2, co_pad)
    cnt = jnp.float32(n * h * w)
    mean = total[0] / cnt
    var = jnp.maximum(total[1] / cnt - mean * mean, 0.0)  # biased (training mode)
    gamma_p = jnp.pad(gamma.astype(jnp.float32), (0, co_pad - outer_nc),
                      constant_values=1.0)
    beta_p = jnp.pad(beta.astype(jnp.float32), (0, co_pad - outer_nc))
    scale_v = gamma_p * jax.lax.rsqrt(var + BN_EPS)
    shift_v = beta_p - mean * scale_v

    # kernel 2: BN normalize + de-interleave + skip-connection concat, fused.
    out_pp = bn_normalize_concat(z_packed, xph,
                                 scale_v.reshape(1, co_pad),
                                 shift_v.reshape(1, co_pad),
                                 h2, w2, c_in, outer_nc, co_pad)

    # Single remaining XLA op: phase layout (b, ph, pw, i, j, c) -> NCHW.
    out = jnp.transpose(out_pp, (0, 5, 3, 1, 4, 2)).reshape(n, c_total, h, w)
    return out


# ------------------------- numpy reference --------------------------------- #

def ref_forward_np(x, w_down, w_up, gamma, beta):
    n, c_in, h, w = x.shape
    inner_nc = w_down.shape[0]
    outer_nc = w_up.shape[1]
    h2, w2 = h // 2, w // 2

    a = np.where(x > 0, x, 0.2 * x).astype(np.float32)             # LeakyReLU
    ap = np.pad(a, ((0, 0), (0, 0), (1, 1), (1, 1)))
    y = np.zeros((n, inner_nc, h2, w2), np.float32)
    for kh in range(K):
        for kw in range(K):
            patch = ap[:, :, kh:kh + 2 * h2:2, kw:kw + 2 * w2:2]
            y += np.einsum('ncij,oc->noij', patch, w_down[:, :, kh, kw])

    r = np.maximum(y, 0.0)                                         # ReLU
    zt = np.zeros((n, outer_nc, h + 2, w + 2), np.float32)
    for kh in range(K):
        for kw in range(K):
            zt[:, :, kh:kh + 2 * h2:2, kw:kw + 2 * w2:2] += np.einsum(
                'ncab,co->noab', r, w_up[:, :, kh, kw])
    z = zt[:, :, 1:h + 1, 1:w + 1]                                 # ConvTranspose out

    mean = z.mean(axis=(0, 2, 3), keepdims=True)
    var = z.var(axis=(0, 2, 3), keepdims=True)                     # biased (training)
    zn = (z - mean) / np.sqrt(var + BN_EPS)
    zn = gamma.reshape(1, -1, 1, 1) * zn + beta.reshape(1, -1, 1, 1)
    return np.concatenate([x, zn], axis=1)


# ------------------------------- main --------------------------------------- #

if __name__ == "__main__":
    key = jax.random.PRNGKey(0)
    k1, k2, k3, k4, k5 = jax.random.split(key, 5)

    N, outer_nc, inner_nc, H = 2, 4, 8, 16
    input_nc = outer_nc  # innermost block: input_nc defaults to outer_nc

    def snap_bf16(a):
        # Test data exactly representable in bf16, so the reference comparison
        # only sees the intended in-kernel bf16 rounding of the intermediate
        # activation (MXU uses bf16 operands with f32 accumulation).
        return a.astype(jnp.bfloat16).astype(jnp.float32)

    x = snap_bf16(jax.random.normal(k1, (N, input_nc, H, H), jnp.float32))
    w_down = snap_bf16(0.1 * jax.random.normal(k2, (inner_nc, input_nc, K, K),
                                               jnp.float32))
    w_up = snap_bf16(0.1 * jax.random.normal(k3, (inner_nc, outer_nc, K, K),
                                             jnp.float32))
    gamma = 1.0 + 0.1 * jax.random.normal(k4, (outer_nc,), jnp.float32)
    beta = 0.1 * jax.random.normal(k5, (outer_nc,), jnp.float32)

    out = jax.jit(unet_innermost_forward)(x, w_down, w_up, gamma, beta)
    out = jax.block_until_ready(out)

    assert out.shape == (N, input_nc + outer_nc, H, H)
    ref = ref_forward_np(np.asarray(x), np.asarray(w_down), np.asarray(w_up),
                         np.asarray(gamma), np.asarray(beta))
    np.testing.assert_allclose(np.asarray(out), ref, rtol=1e-2, atol=1e-2)
    print("KERNEL_OK")
</pallas_src>

<mosaic_0001>
module attributes {stable_mosaic.version = 11 : i64} {
  func.func @kernel(%arg0: i32, %arg1: memref<1x4x9x9x4xf32, #tpu.memory_space<vmem>>, %arg2: memref<64x128xbf16, #tpu.memory_space<vmem>>, %arg3: memref<4x512x128xbf16, #tpu.memory_space<vmem>>, %arg4: memref<1x4x64x128xf32, #tpu.memory_space<vmem>>, %arg5: memref<1x2x128xf32, #tpu.memory_space<vmem>>, %arg6: memref<10x10x128xf32, #tpu.memory_space<vmem>>, %arg7: memref<8x8x64xf32, #tpu.memory_space<vmem>>) attributes {dimension_semantics = [#tpu.dimension_semantics<parallel>], iteration_bounds = array<i64: 2>, scalar_prefetch = 0 : i64, scratch_operands = 2 : i64, tpu.core_type = #tpu.core_type<tc>, window_params = [{transform_indices = @transform_0, window_bounds = array<i64: 1, 4, 9, 9, 4>}, {pipeline_mode = #tpu.pipeline_mode<synchronous>, transform_indices = @transform_1, window_bounds = array<i64: 64, 128>}, {pipeline_mode = #tpu.pipeline_mode<synchronous>, transform_indices = @transform_2, window_bounds = array<i64: 4, 512, 128>}, {transform_indices = @transform_3, window_bounds = array<i64: 1, 4, 64, 128>}, {transform_indices = @transform_4, window_bounds = array<i64: 1, 2, 128>}]} {
    %c0 = arith.constant 0 : index
    %c0_0 = arith.constant 0 : index
    %c0_1 = arith.constant 0 : index
    %c0_2 = arith.constant 0 : index
    %c0_3 = arith.constant 0 : index
    %0 = vector.load %arg1[%c0, %c0_0, %c0_1, %c0_2, %c0_3] : memref<1x4x9x9x4xf32, #tpu.memory_space<vmem>>, vector<1x4x9x9x4xf32>
    %1 = vector.shape_cast %0 : vector<1x4x9x9x4xf32> to vector<4x9x9x4xf32>
    %cst = arith.constant 0.000000e+00 : f32
    %2 = vector.broadcast %cst : f32 to vector<4x9x9x4xf32>
    %3 = arith.cmpf ogt, %1, %2 : vector<4x9x9x4xf32>
    %cst_4 = arith.constant 2.000000e-01 : f32
    %4 = vector.broadcast %cst_4 : f32 to vector<4x9x9x4xf32>
    %5 = arith.mulf %4, %1 : vector<4x9x9x4xf32>
    %6 = arith.select %3, %1, %5 : vector<4x9x9x4xi1>, vector<4x9x9x4xf32>
    %7 = vector.extract_strided_slice %6 {offsets = [0, 0, 0, 0], sizes = [1, 8, 8, 4], strides = [1, 1, 1, 1]} : vector<4x9x9x4xf32> to vector<1x8x8x4xf32>
    %8 = vector.shape_cast %7 : vector<1x8x8x4xf32> to vector<8x8x4xf32>
    %c0_5 = arith.constant 0 : index
    %c0_6 = arith.constant 0 : index
    %c0_7 = arith.constant 0 : index
    %9 = vector.load %arg7[%c0_5, %c0_6, %c0_7] : memref<8x8x64xf32, #tpu.memory_space<vmem>>, vector<8x8x4xf32>
    tpu.vector_store %arg7[%c0_5, %c0_6, %c0_7], %8 {strides = array<i32>} : memref<8x8x64xf32, #tpu.memory_space<vmem>>, vector<8x8x4xf32>,
    %10 = vector.extract_strided_slice %6 {offsets = [1, 0, 0, 0], sizes = [1, 8, 8, 4], strides = [1, 1, 1, 1]} : vector<4x9x9x4xf32> to vector<1x8x8x4xf32>
    %11 = vector.shape_cast %10 : vector<1x8x8x4xf32> to vector<8x8x4xf32>
    %c0_8 = arith.constant 0 : index
    %c0_9 = arith.constant 0 : index
    %c4 = arith.constant 4 : index
    %12 = vector.load %arg7[%c0_8, %c0_9, %c4] : memref<8x8x64xf32, #tpu.memory_space<vmem>>, vector<8x8x4xf32>
    tpu.vector_store %arg7[%c0_8, %c0_9, %c4], %11 {strides = array<i32>} : memref<8x8x64xf32, #tpu.memory_space<vmem>>, vector<8x8x4xf32>,
    %13 = vector.extract_strided_slice %6 {offsets = [0, 0, 1, 0], sizes = [1, 8, 8, 4], strides = [1, 1, 1, 1]} : vector<4x9x9x4xf32> to vector<1x8x8x4xf32>
    %14 = vector.shape_cast %13 : vector<1x8x8x4xf32> to vector<8x8x4xf32>
    %c0_10 = arith.constant 0 : index
    %c0_11 = arith.constant 0 : index
    %c8 = arith.constant 8 : index
    %15 = vector.load %arg7[%c0_10, %c0_11, %c8] : memref<8x8x64xf32, #tpu.memory_space<vmem>>, vector<8x8x4xf32>
    tpu.vector_store %arg7[%c0_10, %c0_11, %c8], %14 {strides = array<i32>} : memref<8x8x64xf32, #tpu.memory_space<vmem>>, vector<8x8x4xf32>,
    %16 = vector.extract_strided_slice %6 {offsets = [1, 0, 1, 0], sizes = [1, 8, 8, 4], strides = [1, 1, 1, 1]} : vector<4x9x9x4xf32> to vector<1x8x8x4xf32>
    %17 = vector.shape_cast %16 : vector<1x8x8x4xf32> to vector<8x8x4xf32>
    %c0_12 = arith.constant 0 : index
    %c0_13 = arith.constant 0 : index
    %c12 = arith.constant 12 : index
    %18 = vector.load %arg7[%c0_12, %c0_13, %c12] : memref<8x8x64xf32, #tpu.memory_space<vmem>>, vector<8x8x4xf32>
    tpu.vector_store %arg7[%c0_12, %c0_13, %c12], %17 {strides = array<i32>} : memref<8x8x64xf32, #tpu.memory_space<vmem>>, vector<8x8x4xf32>,
    %19 = vector.extract_strided_slice %6 {offsets = [2, 0, 0, 0], sizes = [1, 8, 8, 4], strides = [1, 1, 1, 1]} : vector<4x9x9x4xf32> to vector<1x8x8x4xf32>
    %20 = vector.shape_cast %19 : vector<1x8x8x4xf32> to vector<8x8x4xf32>
    %c0_14 = arith.constant 0 : index
    %c0_15 = arith.constant 0 : index
    %c16 = arith.constant 16 : index
    %21 = vector.load %arg7[%c0_14, %c0_15, %c16] : memref<8x8x64xf32, #tpu.memory_space<vmem>>, vector<8x8x4xf32>
    tpu.vector_store %arg7[%c0_14, %c0_15, %c16], %20 {strides = array<i32>} : memref<8x8x64xf32, #tpu.memory_space<vmem>>, vector<8x8x4xf32>,
    %22 = vector.extract_strided_slice %6 {offsets = [3, 0, 0, 0], sizes = [1, 8, 8, 4], strides = [1, 1, 1, 1]} : vector<4x9x9x4xf32> to vector<1x8x8x4xf32>
    %23 = vector.shape_cast %22 : vector<1x8x8x4xf32> to vector<8x8x4xf32>
    %c0_16 = arith.constant 0 : index
    %c0_17 = arith.constant 0 : index
    %c20 = arith.constant 20 : index
    %24 = vector.load %arg7[%c0_16, %c0_17, %c20] : memref<8x8x64xf32, #tpu.memory_space<vmem>>, vector<8x8x4xf32>
    tpu.vector_store %arg7[%c0_16, %c0_17, %c20], %23 {strides = array<i32>} : memref<8x8x64xf32, #tpu.memory_space<vmem>>, vector<8x8x4xf32>,
    %25 = vector.extract_strided_slice %6 {offsets = [2, 0, 1, 0], sizes = [1, 8, 8, 4], strides = [1, 1, 1, 1]} : vector<4x9x9x4xf32> to vector<1x8x8x4xf32>
    %26 = vector.shape_cast %25 : vector<1x8x8x4xf32> to vector<8x8x4xf32>
    %c0_18 = arith.constant 0 : index
    %c0_19 = arith.constant 0 : index
    %c24 = arith.constant 24 : index
    %27 = vector.load %arg7[%c0_18, %c0_19, %c24] : memref<8x8x64xf32, #tpu.memory_space<vmem>>, vector<8x8x4xf32>
    tpu.vector_store %arg7[%c0_18, %c0_19, %c24], %26 {strides = array<i32>} : memref<8x8x64xf32, #tpu.memory_space<vmem>>, vector<8x8x4xf32>,
    %28 = vector.extract_strided_slice %6 {offsets = [3, 0, 1, 0], sizes = [1, 8, 8, 4], strides = [1, 1, 1, 1]} : vector<4x9x9x4xf32> to vector<1x8x8x4xf32>
    %29 = vector.shape_cast %28 : vector<1x8x8x4xf32> to vector<8x8x4xf32>
    %c0_20 = arith.constant 0 : index
    %c0_21 = arith.constant 0 : index
    %c28 = arith.constant 28 : index
    %30 = vector.load %arg7[%c0_20, %c0_21, %c28] : memref<8x8x64xf32, #tpu.memory_space<vmem>>, vector<8x8x4xf32>
    tpu.vector_store %arg7[%c0_20, %c0_21, %c28], %29 {strides = array<i32>} : memref<8x8x64xf32, #tpu.memory_space<vmem>>, vector<8x8x4xf32>,
    %31 = vector.extract_strided_slice %6 {offsets = [0, 1, 0, 0], sizes = [1, 8, 8, 4], strides = [1, 1, 1, 1]} : vector<4x9x9x4xf32> to vector<1x8x8x4xf32>
    %32 = vector.shape_cast %31 : vector<1x8x8x4xf32> to vector<8x8x4xf32>
    %c0_22 = arith.constant 0 : index
    %c0_23 = arith.constant 0 : index
    %c32 = arith.constant 32 : index
    %33 = vector.load %arg7[%c0_22, %c0_23, %c32] : memref<8x8x64xf32, #tpu.memory_space<vmem>>, vector<8x8x4xf32>
    tpu.vector_store %arg7[%c0_22, %c0_23, %c32], %32 {strides = array<i32>} : memref<8x8x64xf32, #tpu.memory_space<vmem>>, vector<8x8x4xf32>,
    %34 = vector.extract_strided_slice %6 {offsets = [1, 1, 0, 0], sizes = [1, 8, 8, 4], strides = [1, 1, 1, 1]} : vector<4x9x9x4xf32> to vector<1x8x8x4xf32>
    %35 = vector.shape_cast %34 : vector<1x8x8x4xf32> to vector<8x8x4xf32>
    %c0_24 = arith.constant 0 : index
    %c0_25 = arith.constant 0 : index
    %c36 = arith.constant 36 : index
    %36 = vector.load %arg7[%c0_24, %c0_25, %c36] : memref<8x8x64xf32, #tpu.memory_space<vmem>>, vector<8x8x4xf32>
    tpu.vector_store %arg7[%c0_24, %c0_25, %c36], %35 {strides = array<i32>} : memref<8x8x64xf32, #tpu.memory_space<vmem>>, vector<8x8x4xf32>,
    %37 = vector.extract_strided_slice %6 {offsets = [0, 1, 1, 0], sizes = [1, 8, 8, 4], strides = [1, 1, 1, 1]} : vector<4x9x9x4xf32> to vector<1x8x8x4xf32>
    %38 = vector.shape_cast %37 : vector<1x8x8x4xf32> to vector<8x8x4xf32>
    %c0_26 = arith.constant 0 : index
    %c0_27 = arith.constant 0 : index
    %c40 = arith.constant 40 : index
    %39 = vector.load %arg7[%c0_26, %c0_27, %c40] : memref<8x8x64xf32, #tpu.memory_space<vmem>>, vector<8x8x4xf32>
    tpu.vector_store %arg7[%c0_26, %c0_27, %c40], %38 {strides = array<i32>} : memref<8x8x64xf32, #tpu.memory_space<vmem>>, vector<8x8x4xf32>,
    %40 = vector.extract_strided_slice %6 {offsets = [1, 1, 1, 0], sizes = [1, 8, 8, 4], strides = [1, 1, 1, 1]} : vector<4x9x9x4xf32> to vector<1x8x8x4xf32>
    %41 = vector.shape_cast %40 : vector<1x8x8x4xf32> to vector<8x8x4xf32>
    %c0_28 = arith.constant 0 : index
    %c0_29 = arith.constant 0 : index
    %c44 = arith.constant 44 : index
    %42 = vector.load %arg7[%c0_28, %c0_29, %c44] : memref<8x8x64xf32, #tpu.memory_space<vmem>>, vector<8x8x4xf32>
    tpu.vector_store %arg7[%c0_28, %c0_29, %c44], %41 {strides = array<i32>} : memref<8x8x64xf32, #tpu.memory_space<vmem>>, vector<8x8x4xf32>,
    %43 = vector.extract_strided_slice %6 {offsets = [2, 1, 0, 0], sizes = [1, 8, 8, 4], strides = [1, 1, 1, 1]} : vector<4x9x9x4xf32> to vector<1x8x8x4xf32>
    %44 = vector.shape_cast %43 : vector<1x8x8x4xf32> to vector<8x8x4xf32>
    %c0_30 = arith.constant 0 : index
    %c0_31 = arith.constant 0 : index
    %c48 = arith.constant 48 : index
    %45 = vector.load %arg7[%c0_30, %c0_31, %c48] : memref<8x8x64xf32, #tpu.memory_space<vmem>>, vector<8x8x4xf32>
    tpu.vector_store %arg7[%c0_30, %c0_31, %c48], %44 {strides = array<i32>} : memref<8x8x64xf32, #tpu.memory_space<vmem>>, vector<8x8x4xf32>,
    %46 = vector.extract_strided_slice %6 {offsets = [3, 1, 0, 0], sizes = [1, 8, 8, 4], strides = [1, 1, 1, 1]} : vector<4x9x9x4xf32> to vector<1x8x8x4xf32>
    %47 = vector.shape_cast %46 : vector<1x8x8x4xf32> to vector<8x8x4xf32>
    %c0_32 = arith.constant 0 : index
    %c0_33 = arith.constant 0 : index
    %c52 = arith.constant 52 : index
    %48 = vector.load %arg7[%c0_32, %c0_33, %c52] : memref<8x8x64xf32, #tpu.memory_space<vmem>>, vector<8x8x4xf32>
    tpu.vector_store %arg7[%c0_32, %c0_33, %c52], %47 {strides = array<i32>} : memref<8x8x64xf32, #tpu.memory_space<vmem>>, vector<8x8x4xf32>,
    %49 = vector.extract_strided_slice %6 {offsets = [2, 1, 1, 0], sizes = [1, 8, 8, 4], strides = [1, 1, 1, 1]} : vector<4x9x9x4xf32> to vector<1x8x8x4xf32>
    %50 = vector.shape_cast %49 : vector<1x8x8x4xf32> to vector<8x8x4xf32>
    %c0_34 = arith.constant 0 : index
    %c0_35 = arith.constant 0 : index
    %c56 = arith.constant 56 : index
    %51 = vector.load %arg7[%c0_34, %c0_35, %c56] : memref<8x8x64xf32, #tpu.memory_space<vmem>>, vector<8x8x4xf32>
    tpu.vector_store %arg7[%c0_34, %c0_35, %c56], %50 {strides = array<i32>} : memref<8x8x64xf32, #tpu.memory_space<vmem>>, vector<8x8x4xf32>,
    %52 = vector.extract_strided_slice %6 {offsets = [3, 1, 1, 0], sizes = [1, 8, 8, 4], strides = [1, 1, 1, 1]} : vector<4x9x9x4xf32> to vector<1x8x8x4xf32>
    %53 = vector.shape_cast %52 : vector<1x8x8x4xf32> to vector<8x8x4xf32>
    %c0_36 = arith.constant 0 : index
    %c0_37 = arith.constant 0 : index
    %c60 = arith.constant 60 : index
    %54 = vector.load %arg7[%c0_36, %c0_37, %c60] : memref<8x8x64xf32, #tpu.memory_space<vmem>>, vector<8x8x4xf32>
    tpu.vector_store %arg7[%c0_36, %c0_37, %c60], %53 {strides = array<i32>} : memref<8x8x64xf32, #tpu.memory_space<vmem>>, vector<8x8x4xf32>,
    %c0_38 = arith.constant 0 : index
    %c0_39 = arith.constant 0 : index
    %c0_40 = arith.constant 0 : index
    %55 = vector.load %arg7[%c0_38, %c0_39, %c0_40] : memref<8x8x64xf32, #tpu.memory_space<vmem>>, vector<8x8x64xf32>
    %56 = vector.shape_cast %55 : vector<8x8x64xf32> to vector<64x64xf32>
    %57 = arith.truncf %56 : vector<64x64xf32> to vector<64x64xbf16>
    %c0_41 = arith.constant 0 : index
    %c0_42 = arith.constant 0 : index
    %58 = vector.load %arg2[%c0_41, %c0_42] : memref<64x128xbf16, #tpu.memory_space<vmem>>, vector<64x128xbf16>
    %cst_43 = arith.constant dense<0.000000e+00> : vector<64x128xf32>
    %59 = tpu.matmul %57, %58, %cst_43 {dimension_numbers = #tpu.dot_dimension_numbers<[1], [0], [0], [1], [0, 0, 1, 1], [], []>} : vector<64x64xbf16>, vector<64x128xbf16>, vector<64x128xf32> -> vector<64x128xf32>
    %cst_44 = arith.constant 0.000000e+00 : f32
    %60 = vector.broadcast %cst_44 : f32 to vector<64x128xf32>
    %61 = arith.maximumf %59, %60 : vector<64x128xf32>
    %cst_45 = arith.constant 0.000000e+00 : f32
    %62 = vector.broadcast %cst_45 : f32 to vector<1x10x128xf32>
    %cst_46 = arith.constant 0.000000e+00 : f32
    %63 = vector.broadcast %cst_46 : f32 to vector<10x1x128xf32>
    %c0_47 = arith.constant 0 : index
    %c0_48 = arith.constant 0 : index
    %c0_49 = arith.constant 0 : index
    %64 = vector.load %arg6[%c0_47, %c0_48, %c0_49] : memref<10x10x128xf32, #tpu.memory_space<vmem>>, vector<1x10x128xf32>
    tpu.vector_store %arg6[%c0_47, %c0_48, %c0_49], %62 {strides = array<i32>} : memref<10x10x128xf32, #tpu.memory_space<vmem>>, vector<1x10x128xf32>,
    %c9 = arith.constant 9 : index
    %c0_50 = arith.constant 0 : index
    %c0_51 = arith.constant 0 : index
    %65 = vector.load %arg6[%c9, %c0_50, %c0_51] : memref<10x10x128xf32, #tpu.memory_space<vmem>>, vector<1x10x128xf32>
    tpu.vector_store %arg6[%c9, %c0_50, %c0_51], %62 {strides = array<i32>} : memref<10x10x128xf32, #tpu.memory_space<vmem>>, vector<1x10x128xf32>,
    %c0_52 = arith.constant 0 : index
    %c0_53 = arith.constant 0 : index
    %c0_54 = arith.constant 0 : index
    %66 = vector.load %arg6[%c0_52, %c0_53, %c0_54] : memref<10x10x128xf32, #tpu.memory_space<vmem>>, vector<10x1x128xf32>
    tpu.vector_store %arg6[%c0_52, %c0_53, %c0_54], %63 {strides = array<i32>} : memref<10x10x128xf32, #tpu.memory_space<vmem>>, vector<10x1x128xf32>,
    %c0_55 = arith.constant 0 : index
    %c9_56 = arith.constant 9 : index
    %c0_57 = arith.constant 0 : index
    %67 = vector.load %arg6[%c0_55, %c9_56, %c0_57] : memref<10x10x128xf32, #tpu.memory_space<vmem>>, vector<10x1x128xf32>
    tpu.vector_store %arg6[%c0_55, %c9_56, %c0_57], %63 {strides = array<i32>} : memref<10x10x128xf32, #tpu.memory_space<vmem>>, vector<10x1x128xf32>,
    %68 = vector.shape_cast %61 : vector<64x128xf32> to vector<8x8x128xf32>
    %c1 = arith.constant 1 : index
    %c1_58 = arith.constant 1 : index
    %c0_59 = arith.constant 0 : index
    %69 = vector.load %arg6[%c1, %c1_58, %c0_59] : memref<10x10x128xf32, #tpu.memory_space<vmem>>, vector<8x8x128xf32>
    tpu.vector_store %arg6[%c1, %c1_58, %c0_59], %68 {strides = array<i32>} : memref<10x10x128xf32, #tpu.memory_space<vmem>>, vector<8x8x128xf32>,
    %cst_60 = arith.constant 0.000000e+00 : f32
    %70 = vector.broadcast %cst_60 : f32 to vector<1x128xf32>
    %cst_61 = arith.constant 0.000000e+00 : f32
    %71 = vector.broadcast %cst_61 : f32 to vector<1x128xf32>
    %c0_62 = arith.constant 0 : index
    %c0_63 = arith.constant 0 : index
    %c0_64 = arith.constant 0 : index
    %72 = vector.load %arg6[%c0_62, %c0_63, %c0_64] : memref<10x10x128xf32, #tpu.memory_space<vmem>>, vector<8x8x128xf32>
    %c0_65 = arith.constant 0 : index
    %c1_66 = arith.constant 1 : index
    %c0_67 = arith.constant 0 : index
    %73 = vector.load %arg6[%c0_65, %c1_66, %c0_67] : memref<10x10x128xf32, #tpu.memory_space<vmem>>, vector<8x8x128xf32>
    %c1_68 = arith.constant 1 : index
    %c0_69 = arith.constant 0 : index
    %c0_70 = arith.constant 0 : index
    %74 = vector.load %arg6[%c1_68, %c0_69, %c0_70] : memref<10x10x128xf32, #tpu.memory_space<vmem>>, vector<8x8x128xf32>
    %c1_71 = arith.constant 1 : index
    %c1_72 = arith.constant 1 : index
    %c0_73 = arith.constant 0 : index
    %75 = vector.load %arg6[%c1_71, %c1_72, %c0_73] : memref<10x10x128xf32, #tpu.memory_space<vmem>>, vector<8x8x128xf32>
    %76 = tpu.concatenate %72, %73, %74, %75 in 2 : vector<8x8x128xf32>, vector<8x8x128xf32>, vector<8x8x128xf32>, vector<8x8x128xf32> -> vector<8x8x512xf32>
    %77 = vector.shape_cast %76 : vector<8x8x512xf32> to vector<64x512xf32>
    %78 = arith.truncf %77 : vector<64x512xf32> to vector<64x512xbf16>
    %c0_74 = arith.constant 0 : index
    %c0_75 = arith.constant 0 : index
    %c0_76 = arith.constant 0 : index
    %79 = vector.load %arg3[%c0_74, %c0_75, %c0_76] : memref<4x512x128xbf16, #tpu.memory_space<vmem>>, vector<1x512x128xbf16>
    %80 = vector.shape_cast %79 : vector<1x512x128xbf16> to vector<512x128xbf16>
    %cst_77 = arith.constant dense<0.000000e+00> : vector<64x128xf32>
    %81 = tpu.matmul %78, %80, %cst_77 {dimension_numbers = #tpu.dot_dimension_numbers<[1], [0], [0], [1], [0, 0, 1, 1], [], []>} : vector<64x512xbf16>, vector<512x128xbf16>, vector<64x128xf32> -> vector<64x128xf32>
    %c0_78 = arith.constant 0 : index
    %c0_79 = arith.constant 0 : index
    %c0_80 = arith.constant 0 : index
    %c0_81 = arith.constant 0 : index
    %82 = vector.load %arg4[%c0_78, %c0_79, %c0_80, %c0_81] : memref<1x4x64x128xf32, #tpu.memory_space<vmem>>, vector<1x1x64x128xf32>
    %83 = vector.shape_cast %82 : vector<1x1x64x128xf32> to vector<64x128xf32>
    %84 = vector.shape_cast %81 : vector<64x128xf32> to vector<1x1x64x128xf32>
    tpu.vector_store %arg4[%c0_78, %c0_79, %c0_80, %c0_81], %84 {strides = array<i32>} : memref<1x4x64x128xf32, #tpu.memory_space<vmem>>, vector<1x1x64x128xf32>,
    %cst_82 = arith.constant dense<0.000000e+00> : vector<128xf32>
    %85 = vector.multi_reduction <add>, %81, %cst_82 [0] : vector<64x128xf32> to vector<128xf32>
    %86 = vector.shape_cast %85 : vector<128xf32> to vector<1x128xf32>
    %87 = arith.addf %70, %86 : vector<1x128xf32>
    %88 = arith.mulf %81, %81 : vector<64x128xf32>
    %cst_83 = arith.constant dense<0.000000e+00> : vector<128xf32>
    %89 = vector.multi_reduction <add>, %88, %cst_83 [0] : vector<64x128xf32> to vector<128xf32>
    %90 = vector.shape_cast %89 : vector<128xf32> to vector<1x128xf32>
    %91 = arith.addf %71, %90 : vector<1x128xf32>
    %c0_84 = arith.constant 0 : index
    %c1_85 = arith.constant 1 : index
    %c0_86 = arith.constant 0 : index
    %92 = vector.load %arg6[%c0_84, %c1_85, %c0_86] : memref<10x10x128xf32, #tpu.memory_space<vmem>>, vector<8x8x128xf32>
    %c0_87 = arith.constant 0 : index
    %c2 = arith.constant 2 : index
    %c0_88 = arith.constant 0 : index
    %93 = vector.load %arg6[%c0_87, %c2, %c0_88] : memref<10x10x128xf32, #tpu.memory_space<vmem>>, vector<8x8x128xf32>
    %c1_89 = arith.constant 1 : index
    %c1_90 = arith.constant 1 : index
    %c0_91 = arith.constant 0 : index
    %94 = vector.load %arg6[%c1_89, %c1_90, %c0_91] : memref<10x10x128xf32, #tpu.memory_space<vmem>>, vector<8x8x128xf32>
    %c1_92 = arith.constant 1 : index
    %c2_93 = arith.constant 2 : index
    %c0_94 = arith.constant 0 : index
    %95 = vector.load %arg6[%c1_92, %c2_93, %c0_94] : memref<10x10x128xf32, #tpu.memory_space<vmem>>, vector<8x8x128xf32>
    %96 = tpu.concatenate %92, %93, %94, %95 in 2 : vector<8x8x128xf32>, vector<8x8x128xf32>, vector<8x8x128xf32>, vector<8x8x128xf32> -> vector<8x8x512xf32>
    %97 = vector.shape_cast %96 : vector<8x8x512xf32> to vector<64x512xf32>
    %98 = arith.truncf %97 : vector<64x512xf32> to vector<64x512xbf16>
    %c1_95 = arith.constant 1 : index
    %c0_96 = arith.constant 0 : index
    %c0_97 = arith.constant 0 : index
    %99 = vector.load %arg3[%c1_95, %c0_96, %c0_97] : memref<4x512x128xbf16, #tpu.memory_space<vmem>>, vector<1x512x128xbf16>
    %100 = vector.shape_cast %99 : vector<1x512x128xbf16> to vector<512x128xbf16>
    %cst_98 = arith.constant dense<0.000000e+00> : vector<64x128xf32>
    %101 = tpu.matmul %98, %100, %cst_98 {dimension_numbers = #tpu.dot_dimension_numbers<[1], [0], [0], [1], [0, 0, 1, 1], [], []>} : vector<64x512xbf16>, vector<512x128xbf16>, vector<64x128xf32> -> vector<64x128xf32>
    %c0_99 = arith.constant 0 : index
    %c1_100 = arith.constant 1 : index
    %c0_101 = arith.constant 0 : index
    %c0_102 = arith.constant 0 : index
    %102 = vector.load %arg4[%c0_99, %c1_100, %c0_101, %c0_102] : memref<1x4x64x128xf32, #tpu.memory_space<vmem>>, vector<1x1x64x128xf32>
    %103 = vector.shape_cast %102 : vector<1x1x64x128xf32> to vector<64x128xf32>
    %104 = vector.shape_cast %101 : vector<64x128xf32> to vector<1x1x64x128xf32>
    tpu.vector_store %arg4[%c0_99, %c1_100, %c0_101, %c0_102], %104 {strides = array<i32>} : memref<1x4x64x128xf32, #tpu.memory_space<vmem>>, vector<1x1x64x128xf32>,
    %cst_103 = arith.constant dense<0.000000e+00> : vector<128xf32>
    %105 = vector.multi_reduction <add>, %101, %cst_103 [0] : vector<64x128xf32> to vector<128xf32>
    %106 = vector.shape_cast %105 : vector<128xf32> to vector<1x128xf32>
    %107 = arith.addf %87, %106 : vector<1x128xf32>
    %108 = arith.mulf %101, %101 : vector<64x128xf32>
    %cst_104 = arith.constant dense<0.000000e+00> : vector<128xf32>
    %109 = vector.multi_reduction <add>, %108, %cst_104 [0] : vector<64x128xf32> to vector<128xf32>
    %110 = vector.shape_cast %109 : vector<128xf32> to vector<1x128xf32>
    %111 = arith.addf %91, %110 : vector<1x128xf32>
    %c1_105 = arith.constant 1 : index
    %c0_106 = arith.constant 0 : index
    %c0_107 = arith.constant 0 : index
    %112 = vector.load %arg6[%c1_105, %c0_106, %c0_107] : memref<10x10x128xf32, #tpu.memory_space<vmem>>, vector<8x8x128xf32>
    %c1_108 = arith.constant 1 : index
    %c1_109 = arith.constant 1 : index
    %c0_110 = arith.constant 0 : index
    %113 = vector.load %arg6[%c1_108, %c1_109, %c0_110] : memref<10x10x128xf32, #tpu.memory_space<vmem>>, vector<8x8x128xf32>
    %c2_111 = arith.constant 2 : index
    %c0_112 = arith.constant 0 : index
    %c0_113 = arith.constant 0 : index
    %114 = vector.load %arg6[%c2_111, %c0_112, %c0_113] : memref<10x10x128xf32, #tpu.memory_space<vmem>>, vector<8x8x128xf32>
    %c2_114 = arith.constant 2 : index
    %c1_115 = arith.constant 1 : index
    %c0_116 = arith.constant 0 : index
    %115 = vector.load %arg6[%c2_114, %c1_115, %c0_116] : memref<10x10x128xf32, #tpu.memory_space<vmem>>, vector<8x8x128xf32>
    %116 = tpu.concatenate %112, %113, %114, %115 in 2 : vector<8x8x128xf32>, vector<8x8x128xf32>, vector<8x8x128xf32>, vector<8x8x128xf32> -> vector<8x8x512xf32>
    %117 = vector.shape_cast %116 : vector<8x8x512xf32> to vector<64x512xf32>
    %118 = arith.truncf %117 : vector<64x512xf32> to vector<64x512xbf16>
    %c2_117 = arith.constant 2 : index
    %c0_118 = arith.constant 0 : index
    %c0_119 = arith.constant 0 : index
    %119 = vector.load %arg3[%c2_117, %c0_118, %c0_119] : memref<4x512x128xbf16, #tpu.memory_space<vmem>>, vector<1x512x128xbf16>
    %120 = vector.shape_cast %119 : vector<1x512x128xbf16> to vector<512x128xbf16>
    %cst_120 = arith.constant dense<0.000000e+00> : vector<64x128xf32>
    %121 = tpu.matmul %118, %120, %cst_120 {dimension_numbers = #tpu.dot_dimension_numbers<[1], [0], [0], [1], [0, 0, 1, 1], [], []>} : vector<64x512xbf16>, vector<512x128xbf16>, vector<64x128xf32> -> vector<64x128xf32>
    %c0_121 = arith.constant 0 : index
    %c2_122 = arith.constant 2 : index
    %c0_123 = arith.constant 0 : index
    %c0_124 = arith.constant 0 : index
    %122 = vector.load %arg4[%c0_121, %c2_122, %c0_123, %c0_124] : memref<1x4x64x128xf32, #tpu.memory_space<vmem>>, vector<1x1x64x128xf32>
    %123 = vector.shape_cast %122 : vector<1x1x64x128xf32> to vector<64x128xf32>
    %124 = vector.shape_cast %121 : vector<64x128xf32> to vector<1x1x64x128xf32>
    tpu.vector_store %arg4[%c0_121, %c2_122, %c0_123, %c0_124], %124 {strides = array<i32>} : memref<1x4x64x128xf32, #tpu.memory_space<vmem>>, vector<1x1x64x128xf32>,
    %cst_125 = arith.constant dense<0.000000e+00> : vector<128xf32>
    %125 = vector.multi_reduction <add>, %121, %cst_125 [0] : vector<64x128xf32> to vector<128xf32>
    %126 = vector.shape_cast %125 : vector<128xf32> to vector<1x128xf32>
    %127 = arith.addf %107, %126 : vector<1x128xf32>
    %128 = arith.mulf %121, %121 : vector<64x128xf32>
    %cst_126 = arith.constant dense<0.000000e+00> : vector<128xf32>
    %129 = vector.multi_reduction <add>, %128, %cst_126 [0] : vector<64x128xf32> to vector<128xf32>
    %130 = vector.shape_cast %129 : vector<128xf32> to vector<1x128xf32>
    %131 = arith.addf %111, %130 : vector<1x128xf32>
    %c1_127 = arith.constant 1 : index
    %c1_128 = arith.constant 1 : index
    %c0_129 = arith.constant 0 : index
    %132 = vector.load %arg6[%c1_127, %c1_128, %c0_129] : memref<10x10x128xf32, #tpu.memory_space<vmem>>, vector<8x8x128xf32>
    %c1_130 = arith.constant 1 : index
    %c2_131 = arith.constant 2 : index
    %c0_132 = arith.constant 0 : index
    %133 = vector.load %arg6[%c1_130, %c2_131, %c0_132] : memref<10x10x128xf32, #tpu.memory_space<vmem>>, vector<8x8x128xf32>
    %c2_133 = arith.constant 2 : index
    %c1_134 = arith.constant 1 : index
    %c0_135 = arith.constant 0 : index
    %134 = vector.load %arg6[%c2_133, %c1_134, %c0_135] : memref<10x10x128xf32, #tpu.memory_space<vmem>>, vector<8x8x128xf32>
    %c2_136 = arith.constant 2 : index
    %c2_137 = arith.constant 2 : index
    %c0_138 = arith.constant 0 : index
    %135 = vector.load %arg6[%c2_136, %c2_137, %c0_138] : memref<10x10x128xf32, #tpu.memory_space<vmem>>, vector<8x8x128xf32>
    %136 = tpu.concatenate %132, %133, %134, %135 in 2 : vector<8x8x128xf32>, vector<8x8x128xf32>, vector<8x8x128xf32>, vector<8x8x128xf32> -> vector<8x8x512xf32>
    %137 = vector.shape_cast %136 : vector<8x8x512xf32> to vector<64x512xf32>
    %138 = arith.truncf %137 : vector<64x512xf32> to vector<64x512xbf16>
    %c3 = arith.constant 3 : index
    %c0_139 = arith.constant 0 : index
    %c0_140 = arith.constant 0 : index
    %139 = vector.load %arg3[%c3, %c0_139, %c0_140] : memref<4x512x128xbf16, #tpu.memory_space<vmem>>, vector<1x512x128xbf16>
    %140 = vector.shape_cast %139 : vector<1x512x128xbf16> to vector<512x128xbf16>
    %cst_141 = arith.constant dense<0.000000e+00> : vector<64x128xf32>
    %141 = tpu.matmul %138, %140, %cst_141 {dimension_numbers = #tpu.dot_dimension_numbers<[1], [0], [0], [1], [0, 0, 1, 1], [], []>} : vector<64x512xbf16>, vector<512x128xbf16>, vector<64x128xf32> -> vector<64x128xf32>
    %c0_142 = arith.constant 0 : index
    %c3_143 = arith.constant 3 : index
    %c0_144 = arith.constant 0 : index
    %c0_145 = arith.constant 0 : index
    %142 = vector.load %arg4[%c0_142, %c3_143, %c0_144, %c0_145] : memref<1x4x64x128xf32, #tpu.memory_space<vmem>>, vector<1x1x64x128xf32>
    %143 = vector.shape_cast %142 : vector<1x1x64x128xf32> to vector<64x128xf32>
    %144 = vector.shape_cast %141 : vector<64x128xf32> to vector<1x1x64x128xf32>
    tpu.vector_store %arg4[%c0_142, %c3_143, %c0_144, %c0_145], %144 {strides = array<i32>} : memref<1x4x64x128xf32, #tpu.memory_space<vmem>>, vector<1x1x64x128xf32>,
    %cst_146 = arith.constant dense<0.000000e+00> : vector<128xf32>
    %145 = vector.multi_reduction <add>, %141, %cst_146 [0] : vector<64x128xf32> to vector<128xf32>
    %146 = vector.shape_cast %145 : vector<128xf32> to vector<1x128xf32>
    %147 = arith.addf %127, %146 : vector<1x128xf32>
    %148 = arith.mulf %141, %141 : vector<64x128xf32>
    %cst_147 = arith.constant dense<0.000000e+00> : vector<128xf32>
    %149 = vector.multi_reduction <add>, %148, %cst_147 [0] : vector<64x128xf32> to vector<128xf32>
    %150 = vector.shape_cast %149 : vector<128xf32> to vector<1x128xf32>
    %151 = arith.addf %131, %150 : vector<1x128xf32>
    %c0_148 = arith.constant 0 : index
    %c0_149 = arith.constant 0 : index
    %c0_150 = arith.constant 0 : index
    %152 = vector.load %arg5[%c0_148, %c0_149, %c0_150] : memref<1x2x128xf32, #tpu.memory_space<vmem>>, vector<1x1x128xf32>
    %153 = vector.shape_cast %152 : vector<1x1x128xf32> to vector<1x128xf32>
    %154 = vector.shape_cast %147 : vector<1x128xf32> to vector<1x1x128xf32>
    tpu.vector_store %arg5[%c0_148, %c0_149, %c0_150], %154 {strides = array<i32>} : memref<1x2x128xf32, #tpu.memory_space<vmem>>, vector<1x1x128xf32>,
    %c0_151 = arith.constant 0 : index
    %c1_152 = arith.constant 1 : index
    %c0_153 = arith.constant 0 : index
    %155 = vector.load %arg5[%c0_151, %c1_152, %c0_153] : memref<1x2x128xf32, #tpu.memory_space<vmem>>, vector<1x1x128xf32>
    %156 = vector.shape_cast %155 : vector<1x1x128xf32> to vector<1x128xf32>
    %157 = vector.shape_cast %151 : vector<1x128xf32> to vector<1x1x128xf32>
    tpu.vector_store %arg5[%c0_151, %c1_152, %c0_153], %157 {strides = array<i32>} : memref<1x2x128xf32, #tpu.memory_space<vmem>>, vector<1x1x128xf32>,
    return
  }
  func.func @transform_0(%arg0: i32) -> (i32, i32, i32, i32, i32) {
    %c0_i32 = arith.constant 0 : i32
    %c0_i32_0 = arith.constant 0 : i32
    %c0_i32_1 = arith.constant 0 : i32
    %c0_i32_2 = arith.constant 0 : i32
    %c0_i32_3 = arith.constant 0 : i32
    return %arg0, %c0_i32, %c0_i32_0, %c0_i32_1, %c0_i32_2 : i32, i32, i32, i32, i32
  }
  func.func @transform_1(%arg0: i32) -> (i32, i32) {
    %c0_i32 = arith.constant 0 : i32
    %c0_i32_0 = arith.constant 0 : i32
    %c0_i32_1 = arith.constant 0 : i32
    return %c0_i32, %c0_i32_0 : i32, i32
  }
  func.func @transform_2(%arg0: i32) -> (i32, i32, i32) {
    %c0_i32 = arith.constant 0 : i32
    %c0_i32_0 = arith.constant 0 : i32
    %c0_i32_1 = arith.constant 0 : i32
    %c0_i32_2 = arith.constant 0 : i32
    return %c0_i32, %c0_i32_0, %c0_i32_1 : i32, i32, i32
  }
  func.func @transform_3(%arg0: i32) -> (i32, i32, i32, i32) {
    %c0_i32 = arith.constant 0 : i32
    %c0_i32_0 = arith.constant 0 : i32
    %c0_i32_1 = arith.constant 0 : i32
    %c0_i32_2 = arith.constant 0 : i32
    return %arg0, %c0_i32, %c0_i32_0, %c0_i32_1 : i32, i32, i32, i32
  }
  func.func @transform_4(%arg0: i32) -> (i32, i32, i32) {
    %c0_i32 = arith.constant 0 : i32
    %c0_i32_0 = arith.constant 0 : i32
    %c0_i32_1 = arith.constant 0 : i32
    return %arg0, %c0_i32, %c0_i32_0 : i32, i32, i32
  }
}

module attributes {stable_mosaic.version = 11 : i64} {
  func.func @kernel(%arg0: i32, %arg1: memref<1x4x64x128xf32, #tpu.memory_space<vmem>>, %arg2: memref<1x4x9x9x4xf32, #tpu.memory_space<vmem>>, %arg3: memref<1x128xf32, #tpu.memory_space<vmem>>, %arg4: memref<1x128xf32, #tpu.memory_space<vmem>>, %arg5: memref<1x2x2x8x8x8xf32, #tpu.memory_space<vmem>>) attributes {dimension_semantics = [#tpu.dimension_semantics<parallel>], iteration_bounds = array<i64: 2>, scalar_prefetch = 0 : i64, scratch_operands = 0 : i64, tpu.core_type = #tpu.core_type<tc>, window_params = [{transform_indices = @transform_0, window_bounds = array<i64: 1, 4, 64, 128>}, {transform_indices = @transform_1, window_bounds = array<i64: 1, 4, 9, 9, 4>}, {pipeline_mode = #tpu.pipeline_mode<synchronous>, transform_indices = @transform_2, window_bounds = array<i64: 1, 128>}, {pipeline_mode = #tpu.pipeline_mode<synchronous>, transform_indices = @transform_3, window_bounds = array<i64: 1, 128>}, {transform_indices = @transform_4, window_bounds = array<i64: 1, 2, 2, 8, 8, 8>}]} {
    %c0 = arith.constant 0 : index
    %c0_0 = arith.constant 0 : index
    %0 = vector.load %arg3[%c0, %c0_0] : memref<1x128xf32, #tpu.memory_space<vmem>>, vector<1x128xf32>
    %c0_1 = arith.constant 0 : index
    %c0_2 = arith.constant 0 : index
    %1 = vector.load %arg4[%c0_1, %c0_2] : memref<1x128xf32, #tpu.memory_space<vmem>>, vector<1x128xf32>
    %c0_3 = arith.constant 0 : index
    %c0_4 = arith.constant 0 : index
    %c0_5 = arith.constant 0 : index
    %c0_6 = arith.constant 0 : index
    %2 = vector.load %arg1[%c0_3, %c0_4, %c0_5, %c0_6] : memref<1x4x64x128xf32, #tpu.memory_space<vmem>>, vector<1x1x64x128xf32>
    %3 = vector.shape_cast %2 : vector<1x1x64x128xf32> to vector<64x128xf32>
    %4 = vector.broadcast %0 : vector<1x128xf32> to vector<64x128xf32>
    %5 = arith.mulf %3, %4 : vector<64x128xf32>
    %6 = vector.broadcast %1 : vector<1x128xf32> to vector<64x128xf32>
    %7 = arith.addf %5, %6 : vector<64x128xf32>
    %8 = vector.shape_cast %7 : vector<64x128xf32> to vector<8x8x128xf32>
    %9 = vector.extract_strided_slice %8 {offsets = [0, 0, 0], sizes = [8, 8, 4], strides = [1, 1, 1]} : vector<8x8x128xf32> to vector<8x8x4xf32>
    %c0_7 = arith.constant 0 : index
    %c0_8 = arith.constant 0 : index
    %c0_9 = arith.constant 0 : index
    %c0_10 = arith.constant 0 : index
    %c0_11 = arith.constant 0 : index
    %c4 = arith.constant 4 : index
    %10 = vector.load %arg5[%c0_7, %c0_8, %c0_9, %c0_10, %c0_11, %c4] : memref<1x2x2x8x8x8xf32, #tpu.memory_space<vmem>>, vector<1x1x1x8x8x4xf32>
    %11 = vector.shape_cast %10 : vector<1x1x1x8x8x4xf32> to vector<8x8x4xf32>
    %12 = vector.shape_cast %9 : vector<8x8x4xf32> to vector<1x1x1x8x8x4xf32>
    tpu.vector_store %arg5[%c0_7, %c0_8, %c0_9, %c0_10, %c0_11, %c4], %12 {strides = array<i32>} : memref<1x2x2x8x8x8xf32, #tpu.memory_space<vmem>>, vector<1x1x1x8x8x4xf32>,
    %c0_12 = arith.constant 0 : index
    %c3 = arith.constant 3 : index
    %c0_13 = arith.constant 0 : index
    %c0_14 = arith.constant 0 : index
    %c0_15 = arith.constant 0 : index
    %13 = vector.load %arg2[%c0_12, %c3, %c0_13, %c0_14, %c0_15] : memref<1x4x9x9x4xf32, #tpu.memory_space<vmem>>, vector<1x1x8x8x4xf32>
    %14 = vector.shape_cast %13 : vector<1x1x8x8x4xf32> to vector<8x8x4xf32>
    %c0_16 = arith.constant 0 : index
    %c0_17 = arith.constant 0 : index
    %c0_18 = arith.constant 0 : index
    %c0_19 = arith.constant 0 : index
    %c0_20 = arith.constant 0 : index
    %c0_21 = arith.constant 0 : index
    %15 = vector.load %arg5[%c0_16, %c0_17, %c0_18, %c0_19, %c0_20, %c0_21] : memref<1x2x2x8x8x8xf32, #tpu.memory_space<vmem>>, vector<1x1x1x8x8x4xf32>
    %16 = vector.shape_cast %15 : vector<1x1x1x8x8x4xf32> to vector<8x8x4xf32>
    %17 = vector.shape_cast %14 : vector<8x8x4xf32> to vector<1x1x1x8x8x4xf32>
    tpu.vector_store %arg5[%c0_16, %c0_17, %c0_18, %c0_19, %c0_20, %c0_21], %17 {strides = array<i32>} : memref<1x2x2x8x8x8xf32, #tpu.memory_space<vmem>>, vector<1x1x1x8x8x4xf32>,
    %c0_22 = arith.constant 0 : index
    %c1 = arith.constant 1 : index
    %c0_23 = arith.constant 0 : index
    %c0_24 = arith.constant 0 : index
    %18 = vector.load %arg1[%c0_22, %c1, %c0_23, %c0_24] : memref<1x4x64x128xf32, #tpu.memory_space<vmem>>, vector<1x1x64x128xf32>
    %19 = vector.shape_cast %18 : vector<1x1x64x128xf32> to vector<64x128xf32>
    %20 = vector.broadcast %0 : vector<1x128xf32> to vector<64x128xf32>
    %21 = arith.mulf %19, %20 : vector<64x128xf32>
    %22 = vector.broadcast %1 : vector<1x128xf32> to vector<64x128xf32>
    %23 = arith.addf %21, %22 : vector<64x128xf32>
    %24 = vector.shape_cast %23 : vector<64x128xf32> to vector<8x8x128xf32>
    %25 = vector.extract_strided_slice %24 {offsets = [0, 0, 0], sizes = [8, 8, 4], strides = [1, 1, 1]} : vector<8x8x128xf32> to vector<8x8x4xf32>
    %c0_25 = arith.constant 0 : index
    %c0_26 = arith.constant 0 : index
    %c1_27 = arith.constant 1 : index
    %c0_28 = arith.constant 0 : index
    %c0_29 = arith.constant 0 : index
    %c4_30 = arith.constant 4 : index
    %26 = vector.load %arg5[%c0_25, %c0_26, %c1_27, %c0_28, %c0_29, %c4_30] : memref<1x2x2x8x8x8xf32, #tpu.memory_space<vmem>>, vector<1x1x1x8x8x4xf32>
    %27 = vector.shape_cast %26 : vector<1x1x1x8x8x4xf32> to vector<8x8x4xf32>
    %28 = vector.shape_cast %25 : vector<8x8x4xf32> to vector<1x1x1x8x8x4xf32>
    tpu.vector_store %arg5[%c0_25, %c0_26, %c1_27, %c0_28, %c0_29, %c4_30], %28 {strides = array<i32>} : memref<1x2x2x8x8x8xf32, #tpu.memory_space<vmem>>, vector<1x1x1x8x8x4xf32>,
    %c0_31 = arith.constant 0 : index
    %c2 = arith.constant 2 : index
    %c0_32 = arith.constant 0 : index
    %c1_33 = arith.constant 1 : index
    %c0_34 = arith.constant 0 : index
    %29 = vector.load %arg2[%c0_31, %c2, %c0_32, %c1_33, %c0_34] : memref<1x4x9x9x4xf32, #tpu.memory_space<vmem>>, vector<1x1x8x8x4xf32>
    %30 = vector.shape_cast %29 : vector<1x1x8x8x4xf32> to vector<8x8x4xf32>
    %c0_35 = arith.constant 0 : index
    %c0_36 = arith.constant 0 : index
    %c1_37 = arith.constant 1 : index
    %c0_38 = arith.constant 0 : index
    %c0_39 = arith.constant 0 : index
    %c0_40 = arith.constant 0 : index
    %31 = vector.load %arg5[%c0_35, %c0_36, %c1_37, %c0_38, %c0_39, %c0_40] : memref<1x2x2x8x8x8xf32, #tpu.memory_space<vmem>>, vector<1x1x1x8x8x4xf32>
    %32 = vector.shape_cast %31 : vector<1x1x1x8x8x4xf32> to vector<8x8x4xf32>
    %33 = vector.shape_cast %30 : vector<8x8x4xf32> to vector<1x1x1x8x8x4xf32>
    tpu.vector_store %arg5[%c0_35, %c0_36, %c1_37, %c0_38, %c0_39, %c0_40], %33 {strides = array<i32>} : memref<1x2x2x8x8x8xf32, #tpu.memory_space<vmem>>, vector<1x1x1x8x8x4xf32>,
    %c0_41 = arith.constant 0 : index
    %c2_42 = arith.constant 2 : index
    %c0_43 = arith.constant 0 : index
    %c0_44 = arith.constant 0 : index
    %34 = vector.load %arg1[%c0_41, %c2_42, %c0_43, %c0_44] : memref<1x4x64x128xf32, #tpu.memory_space<vmem>>, vector<1x1x64x128xf32>
    %35 = vector.shape_cast %34 : vector<1x1x64x128xf32> to vector<64x128xf32>
    %36 = vector.broadcast %0 : vector<1x128xf32> to vector<64x128xf32>
    %37 = arith.mulf %35, %36 : vector<64x128xf32>
    %38 = vector.broadcast %1 : vector<1x128xf32> to vector<64x128xf32>
    %39 = arith.addf %37, %38 : vector<64x128xf32>
    %40 = vector.shape_cast %39 : vector<64x128xf32> to vector<8x8x128xf32>
    %41 = vector.extract_strided_slice %40 {offsets = [0, 0, 0], sizes = [8, 8, 4], strides = [1, 1, 1]} : vector<8x8x128xf32> to vector<8x8x4xf32>
    %c0_45 = arith.constant 0 : index
    %c1_46 = arith.constant 1 : index
    %c0_47 = arith.constant 0 : index
    %c0_48 = arith.constant 0 : index
    %c0_49 = arith.constant 0 : index
    %c4_50 = arith.constant 4 : index
    %42 = vector.load %arg5[%c0_45, %c1_46, %c0_47, %c0_48, %c0_49, %c4_50] : memref<1x2x2x8x8x8xf32, #tpu.memory_space<vmem>>, vector<1x1x1x8x8x4xf32>
    %43 = vector.shape_cast %42 : vector<1x1x1x8x8x4xf32> to vector<8x8x4xf32>
    %44 = vector.shape_cast %41 : vector<8x8x4xf32> to vector<1x1x1x8x8x4xf32>
    tpu.vector_store %arg5[%c0_45, %c1_46, %c0_47, %c0_48, %c0_49, %c4_50], %44 {strides = array<i32>} : memref<1x2x2x8x8x8xf32, #tpu.memory_space<vmem>>, vector<1x1x1x8x8x4xf32>,
    %c0_51 = arith.constant 0 : index
    %c1_52 = arith.constant 1 : index
    %c1_53 = arith.constant 1 : index
    %c0_54 = arith.constant 0 : index
    %c0_55 = arith.constant 0 : index
    %45 = vector.load %arg2[%c0_51, %c1_52, %c1_53, %c0_54, %c0_55] : memref<1x4x9x9x4xf32, #tpu.memory_space<vmem>>, vector<1x1x8x8x4xf32>
    %46 = vector.shape_cast %45 : vector<1x1x8x8x4xf32> to vector<8x8x4xf32>
    %c0_56 = arith.constant 0 : index
    %c1_57 = arith.constant 1 : index
    %c0_58 = arith.constant 0 : index
    %c0_59 = arith.constant 0 : index
    %c0_60 = arith.constant 0 : index
    %c0_61 = arith.constant 0 : index
    %47 = vector.load %arg5[%c0_56, %c1_57, %c0_58, %c0_59, %c0_60, %c0_61] : memref<1x2x2x8x8x8xf32, #tpu.memory_space<vmem>>, vector<1x1x1x8x8x4xf32>
    %48 = vector.shape_cast %47 : vector<1x1x1x8x8x4xf32> to vector<8x8x4xf32>
    %49 = vector.shape_cast %46 : vector<8x8x4xf32> to vector<1x1x1x8x8x4xf32>
    tpu.vector_store %arg5[%c0_56, %c1_57, %c0_58, %c0_59, %c0_60, %c0_61], %49 {strides = array<i32>} : memref<1x2x2x8x8x8xf32, #tpu.memory_space<vmem>>, vector<1x1x1x8x8x4xf32>,
    %c0_62 = arith.constant 0 : index
    %c3_63 = arith.constant 3 : index
    %c0_64 = arith.constant 0 : index
    %c0_65 = arith.constant 0 : index
    %50 = vector.load %arg1[%c0_62, %c3_63, %c0_64, %c0_65] : memref<1x4x64x128xf32, #tpu.memory_space<vmem>>, vector<1x1x64x128xf32>
    %51 = vector.shape_cast %50 : vector<1x1x64x128xf32> to vector<64x128xf32>
    %52 = vector.broadcast %0 : vector<1x128xf32> to vector<64x128xf32>
    %53 = arith.mulf %51, %52 : vector<64x128xf32>
    %54 = vector.broadcast %1 : vector<1x128xf32> to vector<64x128xf32>
    %55 = arith.addf %53, %54 : vector<64x128xf32>
    %56 = vector.shape_cast %55 : vector<64x128xf32> to vector<8x8x128xf32>
    %57 = vector.extract_strided_slice %56 {offsets = [0, 0, 0], sizes = [8, 8, 4], strides = [1, 1, 1]} : vector<8x8x128xf32> to vector<8x8x4xf32>
    %c0_66 = arith.constant 0 : index
    %c1_67 = arith.constant 1 : index
    %c1_68 = arith.constant 1 : index
    %c0_69 = arith.constant 0 : index
    %c0_70 = arith.constant 0 : index
    %c4_71 = arith.constant 4 : index
    %58 = vector.load %arg5[%c0_66, %c1_67, %c1_68, %c0_69, %c0_70, %c4_71] : memref<1x2x2x8x8x8xf32, #tpu.memory_space<vmem>>, vector<1x1x1x8x8x4xf32>
    %59 = vector.shape_cast %58 : vector<1x1x1x8x8x4xf32> to vector<8x8x4xf32>
    %60 = vector.shape_cast %57 : vector<8x8x4xf32> to vector<1x1x1x8x8x4xf32>
    tpu.vector_store %arg5[%c0_66, %c1_67, %c1_68, %c0_69, %c0_70, %c4_71], %60 {strides = array<i32>} : memref<1x2x2x8x8x8xf32, #tpu.memory_space<vmem>>, vector<1x1x1x8x8x4xf32>,
    %c0_72 = arith.constant 0 : index
    %c0_73 = arith.constant 0 : index
    %c1_74 = arith.constant 1 : index
    %c1_75 = arith.constant 1 : index
    %c0_76 = arith.constant 0 : index
    %61 = vector.load %arg2[%c0_72, %c0_73, %c1_74, %c1_75, %c0_76] : memref<1x4x9x9x4xf32, #tpu.memory_space<vmem>>, vector<1x1x8x8x4xf32>
    %62 = vector.shape_cast %61 : vector<1x1x8x8x4xf32> to vector<8x8x4xf32>
    %c0_77 = arith.constant 0 : index
    %c1_78 = arith.constant 1 : index
    %c1_79 = arith.constant 1 : index
    %c0_80 = arith.constant 0 : index
    %c0_81 = arith.constant 0 : index
    %c0_82 = arith.constant 0 : index
    %63 = vector.load %arg5[%c0_77, %c1_78, %c1_79, %c0_80, %c0_81, %c0_82] : memref<1x2x2x8x8x8xf32, #tpu.memory_space<vmem>>, vector<1x1x1x8x8x4xf32>
    %64 = vector.shape_cast %63 : vector<1x1x1x8x8x4xf32> to vector<8x8x4xf32>
    %65 = vector.shape_cast %62 : vector<8x8x4xf32> to vector<1x1x1x8x8x4xf32>
    tpu.vector_store %arg5[%c0_77, %c1_78, %c1_79, %c0_80, %c0_81, %c0_82], %65 {strides = array<i32>} : memref<1x2x2x8x8x8xf32, #tpu.memory_space<vmem>>, vector<1x1x1x8x8x4xf32>,
    return
  }
  func.func @transform_0(%arg0: i32) -> (i32, i32, i32, i32) {
    %c0_i32 = arith.constant 0 : i32
    %c0_i32_0 = arith.constant 0 : i32
    %c0_i32_1 = arith.constant 0 : i32
    %c0_i32_2 = arith.constant 0 : i32
    return %arg0, %c0_i32, %c0_i32_0, %c0_i32_1 : i32, i32, i32, i32
  }
  func.func @transform_1(%arg0: i32) -> (i32, i32, i32, i32, i32) {
    %c0_i32 = arith.constant 0 : i32
    %c0_i32_0 = arith.constant 0 : i32
    %c0_i32_1 = arith.constant 0 : i32
    %c0_i32_2 = arith.constant 0 : i32
    %c0_i32_3 = arith.constant 0 : i32
    return %arg0, %c0_i32, %c0_i32_0, %c0_i32_1, %c0_i32_2 : i32, i32, i32, i32, i32
  }
  func.func @transform_2(%arg0: i32) -> (i32, i32) {
    %c0_i32 = arith.constant 0 : i32
    %c0_i32_0 = arith.constant 0 : i32
    %c0_i32_1 = arith.constant 0 : i32
    return %c0_i32, %c0_i32_0 : i32, i32
  }
  func.func @transform_3(%arg0: i32) -> (i32, i32) {
    %c0_i32 = arith.constant 0 : i32
    %c0_i32_0 = arith.constant 0 : i32
    %c0_i32_1 = arith.constant 0 : i32
    return %c0_i32, %c0_i32_0 : i32, i32
  }
  func.func @transform_4(%arg0: i32) -> (i32, i32, i32, i32, i32, i32) {
    %c0_i32 = arith.constant 0 : i32
    %c0_i32_0 = arith.constant 0 : i32
    %c0_i32_1 = arith.constant 0 : i32
    %c0_i32_2 = arith.constant 0 : i32
    %c0_i32_3 = arith.constant 0 : i32
    %c0_i32_4 = arith.constant 0 : i32
    return %arg0, %c0_i32, %c0_i32_0, %c0_i32_1, %c0_i32_2, %c0_i32_3 : i32, i32, i32, i32, i32, i32
  }
}

</mosaic_0001>

<llo_original>
// kernel: unet_innermost_forward.3
$region0: #{unet_innermost_forward.3}
  #allocation0 [shape = 'u32[]', space=smem, size = 0x4, offset = 0x4, fixed_abs, tag = 'smem constant byte address 0x4 - core index']
  #allocation1 [shape = 'u32[144,128]{1,0:T(1,128)}', space=vmem, size = 0x12000, scoped, tag = 'internal scratch']
  %s0 = inlined_call_operand.vmem [shape: f32[2,4,64,128], index: 0, kind: input, shape index: {}]
  %s1 = inlined_call_operand.vmem [shape: f32[2,4,9,9,4], index: 1, kind: input, shape index: {}]
  %s2 = inlined_call_operand.vmem [shape: f32[1,128], index: 2, kind: input, shape index: {}]
  %s3 = inlined_call_operand.vmem [shape: f32[1,128], index: 3, kind: input, shape index: {}]
  %s4 = inlined_call_operand.vmem [shape: f32[2,2,2,8,8,8], index: 4, kind: output, shape index: {}]
  %s5 = sld [smem:[#allocation0]]
  $region49: #{unet_innermost_forward.3} parent=0
    _
  %s7 = ssub.s32 1, %s5
  %s8 = scalar_select 0, %s7, %s5
  loop: start=0, step=1, limit=4
  $region2: #{unet_innermost_forward.3} parent=0 // loop_pre_header
    _
  $region3: #{unet_innermost_forward.3} parent=0 // loop_header
    %s10 = sphi 0, %s14
    %p11 = scmp.ge.s32.totalorder %s10, 4
    %s20 = sphi 0, %s22
    %s23 = sphi 0, %s20
    %s24 = sphi 0, %s23
    %s40 = sphi 0, %s24
    %s46 = sphi 0, %s48
    %s49 = sphi 0, %s46
    %s50 = sphi 0, %s49
    %s66 = sphi 0, %s50
    %s70 = sphi 0, %s70
    %s72 = sphi 0, %s70
    %s73 = sphi 0, %s72
    %s87 = sphi 0, %s73
    %s91 = sphi 0, %s91
    %s93 = sphi 0, %s91
    %s94 = sphi 0, %s93
    %s108 = sphi 0, %s94
    %s114 = sphi 0, %s116
    %s117 = sphi 0, %s114
    %s118 = sphi 0, %s117
    %s134 = sphi 0, %s118
  $region4: #{unet_innermost_forward.3} parent=0 // loop_header_branch
    %13 = sbr.rel (%p11) target = $region8
  $region5: #{unet_innermost_forward.3} parent=0 // loop_body
    %s15 = ssub.s32 %s10, 1
    %s16 = ssub.s32 %s10, 2
    %s17 = sadd.s32 %s10, 1
    %s18 = ssub.s32 %s10, %s17
    %p19 = scmp.eq.s32.totalorder %s18, 0
    %s21 = sadd.s32 %s20, 1
    %s22 = scalar_select %p19, %s20, %s21
    %p25 = pneg %p19
    %p26 = scmp.eq.s32.totalorder %s10, 1
    %p27 = por %p25, %p26
    %p28 = scmp.ne.s32.totalorder %s20, %s23
    %p29 = scmp.eq.s32.totalorder %s10, 0
    %p30 = por %p28, %p29
    %p31 = scmp.ne.s32.totalorder %s20, %s23
    %p32 = scmp.eq.s32.totalorder %s15, 1
    %p33 = por %p31, %p32
    %p34 = scmp.ne.s32.totalorder %s23, %s24
    %p35 = scmp.eq.s32.totalorder %s15, 0
    %p36 = por %p34, %p35
    %p37 = scmp.ne.s32.totalorder %s23, %s24
    %p38 = scmp.eq.s32.totalorder %s16, 1
    %p39 = por %p37, %p38
    %p41 = scmp.ne.s32.totalorder %s24, %s40
    %p42 = scmp.eq.s32.totalorder %s16, 0
    %p43 = por %p41, %p42
    %s44 = ssub.s32 %s10, %s17
    %p45 = scmp.eq.s32.totalorder %s44, 0
    %s47 = sadd.s32 %s46, 1
    %s48 = scalar_select %p45, %s46, %s47
    %p51 = pneg %p45
    %p52 = scmp.eq.s32.totalorder %s10, 1
    %p53 = por %p51, %p52
    %p54 = scmp.ne.s32.totalorder %s46, %s49
    %p55 = scmp.eq.s32.totalorder %s10, 0
    %p56 = por %p54, %p55
    %p57 = scmp.ne.s32.totalorder %s46, %s49
    %p58 = scmp.eq.s32.totalorder %s15, 1
    %p59 = por %p57, %p58
    %p60 = scmp.ne.s32.totalorder %s49, %s50
    %p61 = scmp.eq.s32.totalorder %s15, 0
    %p62 = por %p60, %p61
    %p63 = scmp.ne.s32.totalorder %s49, %s50
    %p64 = scmp.eq.s32.totalorder %s16, 1
    %p65 = por %p63, %p64
    %p67 = scmp.ne.s32.totalorder %s50, %s66
    %p68 = scmp.eq.s32.totalorder %s16, 0
    %p69 = por %p67, %p68
    %s71 = sadd.s32 %s70, 1
    %p74 = scmp.eq.s32.totalorder %s10, 1
    %p75 = scmp.ne.s32.totalorder %s70, %s72
    %p76 = scmp.eq.s32.totalorder %s10, 0
    %p77 = por %p75, %p76
    %p78 = scmp.ne.s32.totalorder %s70, %s72
    %p79 = scmp.eq.s32.totalorder %s15, 1
    %p80 = por %p78, %p79
    %p81 = scmp.ne.s32.totalorder %s72, %s73
    %p82 = scmp.eq.s32.totalorder %s15, 0
    %p83 = por %p81, %p82
    %p84 = scmp.ne.s32.totalorder %s72, %s73
    %p85 = scmp.eq.s32.totalorder %s16, 1
    %p86 = por %p84, %p85
    %p88 = scmp.ne.s32.totalorder %s73, %s87
    %p89 = scmp.eq.s32.totalorder %s16, 0
    %p90 = por %p88, %p89
    %s92 = sadd.s32 %s91, 1
    %p95 = scmp.eq.s32.totalorder %s10, 1
    %p96 = scmp.ne.s32.totalorder %s91, %s93
    %p97 = scmp.eq.s32.totalorder %s10, 0
    %p98 = por %p96, %p97
    %p99 = scmp.ne.s32.totalorder %s91, %s93
    %p100 = scmp.eq.s32.totalorder %s15, 1
    %p101 = por %p99, %p100
    %p102 = scmp.ne.s32.totalorder %s93, %s94
    %p103 = scmp.eq.s32.totalorder %s15, 0
    %p104 = por %p102, %p103
    %p105 = scmp.ne.s32.totalorder %s93, %s94
    %p106 = scmp.eq.s32.totalorder %s16, 1
    %p107 = por %p105, %p106
    %p109 = scmp.ne.s32.totalorder %s94, %s108
    %p110 = scmp.eq.s32.totalorder %s16, 0
    %p111 = por %p109, %p110
    %s112 = ssub.s32 %s10, %s17
    %p113 = scmp.eq.s32.totalorder %s112, 0
    %s115 = sadd.s32 %s114, 1
    %s116 = scalar_select %p113, %s114, %s115
    %p119 = pneg %p113
    %p120 = scmp.eq.s32.totalorder %s10, 1
    %p121 = por %p119, %p120
    %p122 = scmp.ne.s32.totalorder %s114, %s117
    %p123 = scmp.eq.s32.totalorder %s10, 0
    %p124 = por %p122, %p123
    %p125 = scmp.ne.s32.totalorder %s114, %s117
    %p126 = scmp.eq.s32.totalorder %s15, 1
    %p127 = por %p125, %p126
    %p128 = scmp.ne.s32.totalorder %s117, %s118
    %p129 = scmp.eq.s32.totalorder %s15, 0
    %p130 = por %p128, %p129
    %p131 = scmp.ne.s32.totalorder %s117, %s118
    %p132 = scmp.eq.s32.totalorder %s16, 1
    %p133 = por %p131, %p132
    %p135 = scmp.ne.s32.totalorder %s118, %s134
    %p136 = scmp.eq.s32.totalorder %s16, 0
    %p137 = por %p135, %p136
    %p138 = scmp.le.s32.totalorder 1, %s10
    %p139 = scmp.lt.s32.totalorder %s10, 3
    %p140 = pnand %p138, %p139
    %p141 = pneg %p140
    // Predicated region
    $region9: #{unet_innermost_forward.3} parent=5 // pred_check
      _
    $region10: #{unet_innermost_forward.3} parent=5 // pred_check_branch
      %143 = sbr.rel (%p140) target = $region12
    $region11: #{unet_innermost_forward.3} parent=5 // pred_region
      %s144 = ssub.s32 %s10, 1
      // Predicated region
      $region13: #{unet_innermost_forward.3} parent=11 // pred_check
        %p145 = pneg %p83
      $region14: #{unet_innermost_forward.3} parent=11 // pred_check_branch
        %147 = sbr.rel (%p145) target = $region16
      $region15: #{unet_innermost_forward.3} parent=11 // pred_region
        _
      $region16: #{unet_innermost_forward.3} parent=11 // pred_fallthru
        _
      // Predicated region
      $region17: #{unet_innermost_forward.3} parent=11 // pred_check
        %p148 = pneg %p104
      $region18: #{unet_innermost_forward.3} parent=11 // pred_check_branch
        %150 = sbr.rel (%p148) target = $region20
      $region19: #{unet_innermost_forward.3} parent=11 // pred_region
        _
      $region20: #{unet_innermost_forward.3} parent=11 // pred_fallthru
        _
    $region12: #{unet_innermost_forward.3} parent=5 // pred_fallthru
      _
    %p151 = scmp.lt.s32.totalorder %s10, 2
    // Predicated region
    $region21: #{unet_innermost_forward.3} parent=5 // pred_check
      %p152 = pneg %p151
    $region22: #{unet_innermost_forward.3} parent=5 // pred_check_branch
      %154 = sbr.rel (%p152) target = $region24
    $region23: #{unet_innermost_forward.3} parent=5 // pred_region
      // Predicated region
      $region25: #{unet_innermost_forward.3} parent=23 // pred_check
        %p155 = pneg %p30
      $region26: #{unet_innermost_forward.3} parent=23 // pred_check_branch
        %157 = sbr.rel (%p155) target = $region28
      $region27: #{unet_innermost_forward.3} parent=23 // pred_region
        %p158 = scmp.lt.s32.totalorder %s10, 1
        %s159 = scalar_select %p158, %s10, 1
        %s160 = smul.addr %s159, 32
        %s161 = smul.addr %s160, 8
        %s162 = scalar_lea.vmem %s0, %s161
      $region28: #{unet_innermost_forward.3} parent=23 // pred_fallthru
        _
      // Predicated region
      $region29: #{unet_innermost_forward.3} parent=23 // pred_check
        %p163 = pneg %p56
      $region30: #{unet_innermost_forward.3} parent=23 // pred_check_branch
        %165 = sbr.rel (%p163) target = $region32
      $region31: #{unet_innermost_forward.3} parent=23 // pred_region
        %p166 = scmp.lt.s32.totalorder %s10, 1
        %s167 = scalar_select %p166, %s10, 1
        %s168 = smul.addr %s167, 72
        %s169 = smul.addr %s168, 8
        %s170 = scalar_lea.vmem %s1, %s169
      $region32: #{unet_innermost_forward.3} parent=23 // pred_fallthru
        _
    $region24: #{unet_innermost_forward.3} parent=5 // pred_fallthru
      _
    %p171 = scmp.le.s32.totalorder 1, %s10
    %p172 = scmp.lt.s32.totalorder %s10, 3
    %p173 = pnand %p171, %p172
    %p174 = pneg %p173
    // Predicated region
    $region33: #{unet_innermost_forward.3} parent=5 // pred_check
      _
    $region34: #{unet_innermost_forward.3} parent=5 // pred_check_branch
      %176 = sbr.rel (%p173) target = $region36
    $region35: #{unet_innermost_forward.3} parent=5 // pred_region
      %s177 = ssub.s32 %s10, 1
      %p178 = scmp.lt.s32.totalorder %s15, 1
      %s179 = scalar_select %p178, %s15, 1
      %s180 = smul.addr %s179, 32
      %s181 = smul.addr %s180, 8
      %s182 = scalar_lea.vmem %s0, %s181
      %p183 = pneg %p36
      %p184 = pneg %p33
      %p185 = scmp.lt.s32.totalorder %s15, 1
      %s186 = scalar_select %p185, %s15, 1
      %s187 = smul.addr %s186, 72
      %s188 = smul.addr %s187, 8
      %s189 = scalar_lea.vmem %s1, %s188
      %p190 = pneg %p62
      %p191 = pneg %p59
      %p192 = pneg %p83
      %p193 = pneg %p80
      %p194 = pneg %p104
      %p195 = pneg %p101
      %p196 = pneg %p130
      %p197 = pneg %p127
      %p198 = scmp.lt.s32.totalorder %s15, 1
      %s199 = scalar_select %p198, %s15, 1
      %s200 = smul.addr %s199, 32
      %s201 = smul.addr %s200, 8
      %s202 = scalar_lea.vmem %s4, %s201
      %p203 = scmp.lt.s32.totalorder %s15, 1
      %s204 = scalar_select %p203, %s15, 1
      %s205 = smul.addr %s204, 32
      %s206 = smul.addr %s205, 8
      %s207 = scalar_lea.vmem %s0, %s206
      %p208 = scmp.lt.s32.totalorder %s15, 1
      %s209 = scalar_select %p208, %s15, 1
      %s210 = smul.addr %s209, 72
      %s211 = smul.addr %s210, 8
      %s212 = scalar_lea.vmem %s1, %s211
      %p213 = scmp.lt.s32.totalorder %s15, 1
      %s214 = scalar_select %p213, %s15, 1
      %s215 = smul.addr %s214, 32
      %s216 = smul.addr %s215, 8
      %s217 = scalar_lea.vmem %s4, %s216
      %v218 = vld [vmem:[%s2] sm:$0x1]
      %v219 = vld [vmem:[%s3] sm:$0x1]
      %v220 = vld [vmem:[%s207] sm:$0xff]
      %v221 = vld [vmem:[%s207 + $0x8] sm:$0xff]
      %v222 = vld [vmem:[%s207 + $0x10] sm:$0xff]
      %v223 = vld [vmem:[%s207 + $0x18] sm:$0xff]
      %v224 = vld [vmem:[%s207 + $0x20] sm:$0xff]
      %v225 = vld [vmem:[%s207 + $0x28] sm:$0xff]
      %v226 = vld [vmem:[%s207 + $0x30] sm:$0xff]
      %v227 = vld [vmem:[%s207 + $0x38] sm:$0xff]
      %v229 = vlaneseq
      %v230 = vshrl.u32 %v229, 7
      %v231 = vsub.s32 0, %v230
      %v232 = vrot.slane %v218, %v231
      %v234 = vmul.f32 %v220, %v232
      %v235 = vmul.f32 %v221, %v232
      %v236 = vmul.f32 %v222, %v232
      %v237 = vmul.f32 %v223, %v232
      %v238 = vmul.f32 %v224, %v232
      %v239 = vmul.f32 %v225, %v232
      %v240 = vmul.f32 %v226, %v232
      %v241 = vmul.f32 %v227, %v232
      %v243 = vlaneseq
      %v244 = vshrl.u32 %v243, 7
      %v245 = vsub.s32 0, %v244
      %v246 = vrot.slane %v219, %v245
      %v248 = vadd.f32 %v234, %v246
      %v249 = vadd.f32 %v235, %v246
      %v250 = vadd.f32 %v236, %v246
      %v251 = vadd.f32 %v237, %v246
      %v252 = vadd.f32 %v238, %v246
      %v253 = vadd.f32 %v239, %v246
      %v254 = vadd.f32 %v240, %v246
      %v255 = vadd.f32 %v241, %v246
      %264 = vrot.lane.b32.xlu0 %v248, 4
      %v265 = vpop.permute.xlu0 %264
      %266 = vrot.lane.b32.xlu0 %v249, 4
      %v267 = vpop.permute.xlu0 %266
      %268 = vrot.lane.b32.xlu0 %v250, 4
      %v269 = vpop.permute.xlu0 %268
      %270 = vrot.lane.b32.xlu0 %v251, 4
      %v271 = vpop.permute.xlu0 %270
      %272 = vrot.lane.b32.xlu0 %v252, 4
      %v273 = vpop.permute.xlu0 %272
      %274 = vrot.lane.b32.xlu0 %v253, 4
      %v275 = vpop.permute.xlu0 %274
      %276 = vrot.lane.b32.xlu0 %v254, 4
      %v277 = vpop.permute.xlu0 %276
      %278 = vrot.lane.b32.xlu0 %v255, 4
      %v279 = vpop.permute.xlu0 %278
      %vm288 = vcmask 64544
      %289 = vst.msk [vmem:[%s217] sm:$0xff] %vm288, %v265
      %290 = vst.msk [vmem:[%s217 + $0x8] sm:$0xff] %vm288, %v267
      %291 = vst.msk [vmem:[%s217 + $0x10] sm:$0xff] %vm288, %v269
      %292 = vst.msk [vmem:[%s217 + $0x18] sm:$0xff] %vm288, %v271
      %293 = vst.msk [vmem:[%s217 + $0x20] sm:$0xff] %vm288, %v273
      %294 = vst.msk [vmem:[%s217 + $0x28] sm:$0xff] %vm288, %v275
      %295 = vst.msk [vmem:[%s217 + $0x30] sm:$0xff] %vm288, %v277
      %296 = vst.msk [vmem:[%s217 + $0x38] sm:$0xff] %vm288, %v279
      %s297 = scalar_lea.vmem %s212, 432
      %v298 = vld [vmem:[%s297] sm:$0xff]
      %v299 = vld [vmem:[%s297 + $0x10] sm:$0xff]
      %v300 = vld [vmem:[%s297 + $0x20] sm:$0xff]
      %v301 = vld [vmem:[%s297 + $0x30] sm:$0xff]
      %v302 = vld [vmem:[%s297 + $0x40] sm:$0xff]
      %v303 = vld [vmem:[%s297 + $0x50] sm:$0xff]
      %v304 = vld [vmem:[%s297 + $0x60] sm:$0xff]
      %v305 = vld [vmem:[%s297 + $0x70] sm:$0xff]
      %vm306 = vcmask 31744
      %307 = vst.msk [vmem:[%s217] sm:$0xff] %vm306, %v298
      %308 = vst.msk [vmem:[%s217 + $0x8] sm:$0xff] %vm306, %v299
      %309 = vst.msk [vmem:[%s217 + $0x10] sm:$0xff] %vm306, %v300
      %310 = vst.msk [vmem:[%s217 + $0x18] sm:$0xff] %vm306, %v301
      %311 = vst.msk [vmem:[%s217 + $0x20] sm:$0xff] %vm306, %v302
      %312 = vst.msk [vmem:[%s217 + $0x28] sm:$0xff] %vm306, %v303
      %313 = vst.msk [vmem:[%s217 + $0x30] sm:$0xff] %vm306, %v304
      %314 = vst.msk [vmem:[%s217 + $0x38] sm:$0xff] %vm306, %v305
      %s315 = scalar_lea.vmem %s207, 64
      %v316 = vld [vmem:[%s315] sm:$0xff]
      %v317 = vld [vmem:[%s315 + $0x8] sm:$0xff]
      %v318 = vld [vmem:[%s315 + $0x10] sm:$0xff]
      %v319 = vld [vmem:[%s315 + $0x18] sm:$0xff]
      %v320 = vld [vmem:[%s315 + $0x20] sm:$0xff]
      %v321 = vld [vmem:[%s315 + $0x28] sm:$0xff]
      %v322 = vld [vmem:[%s315 + $0x30] sm:$0xff]
      %v323 = vld [vmem:[%s315 + $0x38] sm:$0xff]
      %v324 = vmul.f32 %v316, %v232
      %v325 = vmul.f32 %v317, %v232
      %v326 = vmul.f32 %v318, %v232
      %v327 = vmul.f32 %v319, %v232
      %v328 = vmul.f32 %v320, %v232
      %v329 = vmul.f32 %v321, %v232
      %v330 = vmul.f32 %v322, %v232
      %v331 = vmul.f32 %v323, %v232
      %v332 = vadd.f32 %v324, %v246
      %v333 = vadd.f32 %v325, %v246
      %v334 = vadd.f32 %v326, %v246
      %v335 = vadd.f32 %v327, %v246
      %v336 = vadd.f32 %v328, %v246
      %v337 = vadd.f32 %v329, %v246
      %v338 = vadd.f32 %v330, %v246
      %v339 = vadd.f32 %v331, %v246
      %348 = vrot.lane.b32.xlu0 %v332, 4
      %v349 = vpop.permute.xlu0 %348
      %350 = vrot.lane.b32.xlu0 %v333, 4
      %v351 = vpop.permute.xlu0 %350
      %352 = vrot.lane.b32.xlu0 %v334, 4
      %v353 = vpop.permute.xlu0 %352
      %354 = vrot.lane.b32.xlu0 %v335, 4
      %v355 = vpop.permute.xlu0 %354
      %356 = vrot.lane.b32.xlu0 %v336, 4
      %v357 = vpop.permute.xlu0 %356
      %358 = vrot.lane.b32.xlu0 %v337, 4
      %v359 = vpop.permute.xlu0 %358
      %360 = vrot.lane.b32.xlu0 %v338, 4
      %v361 = vpop.permute.xlu0 %360
      %362 = vrot.lane.b32.xlu0 %v339, 4
      %v363 = vpop.permute.xlu0 %362
      %s372 = scalar_lea.vmem %s217, 64
      %373 = vst.msk [vmem:[%s372] sm:$0xff] %vm288, %v349
      %374 = vst.msk [vmem:[%s372 + $0x8] sm:$0xff] %vm288, %v351
      %375 = vst.msk [vmem:[%s372 + $0x10] sm:$0xff] %vm288, %v353
      %376 = vst.msk [vmem:[%s372 + $0x18] sm:$0xff] %vm288, %v355
      %377 = vst.msk [vmem:[%s372 + $0x20] sm:$0xff] %vm288, %v357
      %378 = vst.msk [vmem:[%s372 + $0x28] sm:$0xff] %vm288, %v359
      %379 = vst.msk [vmem:[%s372 + $0x30] sm:$0xff] %vm288, %v361
      %380 = vst.msk [vmem:[%s372 + $0x38] sm:$0xff] %vm288, %v363
      %s381 = scalar_lea.vmem %s212, 288
      %v382 = vld [vmem:[%s381 + $0x1] sm:$0xff]
      %v383 = vld [vmem:[%s381 + $0x11] sm:$0xff]
      %v384 = vld [vmem:[%s381 + $0x21] sm:$0xff]
      %v385 = vld [vmem:[%s381 + $0x31] sm:$0xff]
      %v386 = vld [vmem:[%s381 + $0x41] sm:$0xff]
      %v387 = vld [vmem:[%s381 + $0x51] sm:$0xff]
      %v388 = vld [vmem:[%s381 + $0x61] sm:$0xff]
      %v389 = vld [vmem:[%s381 + $0x71] sm:$0xff]
      %390 = vst.msk [vmem:[%s372] sm:$0xff] %vm306, %v382
      %391 = vst.msk [vmem:[%s372 + $0x8] sm:$0xff] %vm306, %v383
      %392 = vst.msk [vmem:[%s372 + $0x10] sm:$0xff] %vm306, %v384
      %393 = vst.msk [vmem:[%s372 + $0x18] sm:$0xff] %vm306, %v385
      %394 = vst.msk [vmem:[%s372 + $0x20] sm:$0xff] %vm306, %v386
      %395 = vst.msk [vmem:[%s372 + $0x28] sm:$0xff] %vm306, %v387
      %396 = vst.msk [vmem:[%s372 + $0x30] sm:$0xff] %vm306, %v388
      %397 = vst.msk [vmem:[%s372 + $0x38] sm:$0xff] %vm306, %v389
      %s398 = scalar_lea.vmem %s207, 128
      %v399 = vld [vmem:[%s398] sm:$0xff]
      %v400 = vld [vmem:[%s398 + $0x8] sm:$0xff]
      %v401 = vld [vmem:[%s398 + $0x10] sm:$0xff]
      %v402 = vld [vmem:[%s398 + $0x18] sm:$0xff]
      %v403 = vld [vmem:[%s398 + $0x20] sm:$0xff]
      %v404 = vld [vmem:[%s398 + $0x28] sm:$0xff]
      %v405 = vld [vmem:[%s398 + $0x30] sm:$0xff]
      %v406 = vld [vmem:[%s398 + $0x38] sm:$0xff]
      %v407 = vmul.f32 %v399, %v232
      %v408 = vmul.f32 %v400, %v232
      %v409 = vmul.f32 %v401, %v232
      %v410 = vmul.f32 %v402, %v232
      %v411 = vmul.f32 %v403, %v232
      %v412 = vmul.f32 %v404, %v232
      %v413 = vmul.f32 %v405, %v232
      %v414 = vmul.f32 %v406, %v232
      %v415 = vadd.f32 %v407, %v246
      %v416 = vadd.f32 %v408, %v246
      %v417 = vadd.f32 %v409, %v246
      %v418 = vadd.f32 %v410, %v246
      %v419 = vadd.f32 %v411, %v246
      %v420 = vadd.f32 %v412, %v246
      %v421 = vadd.f32 %v413, %v246
      %v422 = vadd.f32 %v414, %v246
      %431 = vrot.lane.b32.xlu0 %v415, 4
      %v432 = vpop.permute.xlu0 %431
      %433 = vrot.lane.b32.xlu0 %v416, 4
      %v434 = vpop.permute.xlu0 %433
      %435 = vrot.lane.b32.xlu0 %v417, 4
      %v436 = vpop.permute.xlu0 %435
      %437 = vrot.lane.b32.xlu0 %v418, 4
      %v438 = vpop.permute.xlu0 %437
      %439 = vrot.lane.b32.xlu0 %v419, 4
      %v440 = vpop.permute.xlu0 %439
      %441 = vrot.lane.b32.xlu0 %v420, 4
      %v442 = vpop.permute.xlu0 %441
      %443 = vrot.lane.b32.xlu0 %v421, 4
      %v444 = vpop.permute.xlu0 %443
      %445 = vrot.lane.b32.xlu0 %v422, 4
      %v446 = vpop.permute.xlu0 %445
      %s455 = scalar_lea.vmem %s217, 128
      %456 = vst.msk [vmem:[%s455] sm:$0xff] %vm288, %v432
      %457 = vst.msk [vmem:[%s455 + $0x8] sm:$0xff] %vm288, %v434
      %458 = vst.msk [vmem:[%s455 + $0x10] sm:$0xff] %vm288, %v436
      %459 = vst.msk [vmem:[%s455 + $0x18] sm:$0xff] %vm288, %v438
      %460 = vst.msk [vmem:[%s455 + $0x20] sm:$0xff] %vm288, %v440
      %461 = vst.msk [vmem:[%s455 + $0x28] sm:$0xff] %vm288, %v442
      %462 = vst.msk [vmem:[%s455 + $0x30] sm:$0xff] %vm288, %v444
      %463 = vst.msk [vmem:[%s455 + $0x38] sm:$0xff] %vm288, %v446
      %s464 = scalar_lea.vmem %s212, 160
      %v465 = vld [vmem:[%s464] sm:$0xff]
      %v466 = vld [vmem:[%s464 + $0x10] sm:$0xff]
      %v467 = vld [vmem:[%s464 + $0x20] sm:$0xff]
      %v468 = vld [vmem:[%s464 + $0x30] sm:$0xff]
      %v469 = vld [vmem:[%s464 + $0x40] sm:$0xff]
      %v470 = vld [vmem:[%s464 + $0x50] sm:$0xff]
      %v471 = vld [vmem:[%s464 + $0x60] sm:$0xff]
      %v472 = vld [vmem:[%s464 + $0x70] sm:$0xff]
      %473 = vst.msk [vmem:[%s455] sm:$0xff] %vm306, %v465
      %474 = vst.msk [vmem:[%s455 + $0x8] sm:$0xff] %vm306, %v466
      %475 = vst.msk [vmem:[%s455 + $0x10] sm:$0xff] %vm306, %v467
      %476 = vst.msk [vmem:[%s455 + $0x18] sm:$0xff] %vm306, %v468
      %477 = vst.msk [vmem:[%s455 + $0x20] sm:$0xff] %vm306, %v469
      %478 = vst.msk [vmem:[%s455 + $0x28] sm:$0xff] %vm306, %v470
      %479 = vst.msk [vmem:[%s455 + $0x30] sm:$0xff] %vm306, %v471
      %480 = vst.msk [vmem:[%s455 + $0x38] sm:$0xff] %vm306, %v472
      %s481 = scalar_lea.vmem %s207, 192
      %v482 = vld [vmem:[%s481] sm:$0xff]
      %v483 = vld [vmem:[%s481 + $0x8] sm:$0xff]
      %v484 = vld [vmem:[%s481 + $0x10] sm:$0xff]
      %v485 = vld [vmem:[%s481 + $0x18] sm:$0xff]
      %v486 = vld [vmem:[%s481 + $0x20] sm:$0xff]
      %v487 = vld [vmem:[%s481 + $0x28] sm:$0xff]
      %v488 = vld [vmem:[%s481 + $0x30] sm:$0xff]
      %v489 = vld [vmem:[%s481 + $0x38] sm:$0xff]
      %v490 = vmul.f32 %v482, %v232
      %v491 = vmul.f32 %v483, %v232
      %v492 = vmul.f32 %v484, %v232
      %v493 = vmul.f32 %v485, %v232
      %v494 = vmul.f32 %v486, %v232
      %v495 = vmul.f32 %v487, %v232
      %v496 = vmul.f32 %v488, %v232
      %v497 = vmul.f32 %v489, %v232
      %v498 = vadd.f32 %v490, %v246
      %v499 = vadd.f32 %v491, %v246
      %v500 = vadd.f32 %v492, %v246
      %v501 = vadd.f32 %v493, %v246
      %v502 = vadd.f32 %v494, %v246
      %v503 = vadd.f32 %v495, %v246
      %v504 = vadd.f32 %v496, %v246
      %v505 = vadd.f32 %v497, %v246
      %514 = vrot.lane.b32.xlu0 %v498, 4
      %v515 = vpop.permute.xlu0 %514
      %516 = vrot.lane.b32.xlu0 %v499, 4
      %v517 = vpop.permute.xlu0 %516
      %518 = vrot.lane.b32.xlu0 %v500, 4
      %v519 = vpop.permute.xlu0 %518
      %520 = vrot.lane.b32.xlu0 %v501, 4
      %v521 = vpop.permute.xlu0 %520
      %522 = vrot.lane.b32.xlu0 %v502, 4
      %v523 = vpop.permute.xlu0 %522
      %524 = vrot.lane.b32.xlu0 %v503, 4
      %v525 = vpop.permute.xlu0 %524
      %526 = vrot.lane.b32.xlu0 %v504, 4
      %v527 = vpop.permute.xlu0 %526
      %528 = vrot.lane.b32.xlu0 %v505, 4
      %v529 = vpop.permute.xlu0 %528
      %s538 = scalar_lea.vmem %s217, 192
      %539 = vst.msk [vmem:[%s538] sm:$0xff] %vm288, %v515
      %540 = vst.msk [vmem:[%s538 + $0x8] sm:$0xff] %vm288, %v517
      %541 = vst.msk [vmem:[%s538 + $0x10] sm:$0xff] %vm288, %v519
      %542 = vst.msk [vmem:[%s538 + $0x18] sm:$0xff] %vm288, %v521
      %543 = vst.msk [vmem:[%s538 + $0x20] sm:$0xff] %vm288, %v523
      %544 = vst.msk [vmem:[%s538 + $0x28] sm:$0xff] %vm288, %v525
      %545 = vst.msk [vmem:[%s538 + $0x30] sm:$0xff] %vm288, %v527
      %546 = vst.msk [vmem:[%s538 + $0x38] sm:$0xff] %vm288, %v529
      %s547 = scalar_lea.vmem %s212, 16
      %v548 = vld [vmem:[%s547 + $0x1] sm:$0xff]
      %v549 = vld [vmem:[%s547 + $0x11] sm:$0xff]
      %v550 = vld [vmem:[%s547 + $0x21] sm:$0xff]
      %v551 = vld [vmem:[%s547 + $0x31] sm:$0xff]
      %v552 = vld [vmem:[%s547 + $0x41] sm:$0xff]
      %v553 = vld [vmem:[%s547 + $0x51] sm:$0xff]
      %v554 = vld [vmem:[%s547 + $0x61] sm:$0xff]
      %v555 = vld [vmem:[%s547 + $0x71] sm:$0xff]
      %556 = vst.msk [vmem:[%s538] sm:$0xff] %vm306, %v548
      %557 = vst.msk [vmem:[%s538 + $0x8] sm:$0xff] %vm306, %v549
      %558 = vst.msk [vmem:[%s538 + $0x10] sm:$0xff] %vm306, %v550
      %559 = vst.msk [vmem:[%s538 + $0x18] sm:$0xff] %vm306, %v551
      %560 = vst.msk [vmem:[%s538 + $0x20] sm:$0xff] %vm306, %v552
      %561 = vst.msk [vmem:[%s538 + $0x28] sm:$0xff] %vm306, %v553
      %562 = vst.msk [vmem:[%s538 + $0x30] sm:$0xff] %vm306, %v554
      %563 = vst.msk [vmem:[%s538 + $0x38] sm:$0xff] %vm306, %v555
      %p564 = scmp.lt.s32.totalorder %s15, 1
      %s565 = scalar_select %p564, %s15, 1
      %s566 = smul.addr %s565, 32
      %s567 = smul.addr %s566, 8
      %s568 = scalar_lea.vmem %s4, %s567
      // Predicated region
      $region37: #{unet_innermost_forward.3} parent=35 // pred_check
        %p569 = pneg %p127
      $region38: #{unet_innermost_forward.3} parent=35 // pred_check_branch
        %571 = sbr.rel (%p569) target = $region40
      $region39: #{unet_innermost_forward.3} parent=35 // pred_region
        _
      $region40: #{unet_innermost_forward.3} parent=35 // pred_fallthru
        _
    $region36: #{unet_innermost_forward.3} parent=5 // pred_fallthru
      _
    %p572 = scmp.le.s32.totalorder 2, %s10
    // Predicated region
    $region41: #{unet_innermost_forward.3} parent=5 // pred_check
      %p573 = pneg %p572
    $region42: #{unet_innermost_forward.3} parent=5 // pred_check_branch
      %575 = sbr.rel (%p573) target = $region44
    $region43: #{unet_innermost_forward.3} parent=5 // pred_region
      %s576 = ssub.s32 %s10, 2
      // Predicated region
      $region45: #{unet_innermost_forward.3} parent=43 // pred_check
        %p577 = pneg %p133
      $region46: #{unet_innermost_forward.3} parent=43 // pred_check_branch
        %579 = sbr.rel (%p577) target = $region48
      $region47: #{unet_innermost_forward.3} parent=43 // pred_region
        %p580 = scmp.lt.s32.totalorder %s16, 1
        %s581 = scalar_select %p580, %s16, 1
        %s582 = smul.addr %s581, 32
        %s583 = smul.addr %s582, 8
        %s584 = scalar_lea.vmem %s4, %s583
      $region48: #{unet_innermost_forward.3} parent=43 // pred_fallthru
        _
    $region44: #{unet_innermost_forward.3} parent=5 // pred_fallthru
      _
  $region6: #{unet_innermost_forward.3} parent=0 // loop_footer
    %s14 = sadd.s32 1, %s10
  $region7: #{unet_innermost_forward.3} parent=0 // loop_footer_branch
    %9 = sbr.rel target = $region3
  $region8: #{unet_innermost_forward.3} parent=0 // loop_exit
    _

// kernel: unet_innermost_forward.2
$region0: #{unet_innermost_forward.2}
  #allocation0 [shape = 'u32[]', space=smem, size = 0x4, offset = 0x4, fixed_abs, tag = 'smem constant byte address 0x4 - core index']
  #allocation1 [shape = 'u32[144,128]{1,0:T(1,128)}', space=vmem, size = 0x12000, scoped, tag = 'internal scratch']
  #allocation2 [shape = 'f32[10,10,128]{2,1,0:T(8,128)}', space=vmem, size = 0x14000, scoped, tag = 'scratch operand']
  #allocation3 [shape = 'f32[8,8,64]{2,1,0:T(8,128)}', space=vmem, size = 0x8000, scoped, tag = 'scratch operand']
  %s0 = inlined_call_operand.vmem [shape: f32[2,4,9,9,4], index: 0, kind: input, shape index: {}]
  %s1 = inlined_call_operand.vmem [shape: bf16[64,128], index: 1, kind: input, shape index: {}]
  %s2 = inlined_call_operand.vmem [shape: bf16[4,512,128], index: 2, kind: input, shape index: {}]
  %s3 = inlined_call_operand.vmem [shape: f32[2,4,64,128], index: 3, kind: output, shape index: {0}]
  %s4 = inlined_call_operand.vmem [shape: f32[2,2,128], index: 4, kind: output, shape index: {1}]
  %5 = xla_tuple %s3, %s4
  %s6 = sld [smem:[#allocation0]]
  $region53: #{unet_innermost_forward.2} parent=0
    _
  %s8 = ssub.s32 1, %s6
  %s9 = scalar_select 0, %s8, %s6
  loop: start=0, step=1, limit=4
  $region2: #{unet_innermost_forward.2} parent=0 // loop_pre_header
    _
  $region3: #{unet_innermost_forward.2} parent=0 // loop_header
    %s11 = sphi 0, %s15
    %p12 = scmp.ge.s32.totalorder %s11, 4
    %s21 = sphi 0, %s23
    %s24 = sphi 0, %s21
    %s25 = sphi 0, %s24
    %s41 = sphi 0, %s25
    %s45 = sphi 0, %s45
    %s47 = sphi 0, %s45
    %s48 = sphi 0, %s47
    %s62 = sphi 0, %s48
    %s66 = sphi 0, %s66
    %s68 = sphi 0, %s66
    %s69 = sphi 0, %s68
    %s83 = sphi 0, %s69
    %s89 = sphi 0, %s91
    %s92 = sphi 0, %s89
    %s93 = sphi 0, %s92
    %s109 = sphi 0, %s93
    %s115 = sphi 0, %s117
    %s118 = sphi 0, %s115
    %s119 = sphi 0, %s118
    %s135 = sphi 0, %s119
  $region4: #{unet_innermost_forward.2} parent=0 // loop_header_branch
    %14 = sbr.rel (%p12) target = $region8
  $region5: #{unet_innermost_forward.2} parent=0 // loop_body
    %s16 = ssub.s32 %s11, 1
    %s17 = ssub.s32 %s11, 2
    %s18 = sadd.s32 %s11, 1
    %s19 = ssub.s32 %s11, %s18
    %p20 = scmp.eq.s32.totalorder %s19, 0
    %s22 = sadd.s32 %s21, 1
    %s23 = scalar_select %p20, %s21, %s22
    %p26 = pneg %p20
    %p27 = scmp.eq.s32.totalorder %s11, 1
    %p28 = por %p26, %p27
    %p29 = scmp.ne.s32.totalorder %s21, %s24
    %p30 = scmp.eq.s32.totalorder %s11, 0
    %p31 = por %p29, %p30
    %p32 = scmp.ne.s32.totalorder %s21, %s24
    %p33 = scmp.eq.s32.totalorder %s16, 1
    %p34 = por %p32, %p33
    %p35 = scmp.ne.s32.totalorder %s24, %s25
    %p36 = scmp.eq.s32.totalorder %s16, 0
    %p37 = por %p35, %p36
    %p38 = scmp.ne.s32.totalorder %s24, %s25
    %p39 = scmp.eq.s32.totalorder %s17, 1
    %p40 = por %p38, %p39
    %p42 = scmp.ne.s32.totalorder %s25, %s41
    %p43 = scmp.eq.s32.totalorder %s17, 0
    %p44 = por %p42, %p43
    %s46 = sadd.s32 %s45, 1
    %p49 = scmp.eq.s32.totalorder %s11, 1
    %p50 = scmp.ne.s32.totalorder %s45, %s47
    %p51 = scmp.eq.s32.totalorder %s11, 0
    %p52 = por %p50, %p51
    %p53 = scmp.ne.s32.totalorder %s45, %s47
    %p54 = scmp.eq.s32.totalorder %s16, 1
    %p55 = por %p53, %p54
    %p56 = scmp.ne.s32.totalorder %s47, %s48
    %p57 = scmp.eq.s32.totalorder %s16, 0
    %p58 = por %p56, %p57
    %p59 = scmp.ne.s32.totalorder %s47, %s48
    %p60 = scmp.eq.s32.totalorder %s17, 1
    %p61 = por %p59, %p60
    %p63 = scmp.ne.s32.totalorder %s48, %s62
    %p64 = scmp.eq.s32.totalorder %s17, 0
    %p65 = por %p63, %p64
    %s67 = sadd.s32 %s66, 1
    %p70 = scmp.eq.s32.totalorder %s11, 1
    %p71 = scmp.ne.s32.totalorder %s66, %s68
    %p72 = scmp.eq.s32.totalorder %s11, 0
    %p73 = por %p71, %p72
    %p74 = scmp.ne.s32.totalorder %s66, %s68
    %p75 = scmp.eq.s32.totalorder %s16, 1
    %p76 = por %p74, %p75
    %p77 = scmp.ne.s32.totalorder %s68, %s69
    %p78 = scmp.eq.s32.totalorder %s16, 0
    %p79 = por %p77, %p78
    %p80 = scmp.ne.s32.totalorder %s68, %s69
    %p81 = scmp.eq.s32.totalorder %s17, 1
    %p82 = por %p80, %p81
    %p84 = scmp.ne.s32.totalorder %s69, %s83
    %p85 = scmp.eq.s32.totalorder %s17, 0
    %p86 = por %p84, %p85
    %s87 = ssub.s32 %s11, %s18
    %p88 = scmp.eq.s32.totalorder %s87, 0
    %s90 = sadd.s32 %s89, 1
    %s91 = scalar_select %p88, %s89, %s90
    %p94 = pneg %p88
    %p95 = scmp.eq.s32.totalorder %s11, 1
    %p96 = por %p94, %p95
    %p97 = scmp.ne.s32.totalorder %s89, %s92
    %p98 = scmp.eq.s32.totalorder %s11, 0
    %p99 = por %p97, %p98
    %p100 = scmp.ne.s32.totalorder %s89, %s92
    %p101 = scmp.eq.s32.totalorder %s16, 1
    %p102 = por %p100, %p101
    %p103 = scmp.ne.s32.totalorder %s92, %s93
    %p104 = scmp.eq.s32.totalorder %s16, 0
    %p105 = por %p103, %p104
    %p106 = scmp.ne.s32.totalorder %s92, %s93
    %p107 = scmp.eq.s32.totalorder %s17, 1
    %p108 = por %p106, %p107
    %p110 = scmp.ne.s32.totalorder %s93, %s109
    %p111 = scmp.eq.s32.totalorder %s17, 0
    %p112 = por %p110, %p111
    %s113 = ssub.s32 %s11, %s18
    %p114 = scmp.eq.s32.totalorder %s113, 0
    %s116 = sadd.s32 %s115, 1
    %s117 = scalar_select %p114, %s115, %s116
    %p120 = pneg %p114
    %p121 = scmp.eq.s32.totalorder %s11, 1
    %p122 = por %p120, %p121
    %p123 = scmp.ne.s32.totalorder %s115, %s118
    %p124 = scmp.eq.s32.totalorder %s11, 0
    %p125 = por %p123, %p124
    %p126 = scmp.ne.s32.totalorder %s115, %s118
    %p127 = scmp.eq.s32.totalorder %s16, 1
    %p128 = por %p126, %p127
    %p129 = scmp.ne.s32.totalorder %s118, %s119
    %p130 = scmp.eq.s32.totalorder %s16, 0
    %p131 = por %p129, %p130
    %p132 = scmp.ne.s32.totalorder %s118, %s119
    %p133 = scmp.eq.s32.totalorder %s17, 1
    %p134 = por %p132, %p133
    %p136 = scmp.ne.s32.totalorder %s119, %s135
    %p137 = scmp.eq.s32.totalorder %s17, 0
    %p138 = por %p136, %p137
    %p139 = scmp.le.s32.totalorder 1, %s11
    %p140 = scmp.lt.s32.totalorder %s11, 3
    %p141 = pnand %p139, %p140
    %p142 = pneg %p141
    // Predicated region
    $region9: #{unet_innermost_forward.2} parent=5 // pred_check
      _
    $region10: #{unet_innermost_forward.2} parent=5 // pred_check_branch
      %144 = sbr.rel (%p141) target = $region12
    $region11: #{unet_innermost_forward.2} parent=5 // pred_region
      %s145 = ssub.s32 %s11, 1
      // Predicated region
      $region13: #{unet_innermost_forward.2} parent=11 // pred_check
        %p146 = pneg %p58
      $region14: #{unet_innermost_forward.2} parent=11 // pred_check_branch
        %148 = sbr.rel (%p146) target = $region16
      $region15: #{unet_innermost_forward.2} parent=11 // pred_region
        _
      $region16: #{unet_innermost_forward.2} parent=11 // pred_fallthru
        _
      // Predicated region
      $region17: #{unet_innermost_forward.2} parent=11 // pred_check
        %p149 = pneg %p79
      $region18: #{unet_innermost_forward.2} parent=11 // pred_check_branch
        %151 = sbr.rel (%p149) target = $region20
      $region19: #{unet_innermost_forward.2} parent=11 // pred_region
        _
      $region20: #{unet_innermost_forward.2} parent=11 // pred_fallthru
        _
    $region12: #{unet_innermost_forward.2} parent=5 // pred_fallthru
      _
    %p152 = scmp.lt.s32.totalorder %s11, 2
    // Predicated region
    $region21: #{unet_innermost_forward.2} parent=5 // pred_check
      %p153 = pneg %p152
    $region22: #{unet_innermost_forward.2} parent=5 // pred_check_branch
      %155 = sbr.rel (%p153) target = $region24
    $region23: #{unet_innermost_forward.2} parent=5 // pred_region
      // Predicated region
      $region25: #{unet_innermost_forward.2} parent=23 // pred_check
        %p156 = pneg %p31
      $region26: #{unet_innermost_forward.2} parent=23 // pred_check_branch
        %158 = sbr.rel (%p156) target = $region28
      $region27: #{unet_innermost_forward.2} parent=23 // pred_region
        %p159 = scmp.lt.s32.totalorder %s11, 1
        %s160 = scalar_select %p159, %s11, 1
        %s161 = smul.addr %s160, 72
        %s162 = smul.addr %s161, 8
        %s163 = scalar_lea.vmem %s0, %s162
      $region28: #{unet_innermost_forward.2} parent=23 // pred_fallthru
        _
    $region24: #{unet_innermost_forward.2} parent=5 // pred_fallthru
      _
    %p164 = scmp.le.s32.totalorder 1, %s11
    %p165 = scmp.lt.s32.totalorder %s11, 3
    %p166 = pnand %p164, %p165
    %p167 = pneg %p166
    // Predicated region
    $region29: #{unet_innermost_forward.2} parent=5 // pred_check
      _
    $region30: #{unet_innermost_forward.2} parent=5 // pred_check_branch
      %169 = sbr.rel (%p166) target = $region32
    $region31: #{unet_innermost_forward.2} parent=5 // pred_region
      %s170 = ssub.s32 %s11, 1
      %p171 = scmp.lt.s32.totalorder %s16, 1
      %s172 = scalar_select %p171, %s16, 1
      %s173 = smul.addr %s172, 72
      %s174 = smul.addr %s173, 8
      %s175 = scalar_lea.vmem %s0, %s174
      %p176 = pneg %p37
      %p177 = pneg %p34
      %p178 = pneg %p58
      %p179 = pneg %p55
      %p180 = pneg %p79
      %p181 = pneg %p76
      %p182 = pneg %p105
      %p183 = pneg %p102
      %p184 = scmp.lt.s32.totalorder %s16, 1
      %s185 = scalar_select %p184, %s16, 1
      %s186 = smul.addr %s185, 32
      %s187 = smul.addr %s186, 8
      %s188 = scalar_lea.vmem %s3, %s187
      %p189 = pneg %p131
      %p190 = pneg %p128
      %p191 = scmp.lt.s32.totalorder %s16, 1
      %s192 = scalar_select %p191, %s16, 1
      %s193 = smul.addr %s192, 2
      %s194 = scalar_lea.vmem %s4, %s193
      %p195 = scmp.lt.s32.totalorder %s16, 1
      %s196 = scalar_select %p195, %s16, 1
      %s197 = smul.addr %s196, 72
      %s198 = smul.addr %s197, 8
      %s199 = scalar_lea.vmem %s0, %s198
      %p200 = scmp.lt.s32.totalorder %s16, 1
      %s201 = scalar_select %p200, %s16, 1
      %s202 = smul.addr %s201, 32
      %s203 = smul.addr %s202, 8
      %s204 = scalar_lea.vmem %s3, %s203
      %p205 = scmp.lt.s32.totalorder %s16, 1
      %s206 = scalar_select %p205, %s16, 1
      %s207 = smul.addr %s206, 2
      %s208 = scalar_lea.vmem %s4, %s207
      %v210 = vld [vmem:[%s199] sm:$0xff]
      %v211 = vld [vmem:[%s199 + $0x8] sm:$0x1]
      %v212 = vld [vmem:[%s199 + $0x10] sm:$0xff]
      %v213 = vld [vmem:[%s199 + $0x18] sm:$0x1]
      %v214 = vld [vmem:[%s199 + $0x20] sm:$0xff]
      %v215 = vld [vmem:[%s199 + $0x28] sm:$0x1]
      %v216 = vld [vmem:[%s199 + $0x30] sm:$0xff]
      %v217 = vld [vmem:[%s199 + $0x38] sm:$0x1]
      %v218 = vld [vmem:[%s199 + $0x40] sm:$0xff]
      %v219 = vld [vmem:[%s199 + $0x48] sm:$0x1]
      %v220 = vld [vmem:[%s199 + $0x50] sm:$0xff]
      %v221 = vld [vmem:[%s199 + $0x58] sm:$0x1]
      %v222 = vld [vmem:[%s199 + $0x60] sm:$0xff]
      %v223 = vld [vmem:[%s199 + $0x68] sm:$0x1]
      %v224 = vld [vmem:[%s199 + $0x70] sm:$0xff]
      %v225 = vld [vmem:[%s199 + $0x78] sm:$0x1]
      %v226 = vld [vmem:[%s199 + $0x80] sm:$0xff]
      %v227 = vld [vmem:[%s199 + $0x88] sm:$0x1]
      %v228 = vld [vmem:[%s199 + $0x90] sm:$0xff]
      %v229 = vld [vmem:[%s199 + $0x98] sm:$0x1]
      %v230 = vld [vmem:[%s199 + $0xa0] sm:$0xff]
      %v231 = vld [vmem:[%s199 + $0xa8] sm:$0x1]
      %v232 = vld [vmem:[%s199 + $0xb0] sm:$0xff]
      %v233 = vld [vmem:[%s199 + $0xb8] sm:$0x1]
      %v234 = vld [vmem:[%s199 + $0xc0] sm:$0xff]
      %v235 = vld [vmem:[%s199 + $0xc8] sm:$0x1]
      %v236 = vld [vmem:[%s199 + $0xd0] sm:$0xff]
      %v237 = vld [vmem:[%s199 + $0xd8] sm:$0x1]
      %v238 = vld [vmem:[%s199 + $0xe0] sm:$0xff]
      %v239 = vld [vmem:[%s199 + $0xe8] sm:$0x1]
      %v240 = vld [vmem:[%s199 + $0xf0] sm:$0xff]
      %v241 = vld [vmem:[%s199 + $0xf8] sm:$0x1]
      %v242 = vld [vmem:[%s199 + $0x100] sm:$0xff]
      %v243 = vld [vmem:[%s199 + $0x108] sm:$0x1]
      %v244 = vld [vmem:[%s199 + $0x110] sm:$0xff]
      %v245 = vld [vmem:[%s199 + $0x118] sm:$0x1]
      %v246 = vld [vmem:[%s199 + $0x120] sm:$0xff]
      %v247 = vld [vmem:[%s199 + $0x128] sm:$0x1]
      %v248 = vld [vmem:[%s199 + $0x130] sm:$0xff]
      %v249 = vld [vmem:[%s199 + $0x138] sm:$0x1]
      %v250 = vld [vmem:[%s199 + $0x140] sm:$0xff]
      %v251 = vld [vmem:[%s199 + $0x148] sm:$0x1]
      %v252 = vld [vmem:[%s199 + $0x150] sm:$0xff]
      %v253 = vld [vmem:[%s199 + $0x158] sm:$0x1]
      %v254 = vld [vmem:[%s199 + $0x160] sm:$0xff]
      %v255 = vld [vmem:[%s199 + $0x168] sm:$0x1]
      %v256 = vld [vmem:[%s199 + $0x170] sm:$0xff]
      %v257 = vld [vmem:[%s199 + $0x178] sm:$0x1]
      %v258 = vld [vmem:[%s199 + $0x180] sm:$0xff]
      %v259 = vld [vmem:[%s199 + $0x188] sm:$0x1]
      %v260 = vld [vmem:[%s199 + $0x190] sm:$0xff]
      %v261 = vld [vmem:[%s199 + $0x198] sm:$0x1]
      %v262 = vld [vmem:[%s199 + $0x1a0] sm:$0xff]
      %v263 = vld [vmem:[%s199 + $0x1a8] sm:$0x1]
      %v264 = vld [vmem:[%s199 + $0x1b0] sm:$0xff]
      %v265 = vld [vmem:[%s199 + $0x1b8] sm:$0x1]
      %v266 = vld [vmem:[%s199 + $0x1c0] sm:$0xff]
      %v267 = vld [vmem:[%s199 + $0x1c8] sm:$0x1]
      %v268 = vld [vmem:[%s199 + $0x1d0] sm:$0xff]
      %v269 = vld [vmem:[%s199 + $0x1d8] sm:$0x1]
      %v270 = vld [vmem:[%s199 + $0x1e0] sm:$0xff]
      %v271 = vld [vmem:[%s199 + $0x1e8] sm:$0x1]
      %v272 = vld [vmem:[%s199 + $0x1f0] sm:$0xff]
      %v273 = vld [vmem:[%s199 + $0x1f8] sm:$0x1]
      %v274 = vld [vmem:[%s199 + $0x200] sm:$0xff]
      %v275 = vld [vmem:[%s199 + $0x208] sm:$0x1]
      %v276 = vld [vmem:[%s199 + $0x210] sm:$0xff]
      %v277 = vld [vmem:[%s199 + $0x218] sm:$0x1]
      %v278 = vld [vmem:[%s199 + $0x220] sm:$0xff]
      %v279 = vld [vmem:[%s199 + $0x228] sm:$0x1]
      %v280 = vld [vmem:[%s199 + $0x230] sm:$0xff]
      %v281 = vld [vmem:[%s199 + $0x238] sm:$0x1]
      %vm282 = vcmp.gt.f32.partialorder %v210, 0.0
      %vm283 = vcmp.gt.f32.partialorder %v211, 0.0
      %vm284 = vcmp.gt.f32.partialorder %v212, 0.0
      %vm285 = vcmp.gt.f32.partialorder %v213, 0.0
      %vm286 = vcmp.gt.f32.partialorder %v214, 0.0
      %vm287 = vcmp.gt.f32.partialorder %v215, 0.0
      %vm288 = vcmp.gt.f32.partialorder %v216, 0.0
      %vm289 = vcmp.gt.f32.partialorder %v217, 0.0
      %vm290 = vcmp.gt.f32.partialorder %v218, 0.0
      %vm291 = vcmp.gt.f32.partialorder %v219, 0.0
      %vm292 = vcmp.gt.f32.partialorder %v220, 0.0
      %vm293 = vcmp.gt.f32.partialorder %v221, 0.0
      %vm294 = vcmp.gt.f32.partialorder %v222, 0.0
      %vm295 = vcmp.gt.f32.partialorder %v223, 0.0
      %vm296 = vcmp.gt.f32.partialorder %v224, 0.0
      %vm297 = vcmp.gt.f32.partialorder %v225, 0.0
      %vm298 = vcmp.gt.f32.partialorder %v226, 0.0
      %vm299 = vcmp.gt.f32.partialorder %v227, 0.0
      %vm300 = vcmp.gt.f32.partialorder %v228, 0.0
      %vm301 = vcmp.gt.f32.partialorder %v229, 0.0
      %vm302 = vcmp.gt.f32.partialorder %v230, 0.0
      %vm303 = vcmp.gt.f32.partialorder %v231, 0.0
      %vm304 = vcmp.gt.f32.partialorder %v232, 0.0
      %vm305 = vcmp.gt.f32.partialorder %v233, 0.0
      %vm306 = vcmp.gt.f32.partialorder %v234, 0.0
      %vm307 = vcmp.gt.f32.partialorder %v235, 0.0
      %vm308 = vcmp.gt.f32.partialorder %v236, 0.0
      %vm309 = vcmp.gt.f32.partialorder %v237, 0.0
      %vm310 = vcmp.gt.f32.partialorder %v238, 0.0
      %vm311 = vcmp.gt.f32.partialorder %v239, 0.0
      %vm312 = vcmp.gt.f32.partialorder %v240, 0.0
      %vm313 = vcmp.gt.f32.partialorder %v241, 0.0
      %vm314 = vcmp.gt.f32.partialorder %v242, 0.0
      %vm315 = vcmp.gt.f32.partialorder %v243, 0.0
      %vm316 = vcmp.gt.f32.partialorder %v244, 0.0
      %vm317 = vcmp.gt.f32.partialorder %v245, 0.0
      %vm318 = vcmp.gt.f32.partialorder %v246, 0.0
      %vm319 = vcmp.gt.f32.partialorder %v247, 0.0
      %vm320 = vcmp.gt.f32.partialorder %v248, 0.0
      %vm321 = vcmp.gt.f32.partialorder %v249, 0.0
      %vm322 = vcmp.gt.f32.partialorder %v250, 0.0
      %vm323 = vcmp.gt.f32.partialorder %v251, 0.0
      %vm324 = vcmp.gt.f32.partialorder %v252, 0.0
      %vm325 = vcmp.gt.f32.partialorder %v253, 0.0
      %vm326 = vcmp.gt.f32.partialorder %v254, 0.0
      %vm327 = vcmp.gt.f32.partialorder %v255, 0.0
      %vm328 = vcmp.gt.f32.partialorder %v256, 0.0
      %vm329 = vcmp.gt.f32.partialorder %v257, 0.0
      %vm330 = vcmp.gt.f32.partialorder %v258, 0.0
      %vm331 = vcmp.gt.f32.partialorder %v259, 0.0
      %vm332 = vcmp.gt.f32.partialorder %v260, 0.0
      %vm333 = vcmp.gt.f32.partialorder %v261, 0.0
      %vm334 = vcmp.gt.f32.partialorder %v262, 0.0
      %vm335 = vcmp.gt.f32.partialorder %v263, 0.0
      %vm336 = vcmp.gt.f32.partialorder %v264, 0.0
      %vm337 = vcmp.gt.f32.partialorder %v265, 0.0
      %vm338 = vcmp.gt.f32.partialorder %v266, 0.0
      %vm339 = vcmp.gt.f32.partialorder %v267, 0.0
      %vm340 = vcmp.gt.f32.partialorder %v268, 0.0
      %vm341 = vcmp.gt.f32.partialorder %v269, 0.0
      %vm342 = vcmp.gt.f32.partialorder %v270, 0.0
      %vm343 = vcmp.gt.f32.partialorder %v271, 0.0
      %vm344 = vcmp.gt.f32.partialorder %v272, 0.0
      %vm345 = vcmp.gt.f32.partialorder %v273, 0.0
      %vm346 = vcmp.gt.f32.partialorder %v274, 0.0
      %vm347 = vcmp.gt.f32.partialorder %v275, 0.0
      %vm348 = vcmp.gt.f32.partialorder %v276, 0.0
      %vm349 = vcmp.gt.f32.partialorder %v277, 0.0
      %vm350 = vcmp.gt.f32.partialorder %v278, 0.0
      %vm351 = vcmp.gt.f32.partialorder %v279, 0.0
      %vm352 = vcmp.gt.f32.partialorder %v280, 0.0
      %vm353 = vcmp.gt.f32.partialorder %v281, 0.0
      %v354 = vmul.f32 %v210, 0.2
      %v355 = vmul.f32 %v211, 0.2
      %v356 = vmul.f32 %v212, 0.2
      %v357 = vmul.f32 %v213, 0.2
      %v358 = vmul.f32 %v214, 0.2
      %v359 = vmul.f32 %v215, 0.2
      %v360 = vmul.f32 %v216, 0.2
      %v361 = vmul.f32 %v217, 0.2
      %v362 = vmul.f32 %v218, 0.2
      %v363 = vmul.f32 %v219, 0.2
      %v364 = vmul.f32 %v220, 0.2
      %v365 = vmul.f32 %v221, 0.2
      %v366 = vmul.f32 %v222, 0.2
      %v367 = vmul.f32 %v223, 0.2
      %v368 = vmul.f32 %v224, 0.2
      %v369 = vmul.f32 %v225, 0.2
      %v370 = vmul.f32 %v226, 0.2
      %v371 = vmul.f32 %v227, 0.2
      %v372 = vmul.f32 %v228, 0.2
      %v373 = vmul.f32 %v229, 0.2
      %v374 = vmul.f32 %v230, 0.2
      %v375 = vmul.f32 %v231, 0.2
      %v376 = vmul.f32 %v232, 0.2
      %v377 = vmul.f32 %v233, 0.2
      %v378 = vmul.f32 %v234, 0.2
      %v379 = vmul.f32 %v235, 0.2
      %v380 = vmul.f32 %v236, 0.2
      %v381 = vmul.f32 %v237, 0.2
      %v382 = vmul.f32 %v238, 0.2
      %v383 = vmul.f32 %v239, 0.2
      %v384 = vmul.f32 %v240, 0.2
      %v385 = vmul.f32 %v241, 0.2
      %v386 = vmul.f32 %v242, 0.2
      %v387 = vmul.f32 %v243, 0.2
      %v388 = vmul.f32 %v244, 0.2
      %v389 = vmul.f32 %v245, 0.2
      %v390 = vmul.f32 %v246, 0.2
      %v391 = vmul.f32 %v247, 0.2
      %v392 = vmul.f32 %v248, 0.2
      %v393 = vmul.f32 %v249, 0.2
      %v394 = vmul.f32 %v250, 0.2
      %v395 = vmul.f32 %v251, 0.2
      %v396 = vmul.f32 %v252, 0.2
      %v397 = vmul.f32 %v253, 0.2
      %v398 = vmul.f32 %v254, 0.2
      %v399 = vmul.f32 %v255, 0.2
      %v400 = vmul.f32 %v256, 0.2
      %v401 = vmul.f32 %v257, 0.2
      %v402 = vmul.f32 %v258, 0.2
      %v403 = vmul.f32 %v259, 0.2
      %v404 = vmul.f32 %v260, 0.2
      %v405 = vmul.f32 %v261, 0.2
      %v406 = vmul.f32 %v262, 0.2
      %v407 = vmul.f32 %v263, 0.2
      %v408 = vmul.f32 %v264, 0.2
      %v409 = vmul.f32 %v265, 0.2
      %v410 = vmul.f32 %v266, 0.2
      %v411 = vmul.f32 %v267, 0.2
      %v412 = vmul.f32 %v268, 0.2
      %v413 = vmul.f32 %v269, 0.2
      %v414 = vmul.f32 %v270, 0.2
      %v415 = vmul.f32 %v271, 0.2
      %v416 = vmul.f32 %v272, 0.2
      %v417 = vmul.f32 %v273, 0.2
      %v418 = vmul.f32 %v274, 0.2
      %v419 = vmul.f32 %v275, 0.2
      %v420 = vmul.f32 %v276, 0.2
      %v421 = vmul.f32 %v277, 0.2
      %v422 = vmul.f32 %v278, 0.2
      %v423 = vmul.f32 %v279, 0.2
      %v424 = vmul.f32 %v280, 0.2
      %v425 = vmul.f32 %v281, 0.2
      %v426 = vsel %vm282, %v210, %v354
      %v427 = vsel %vm283, %v211, %v355
      %v428 = vsel %vm284, %v212, %v356
      %v429 = vsel %vm285, %v213, %v357
      %v430 = vsel %vm286, %v214, %v358
      %v431 = vsel %vm287, %v215, %v359
      %v432 = vsel %vm288, %v216, %v360
      %v433 = vsel %vm289, %v217, %v361
      %v434 = vsel %vm290, %v218, %v362
      %v435 = vsel %vm291, %v219, %v363
      %v436 = vsel %vm292, %v220, %v364
      %v437 = vsel %vm293, %v221, %v365
      %v438 = vsel %vm294, %v222, %v366
      %v439 = vsel %vm295, %v223, %v367
      %v440 = vsel %vm296, %v224, %v368
      %v441 = vsel %vm297, %v225, %v369
      %v442 = vsel %vm298, %v226, %v370
      %v443 = vsel %vm299, %v227, %v371
      %v444 = vsel %vm300, %v228, %v372
      %v445 = vsel %vm301, %v229, %v373
      %v446 = vsel %vm302, %v230, %v374
      %v447 = vsel %vm303, %v231, %v375
      %v448 = vsel %vm304, %v232, %v376
      %v449 = vsel %vm305, %v233, %v377
      %v450 = vsel %vm306, %v234, %v378
      %v451 = vsel %vm307, %v235, %v379
      %v452 = vsel %vm308, %v236, %v380
      %v453 = vsel %vm309, %v237, %v381
      %v454 = vsel %vm310, %v238, %v382
      %v455 = vsel %vm311, %v239, %v383
      %v456 = vsel %vm312, %v240, %v384
      %v457 = vsel %vm313, %v241, %v385
      %v458 = vsel %vm314, %v242, %v386
      %v459 = vsel %vm315, %v243, %v387
      %v460 = vsel %vm316, %v244, %v388
      %v461 = vsel %vm317, %v245, %v389
      %v462 = vsel %vm318, %v246, %v390
      %v463 = vsel %vm319, %v247, %v391
      %v464 = vsel %vm320, %v248, %v392
      %v465 = vsel %vm321, %v249, %v393
      %v466 = vsel %vm322, %v250, %v394
      %v467 = vsel %vm323, %v251, %v395
      %v468 = vsel %vm324, %v252, %v396
      %v469 = vsel %vm325, %v253, %v397
      %v470 = vsel %vm326, %v254, %v398
      %v471 = vsel %vm327, %v255, %v399
      %v472 = vsel %vm328, %v256, %v400
      %v473 = vsel %vm329, %v257, %v401
      %v474 = vsel %vm330, %v258, %v402
      %v475 = vsel %vm331, %v259, %v403
      %v476 = vsel %vm332, %v260, %v404
      %v477 = vsel %vm333, %v261, %v405
      %v478 = vsel %vm334, %v262, %v406
      %v479 = vsel %vm335, %v263, %v407
      %v480 = vsel %vm336, %v264, %v408
      %v481 = vsel %vm337, %v265, %v409
      %v482 = vsel %vm338, %v266, %v410
      %v483 = vsel %vm339, %v267, %v411
      %v484 = vsel %vm340, %v268, %v412
      %v485 = vsel %vm341, %v269, %v413
      %v486 = vsel %vm342, %v270, %v414
      %v487 = vsel %vm343, %v271, %v415
      %v488 = vsel %vm344, %v272, %v416
      %v489 = vsel %vm345, %v273, %v417
      %v490 = vsel %vm346, %v274, %v418
      %v491 = vsel %vm347, %v275, %v419
      %v492 = vsel %vm348, %v276, %v420
      %v493 = vsel %vm349, %v277, %v421
      %v494 = vsel %vm350, %v278, %v422
      %v495 = vsel %vm351, %v279, %v423
      %v496 = vsel %vm352, %v280, %v424
      %v497 = vsel %vm353, %v281, %v425
      %vm498 = vcmask 31744
      %499 = vst.msk [vmem:[#allocation3] sm:$0xff] %vm498, %v426
      %500 = vst.msk [vmem:[#allocation3 + $0x8] sm:$0xff] %vm498, %v428
      %501 = vst.msk [vmem:[#allocation3 + $0x10] sm:$0xff] %vm498, %v430
      %502 = vst.msk [vmem:[#allocation3 + $0x18] sm:$0xff] %vm498, %v432
      %503 = vst.msk [vmem:[#allocation3 + $0x20] sm:$0xff] %vm498, %v434
      %504 = vst.msk [vmem:[#allocation3 + $0x28] sm:$0xff] %vm498, %v436
      %505 = vst.msk [vmem:[#allocation3 + $0x30] sm:$0xff] %vm498, %v438
      %506 = vst.msk [vmem:[#allocation3 + $0x38] sm:$0xff] %vm498, %v440
      %515 = vrot.lane.b32.xlu0 %v444, 4
      %v516 = vpop.permute.xlu0 %515
      %517 = vrot.lane.b32.xlu0 %v446, 4
      %v518 = vpop.permute.xlu0 %517
      %519 = vrot.lane.b32.xlu0 %v448, 4
      %v520 = vpop.permute.xlu0 %519
      %521 = vrot.lane.b32.xlu0 %v450, 4
      %v522 = vpop.permute.xlu0 %521
      %523 = vrot.lane.b32.xlu0 %v452, 4
      %v524 = vpop.permute.xlu0 %523
      %525 = vrot.lane.b32.xlu0 %v454, 4
      %v526 = vpop.permute.xlu0 %525
      %527 = vrot.lane.b32.xlu0 %v456, 4
      %v528 = vpop.permute.xlu0 %527
      %529 = vrot.lane.b32.xlu0 %v458, 4
      %v530 = vpop.permute.xlu0 %529
      %vm539 = vcmask 64544
      %540 = vst.msk [vmem:[#allocation3] sm:$0xff] %vm539, %v516
      %541 = vst.msk [vmem:[#allocation3 + $0x8] sm:$0xff] %vm539, %v518
      %542 = vst.msk [vmem:[#allocation3 + $0x10] sm:$0xff] %vm539, %v520
      %543 = vst.msk [vmem:[#allocation3 + $0x18] sm:$0xff] %vm539, %v522
      %544 = vst.msk [vmem:[#allocation3 + $0x20] sm:$0xff] %vm539, %v524
      %545 = vst.msk [vmem:[#allocation3 + $0x28] sm:$0xff] %vm539, %v526
      %546 = vst.msk [vmem:[#allocation3 + $0x30] sm:$0xff] %vm539, %v528
      %547 = vst.msk [vmem:[#allocation3 + $0x38] sm:$0xff] %vm539, %v530
      %564 = vrot.lane.b32.xlu0 %v426, 8
      %v565 = vpop.permute.xlu0 %564
      %566 = vrot.lane.b32.xlu0 %v427, 8
      %v567 = vpop.permute.xlu0 %566
      %568 = vrot.lane.b32.xlu0 %v428, 8
      %v569 = vpop.permute.xlu0 %568
      %570 = vrot.lane.b32.xlu0 %v429, 8
      %v571 = vpop.permute.xlu0 %570
      %572 = vrot.lane.b32.xlu0 %v430, 8
      %v573 = vpop.permute.xlu0 %572
      %574 = vrot.lane.b32.xlu0 %v431, 8
      %v575 = vpop.permute.xlu0 %574
      %576 = vrot.lane.b32.xlu0 %v432, 8
      %v577 = vpop.permute.xlu0 %576
      %578 = vrot.lane.b32.xlu0 %v433, 8
      %v579 = vpop.permute.xlu0 %578
      %580 = vrot.lane.b32.xlu0 %v434, 8
      %v581 = vpop.permute.xlu0 %580
      %582 = vrot.lane.b32.xlu0 %v435, 8
      %v583 = vpop.permute.xlu0 %582
      %584 = vrot.lane.b32.xlu0 %v436, 8
      %v585 = vpop.permute.xlu0 %584
      %586 = vrot.lane.b32.xlu0 %v437, 8
      %v587 = vpop.permute.xlu0 %586
      %588 = vrot.lane.b32.xlu0 %v438, 8
      %v589 = vpop.permute.xlu0 %588
      %590 = vrot.lane.b32.xlu0 %v439, 8
      %v591 = vpop.permute.xlu0 %590
      %592 = vrot.lane.b32.xlu0 %v440, 8
      %v593 = vpop.permute.xlu0 %592
      %594 = vrot.lane.b32.xlu0 %v441, 8
      %v595 = vpop.permute.xlu0 %594
      %vm612 = vcmask 97345
      %613 = vst.msk [vmem:[#allocation3 - $0x1] sm:$0xfe] %vm612, %v565
      %vm614 = vcmask 90176
      %615 = vst.msk [vmem:[#allocation3 + $0x7] sm:$0x1] %vm614, %v567
      %616 = vst.msk [vmem:[#allocation3 + $0x7] sm:$0xfe] %vm612, %v569
      %617 = vst.msk [vmem:[#allocation3 + $0xf] sm:$0x1] %vm614, %v571
      %618 = vst.msk [vmem:[#allocation3 + $0xf] sm:$0xfe] %vm612, %v573
      %619 = vst.msk [vmem:[#allocation3 + $0x17] sm:$0x1] %vm614, %v575
      %620 = vst.msk [vmem:[#allocation3 + $0x17] sm:$0xfe] %vm612, %v577
      %621 = vst.msk [vmem:[#allocation3 + $0x1f] sm:$0x1] %vm614, %v579
      %622 = vst.msk [vmem:[#allocation3 + $0x1f] sm:$0xfe] %vm612, %v581
      %623 = vst.msk [vmem:[#allocation3 + $0x27] sm:$0x1] %vm614, %v583
      %624 = vst.msk [vmem:[#allocation3 + $0x27] sm:$0xfe] %vm612, %v585
      %625 = vst.msk [vmem:[#allocation3 + $0x2f] sm:$0x1] %vm614, %v587
      %626 = vst.msk [vmem:[#allocation3 + $0x2f] sm:$0xfe] %vm612, %v589
      %627 = vst.msk [vmem:[#allocation3 + $0x37] sm:$0x1] %vm614, %v591
      %628 = vst.msk [vmem:[#allocation3 + $0x37] sm:$0xfe] %vm612, %v593
      %629 = vst.msk [vmem:[#allocation3 + $0x3f] sm:$0x1] %vm614, %v595
      %638 = vrot.lane.b32.xlu0 %v444, 12
      %v639 = vpop.permute.xlu0 %638
      %640 = vrot.lane.b32.xlu0 %v445, 12
      %v641 = vpop.permute.xlu0 %640
      %642 = vrot.lane.b32.xlu0 %v446, 12
      %v643 = vpop.permute.xlu0 %642
      %644 = vrot.lane.b32.xlu0 %v447, 12
      %v645 = vpop.permute.xlu0 %644
      %646 = vrot.lane.b32.xlu0 %v448, 12
      %v647 = vpop.permute.xlu0 %646
      %648 = vrot.lane.b32.xlu0 %v449, 12
      %v649 = vpop.permute.xlu0 %648
      %650 = vrot.lane.b32.xlu0 %v450, 12
      %v651 = vpop.permute.xlu0 %650
      %652 = vrot.lane.b32.xlu0 %v451, 12
      %v653 = vpop.permute.xlu0 %652
      %654 = vrot.lane.b32.xlu0 %v452, 12
      %v655 = vpop.permute.xlu0 %654
      %656 = vrot.lane.b32.xlu0 %v453, 12
      %v657 = vpop.permute.xlu0 %656
      %658 = vrot.lane.b32.xlu0 %v454, 12
      %v659 = vpop.permute.xlu0 %658
      %660 = vrot.lane.b32.xlu0 %v455, 12
      %v661 = vpop.permute.xlu0 %660
      %662 = vrot.lane.b32.xlu0 %v456, 12
      %v663 = vpop.permute.xlu0 %662
      %664 = vrot.lane.b32.xlu0 %v457, 12
      %v665 = vpop.permute.xlu0 %664
      %666 = vrot.lane.b32.xlu0 %v458, 12
      %v667 = vpop.permute.xlu0 %666
      %668 = vrot.lane.b32.xlu0 %v459, 12
      %v669 = vpop.permute.xlu0 %668
      %vm686 = vcmask 130145
      %687 = vst.msk [vmem:[#allocation3 - $0x1] sm:$0xfe] %vm686, %v639
      %vm688 = vcmask 122976
      %689 = vst.msk [vmem:[#allocation3 + $0x7] sm:$0x1] %vm688, %v641
      %690 = vst.msk [vmem:[#allocation3 + $0x7] sm:$0xfe] %vm686, %v643
      %691 = vst.msk [vmem:[#allocation3 + $0xf] sm:$0x1] %vm688, %v645
      %692 = vst.msk [vmem:[#allocation3 + $0xf] sm:$0xfe] %vm686, %v647
      %693 = vst.msk [vmem:[#allocation3 + $0x17] sm:$0x1] %vm688, %v649
      %694 = vst.msk [vmem:[#allocation3 + $0x17] sm:$0xfe] %vm686, %v651
      %695 = vst.msk [vmem:[#allocation3 + $0x1f] sm:$0x1] %vm688, %v653
      %696 = vst.msk [vmem:[#allocation3 + $0x1f] sm:$0xfe] %vm686, %v655
      %697 = vst.msk [vmem:[#allocation3 + $0x27] sm:$0x1] %vm688, %v657
      %698 = vst.msk [vmem:[#allocation3 + $0x27] sm:$0xfe] %vm686, %v659
      %699 = vst.msk [vmem:[#allocation3 + $0x2f] sm:$0x1] %vm688, %v661
      %700 = vst.msk [vmem:[#allocation3 + $0x2f] sm:$0xfe] %vm686, %v663
      %701 = vst.msk [vmem:[#allocation3 + $0x37] sm:$0x1] %vm688, %v665
      %702 = vst.msk [vmem:[#allocation3 + $0x37] sm:$0xfe] %vm686, %v667
      %703 = vst.msk [vmem:[#allocation3 + $0x3f] sm:$0x1] %vm688, %v669
      %712 = vrot.lane.b32.xlu0 %v462, 16
      %v713 = vpop.permute.xlu0 %712
      %714 = vrot.lane.b32.xlu0 %v464, 16
      %v715 = vpop.permute.xlu0 %714
      %716 = vrot.lane.b32.xlu0 %v466, 16
      %v717 = vpop.permute.xlu0 %716
      %718 = vrot.lane.b32.xlu0 %v468, 16
      %v719 = vpop.permute.xlu0 %718
      %720 = vrot.lane.b32.xlu0 %v470, 16
      %v721 = vpop.permute.xlu0 %720
      %722 = vrot.lane.b32.xlu0 %v472, 16
      %v723 = vpop.permute.xlu0 %722
      %724 = vrot.lane.b32.xlu0 %v474, 16
      %v725 = vpop.permute.xlu0 %724
      %726 = vrot.lane.b32.xlu0 %v476, 16
      %v727 = vpop.permute.xlu0 %726
      %vm736 = vcmask 162944
      %737 = vst.msk [vmem:[#allocation3] sm:$0xff] %vm736, %v713
      %738 = vst.msk [vmem:[#allocation3 + $0x8] sm:$0xff] %vm736, %v715
      %739 = vst.msk [vmem:[#allocation3 + $0x10] sm:$0xff] %vm736, %v717
      %740 = vst.msk [vmem:[#allocation3 + $0x18] sm:$0xff] %vm736, %v719
      %741 = vst.msk [vmem:[#allocation3 + $0x20] sm:$0xff] %vm736, %v721
      %742 = vst.msk [vmem:[#allocation3 + $0x28] sm:$0xff] %vm736, %v723
      %743 = vst.msk [vmem:[#allocation3 + $0x30] sm:$0xff] %vm736, %v725
      %744 = vst.msk [vmem:[#allocation3 + $0x38] sm:$0xff] %vm736, %v727
      %753 = vrot.lane.b32.xlu0 %v480, 20
      %v754 = vpop.permute.xlu0 %753
      %755 = vrot.lane.b32.xlu0 %v482, 20
      %v756 = vpop.permute.xlu0 %755
      %757 = vrot.lane.b32.xlu0 %v484, 20
      %v758 = vpop.permute.xlu0 %757
      %759 = vrot.lane.b32.xlu0 %v486, 20
      %v760 = vpop.permute.xlu0 %759
      %761 = vrot.lane.b32.xlu0 %v488, 20
      %v762 = vpop.permute.xlu0 %761
      %763 = vrot.lane.b32.xlu0 %v490, 20
      %v764 = vpop.permute.xlu0 %763
      %765 = vrot.lane.b32.xlu0 %v492, 20
      %v766 = vpop.permute.xlu0 %765
      %767 = vrot.lane.b32.xlu0 %v494, 20
      %v768 = vpop.permute.xlu0 %767
      %vm777 = vcmask 195744
      %778 = vst.msk [vmem:[#allocation3] sm:$0xff] %vm777, %v754
      %779 = vst.msk [vmem:[#allocation3 + $0x8] sm:$0xff] %vm777, %v756
      %780 = vst.msk [vmem:[#allocation3 + $0x10] sm:$0xff] %vm777, %v758
      %781 = vst.msk [vmem:[#allocation3 + $0x18] sm:$0xff] %vm777, %v760
      %782 = vst.msk [vmem:[#allocation3 + $0x20] sm:$0xff] %vm777, %v762
      %783 = vst.msk [vmem:[#allocation3 + $0x28] sm:$0xff] %vm777, %v764
      %784 = vst.msk [vmem:[#allocation3 + $0x30] sm:$0xff] %vm777, %v766
      %785 = vst.msk [vmem:[#allocation3 + $0x38] sm:$0xff] %vm777, %v768
      %794 = vrot.lane.b32.xlu0 %v462, 24
      %v795 = vpop.permute.xlu0 %794
      %796 = vrot.lane.b32.xlu0 %v463, 24
      %v797 = vpop.permute.xlu0 %796
      %798 = vrot.lane.b32.xlu0 %v464, 24
      %v799 = vpop.permute.xlu0 %798
      %800 = vrot.lane.b32.xlu0 %v465, 24
      %v801 = vpop.permute.xlu0 %800
      %802 = vrot.lane.b32.xlu0 %v466, 24
      %v803 = vpop.permute.xlu0 %802
      %804 = vrot.lane.b32.xlu0 %v467, 24
      %v805 = vpop.permute.xlu0 %804
      %806 = vrot.lane.b32.xlu0 %v468, 24
      %v807 = vpop.permute.xlu0 %806
      %808 = vrot.lane.b32.xlu0 %v469, 24
      %v809 = vpop.permute.xlu0 %808
      %810 = vrot.lane.b32.xlu0 %v470, 24
      %v811 = vpop.permute.xlu0 %810
      %812 = vrot.lane.b32.xlu0 %v471, 24
      %v813 = vpop.permute.xlu0 %812
      %814 = vrot.lane.b32.xlu0 %v472, 24
      %v815 = vpop.permute.xlu0 %814
      %816 = vrot.lane.b32.xlu0 %v473, 24
      %v817 = vpop.permute.xlu0 %816
      %818 = vrot.lane.b32.xlu0 %v474, 24
      %v819 = vpop.permute.xlu0 %818
      %820 = vrot.lane.b32.xlu0 %v475, 24
      %v821 = vpop.permute.xlu0 %820
      %822 = vrot.lane.b32.xlu0 %v476, 24
      %v823 = vpop.permute.xlu0 %822
      %824 = vrot.lane.b32.xlu0 %v477, 24
      %v825 = vpop.permute.xlu0 %824
      %vm842 = vcmask 228545
      %843 = vst.msk [vmem:[#allocation3 - $0x1] sm:$0xfe] %vm842, %v795
      %vm844 = vcmask 221376
      %845 = vst.msk [vmem:[#allocation3 + $0x7] sm:$0x1] %vm844, %v797
      %846 = vst.msk [vmem:[#allocation3 + $0x7] sm:$0xfe] %vm842, %v799
      %847 = vst.msk [vmem:[#allocation3 + $0xf] sm:$0x1] %vm844, %v801
      %848 = vst.msk [vmem:[#allocation3 + $0xf] sm:$0xfe] %vm842, %v803
      %849 = vst.msk [vmem:[#allocation3 + $0x17] sm:$0x1] %vm844, %v805
      %850 = vst.msk [vmem:[#allocation3 + $0x17] sm:$0xfe] %vm842, %v807
      %851 = vst.msk [vmem:[#allocation3 + $0x1f] sm:$0x1] %vm844, %v809
      %852 = vst.msk [vmem:[#allocation3 + $0x1f] sm:$0xfe] %vm842, %v811
      %853 = vst.msk [vmem:[#allocation3 + $0x27] sm:$0x1] %vm844, %v813
      %854 = vst.msk [vmem:[#allocation3 + $0x27] sm:$0xfe] %vm842, %v815
      %855 = vst.msk [vmem:[#allocation3 + $0x2f] sm:$0x1] %vm844, %v817
      %856 = vst.msk [vmem:[#allocation3 + $0x2f] sm:$0xfe] %vm842, %v819
      %857 = vst.msk [vmem:[#allocation3 + $0x37] sm:$0x1] %vm844, %v821
      %858 = vst.msk [vmem:[#allocation3 + $0x37] sm:$0xfe] %vm842, %v823
      %859 = vst.msk [vmem:[#allocation3 + $0x3f] sm:$0x1] %vm844, %v825
      %868 = vrot.lane.b32.xlu0 %v480, 28
      %v869 = vpop.permute.xlu0 %868
      %870 = vrot.lane.b32.xlu0 %v481, 28
      %v871 = vpop.permute.xlu0 %870
      %872 = vrot.lane.b32.xlu0 %v482, 28
      %v873 = vpop.permute.xlu0 %872
      %874 = vrot.lane.b32.xlu0 %v483, 28
      %v875 = vpop.permute.xlu0 %874
      %876 = vrot.lane.b32.xlu0 %v484, 28
      %v877 = vpop.permute.xlu0 %876
      %878 = vrot.lane.b32.xlu0 %v485, 28
      %v879 = vpop.permute.xlu0 %878
      %880 = vrot.lane.b32.xlu0 %v486, 28
      %v881 = vpop.permute.xlu0 %880
      %882 = vrot.lane.b32.xlu0 %v487, 28
      %v883 = vpop.permute.xlu0 %882
      %884 = vrot.lane.b32.xlu0 %v488, 28
      %v885 = vpop.permute.xlu0 %884
      %886 = vrot.lane.b32.xlu0 %v489, 28
      %v887 = vpop.permute.xlu0 %886
      %888 = vrot.lane.b32.xlu0 %v490, 28
      %v889 = vpop.permute.xlu0 %888
      %890 = vrot.lane.b32.xlu0 %v491, 28
      %v891 = vpop.permute.xlu0 %890
      %892 = vrot.lane.b32.xlu0 %v492, 28
      %v893 = vpop.permute.xlu0 %892
      %894 = vrot.lane.b32.xlu0 %v493, 28
      %v895 = vpop.permute.xlu0 %894
      %896 = vrot.lane.b32.xlu0 %v494, 28
      %v897 = vpop.permute.xlu0 %896
      %898 = vrot.lane.b32.xlu0 %v495, 28
      %v899 = vpop.permute.xlu0 %898
      %vm916 = vcmask 261345
      %917 = vst.msk [vmem:[#allocation3 - $0x1] sm:$0xfe] %vm916, %v869
      %vm918 = vcmask 254176
      %919 = vst.msk [vmem:[#allocation3 + $0x7] sm:$0x1] %vm918, %v871
      %920 = vst.msk [vmem:[#allocation3 + $0x7] sm:$0xfe] %vm916, %v873
      %921 = vst.msk [vmem:[#allocation3 + $0xf] sm:$0x1] %vm918, %v875
      %922 = vst.msk [vmem:[#allocation3 + $0xf] sm:$0xfe] %vm916, %v877
      %923 = vst.msk [vmem:[#allocation3 + $0x17] sm:$0x1] %vm918, %v879
      %924 = vst.msk [vmem:[#allocation3 + $0x17] sm:$0xfe] %vm916, %v881
      %925 = vst.msk [vmem:[#allocation3 + $0x1f] sm:$0x1] %vm918, %v883
      %926 = vst.msk [vmem:[#allocation3 + $0x1f] sm:$0xfe] %vm916, %v885
      %927 = vst.msk [vmem:[#allocation3 + $0x27] sm:$0x1] %vm918, %v887
      %928 = vst.msk [vmem:[#allocation3 + $0x27] sm:$0xfe] %vm916, %v889
      %929 = vst.msk [vmem:[#allocation3 + $0x2f] sm:$0x1] %vm918, %v891
      %930 = vst.msk [vmem:[#allocation3 + $0x2f] sm:$0xfe] %vm916, %v893
      %931 = vst.msk [vmem:[#allocation3 + $0x37] sm:$0x1] %vm918, %v895
      %932 = vst.msk [vmem:[#allocation3 + $0x37] sm:$0xfe] %vm916, %v897
      %933 = vst.msk [vmem:[#allocation3 + $0x3f] sm:$0x1] %vm918, %v899
      %935 = vrot.lane.b32.xlu0 %v428, 32
      %v936 = vpop.permute.xlu0 %935
      %937 = vrot.lane.b32.xlu0 %v430, 32
      %v938 = vpop.permute.xlu0 %937
      %939 = vrot.lane.b32.xlu0 %v432, 32
      %v940 = vpop.permute.xlu0 %939
      %941 = vrot.lane.b32.xlu0 %v434, 32
      %v942 = vpop.permute.xlu0 %941
      %943 = vrot.lane.b32.xlu0 %v436, 32
      %v944 = vpop.permute.xlu0 %943
      %945 = vrot.lane.b32.xlu0 %v438, 32
      %v946 = vpop.permute.xlu0 %945
      %947 = vrot.lane.b32.xlu0 %v440, 32
      %v948 = vpop.permute.xlu0 %947
      %949 = vrot.lane.b32.xlu0 %v442, 32
      %v950 = vpop.permute.xlu0 %949
      %vm959 = vcmask 294144
      %960 = vst.msk [vmem:[#allocation3] sm:$0xff] %vm959, %v936
      %961 = vst.msk [vmem:[#allocation3 + $0x8] sm:$0xff] %vm959, %v938
      %962 = vst.msk [vmem:[#allocation3 + $0x10] sm:$0xff] %vm959, %v940
      %963 = vst.msk [vmem:[#allocation3 + $0x18] sm:$0xff] %vm959, %v942
      %964 = vst.msk [vmem:[#allocation3 + $0x20] sm:$0xff] %vm959, %v944
      %965 = vst.msk [vmem:[#allocation3 + $0x28] sm:$0xff] %vm959, %v946
      %966 = vst.msk [vmem:[#allocation3 + $0x30] sm:$0xff] %vm959, %v948
      %967 = vst.msk [vmem:[#allocation3 + $0x38] sm:$0xff] %vm959, %v950
      %969 = vrot.lane.b32.xlu0 %v446, 36
      %v970 = vpop.permute.xlu0 %969
      %971 = vrot.lane.b32.xlu0 %v448, 36
      %v972 = vpop.permute.xlu0 %971
      %973 = vrot.lane.b32.xlu0 %v450, 36
      %v974 = vpop.permute.xlu0 %973
      %975 = vrot.lane.b32.xlu0 %v452, 36
      %v976 = vpop.permute.xlu0 %975
      %977 = vrot.lane.b32.xlu0 %v454, 36
      %v978 = vpop.permute.xlu0 %977
      %979 = vrot.lane.b32.xlu0 %v456, 36
      %v980 = vpop.permute.xlu0 %979
      %981 = vrot.lane.b32.xlu0 %v458, 36
      %v982 = vpop.permute.xlu0 %981
      %983 = vrot.lane.b32.xlu0 %v460, 36
      %v984 = vpop.permute.xlu0 %983
      %vm993 = vcmask 326944
      %994 = vst.msk [vmem:[#allocation3] sm:$0xff] %vm993, %v970
      %995 = vst.msk [vmem:[#allocation3 + $0x8] sm:$0xff] %vm993, %v972
      %996 = vst.msk [vmem:[#allocation3 + $0x10] sm:$0xff] %vm993, %v974
      %997 = vst.msk [vmem:[#allocation3 + $0x18] sm:$0xff] %vm993, %v976
      %998 = vst.msk [vmem:[#allocation3 + $0x20] sm:$0xff] %vm993, %v978
      %999 = vst.msk [vmem:[#allocation3 + $0x28] sm:$0xff] %vm993, %v980
      %1000 = vst.msk [vmem:[#allocation3 + $0x30] sm:$0xff] %vm993, %v982
      %1001 = vst.msk [vmem:[#allocation3 + $0x38] sm:$0xff] %vm993, %v984
      %1003 = vrot.lane.b32.xlu0 %v428, 40
      %v1004 = vpop.permute.xlu0 %1003
      %1005 = vrot.lane.b32.xlu0 %v429, 40
      %v1006 = vpop.permute.xlu0 %1005
      %1007 = vrot.lane.b32.xlu0 %v430, 40
      %v1008 = vpop.permute.xlu0 %1007
      %1009 = vrot.lane.b32.xlu0 %v431, 40
      %v1010 = vpop.permute.xlu0 %1009
      %1011 = vrot.lane.b32.xlu0 %v432, 40
      %v1012 = vpop.permute.xlu0 %1011
      %1013 = vrot.lane.b32.xlu0 %v433, 40
      %v1014 = vpop.permute.xlu0 %1013
      %1015 = vrot.lane.b32.xlu0 %v434, 40
      %v1016 = vpop.permute.xlu0 %1015
      %1017 = vrot.lane.b32.xlu0 %v435, 40
      %v1018 = vpop.permute.xlu0 %1017
      %1019 = vrot.lane.b32.xlu0 %v436, 40
      %v1020 = vpop.permute.xlu0 %1019
      %1021 = vrot.lane.b32.xlu0 %v437, 40
      %v1022 = vpop.permute.xlu0 %1021
      %1023 = vrot.lane.b32.xlu0 %v438, 40
      %v1024 = vpop.permute.xlu0 %1023
      %1025 = vrot.lane.b32.xlu0 %v439, 40
      %v1026 = vpop.permute.xlu0 %1025
      %1027 = vrot.lane.b32.xlu0 %v440, 40
      %v1028 = vpop.permute.xlu0 %1027
      %1029 = vrot.lane.b32.xlu0 %v441, 40
      %v1030 = vpop.permute.xlu0 %1029
      %1031 = vrot.lane.b32.xlu0 %v442, 40
      %v1032 = vpop.permute.xlu0 %1031
      %1033 = vrot.lane.b32.xlu0 %v443, 40
      %v1034 = vpop.permute.xlu0 %1033
      %vm1051 = vcmask 359745
      %1052 = vst.msk [vmem:[#allocation3 - $0x1] sm:$0xfe] %vm1051, %v1004
      %vm1053 = vcmask 352576
      %1054 = vst.msk [vmem:[#allocation3 + $0x7] sm:$0x1] %vm1053, %v1006
      %1055 = vst.msk [vmem:[#allocation3 + $0x7] sm:$0xfe] %vm1051, %v1008
      %1056 = vst.msk [vmem:[#allocation3 + $0xf] sm:$0x1] %vm1053, %v1010
      %1057 = vst.msk [vmem:[#allocation3 + $0xf] sm:$0xfe] %vm1051, %v1012
      %1058 = vst.msk [vmem:[#allocation3 + $0x17] sm:$0x1] %vm1053, %v1014
      %1059 = vst.msk [vmem:[#allocation3 + $0x17] sm:$0xfe] %vm1051, %v1016
      %1060 = vst.msk [vmem:[#allocation3 + $0x1f] sm:$0x1] %vm1053, %v1018
      %1061 = vst.msk [vmem:[#allocation3 + $0x1f] sm:$0xfe] %vm1051, %v1020
      %1062 = vst.msk [vmem:[#allocation3 + $0x27] sm:$0x1] %vm1053, %v1022
      %1063 = vst.msk [vmem:[#allocation3 + $0x27] sm:$0xfe] %vm1051, %v1024
      %1064 = vst.msk [vmem:[#allocation3 + $0x2f] sm:$0x1] %vm1053, %v1026
      %1065 = vst.msk [vmem:[#allocation3 + $0x2f] sm:$0xfe] %vm1051, %v1028
      %1066 = vst.msk [vmem:[#allocation3 + $0x37] sm:$0x1] %vm1053, %v1030
      %1067 = vst.msk [vmem:[#allocation3 + $0x37] sm:$0xfe] %vm1051, %v1032
      %1068 = vst.msk [vmem:[#allocation3 + $0x3f] sm:$0x1] %vm1053, %v1034
      %1070 = vrot.lane.b32.xlu0 %v446, 44
      %v1071 = vpop.permute.xlu0 %1070
      %1072 = vrot.lane.b32.xlu0 %v447, 44
      %v1073 = vpop.permute.xlu0 %1072
      %1074 = vrot.lane.b32.xlu0 %v448, 44
      %v1075 = vpop.permute.xlu0 %1074
      %1076 = vrot.lane.b32.xlu0 %v449, 44
      %v1077 = vpop.permute.xlu0 %1076
      %1078 = vrot.lane.b32.xlu0 %v450, 44
      %v1079 = vpop.permute.xlu0 %1078
      %1080 = vrot.lane.b32.xlu0 %v451, 44
      %v1081 = vpop.permute.xlu0 %1080
      %1082 = vrot.lane.b32.xlu0 %v452, 44
      %v1083 = vpop.permute.xlu0 %1082
      %1084 = vrot.lane.b32.xlu0 %v453, 44
      %v1085 = vpop.permute.xlu0 %1084
      %1086 = vrot.lane.b32.xlu0 %v454, 44
      %v1087 = vpop.permute.xlu0 %1086
      %1088 = vrot.lane.b32.xlu0 %v455, 44
      %v1089 = vpop.permute.xlu0 %1088
      %1090 = vrot.lane.b32.xlu0 %v456, 44
      %v1091 = vpop.permute.xlu0 %1090
      %1092 = vrot.lane.b32.xlu0 %v457, 44
      %v1093 = vpop.permute.xlu0 %1092
      %1094 = vrot.lane.b32.xlu0 %v458, 44
      %v1095 = vpop.permute.xlu0 %1094
      %1096 = vrot.lane.b32.xlu0 %v459, 44
      %v1097 = vpop.permute.xlu0 %1096
      %1098 = vrot.lane.b32.xlu0 %v460, 44
      %v1099 = vpop.permute.xlu0 %1098
      %1100 = vrot.lane.b32.xlu0 %v461, 44
      %v1101 = vpop.permute.xlu0 %1100
      %vm1118 = vcmask 392545
      %1119 = vst.msk [vmem:[#allocation3 - $0x1] sm:$0xfe] %vm1118, %v1071
      %vm1120 = vcmask 385376
      %1121 = vst.msk [vmem:[#allocation3 + $0x7] sm:$0x1] %vm1120, %v1073
      %1122 = vst.msk [vmem:[#allocation3 + $0x7] sm:$0xfe] %vm1118, %v1075
      %1123 = vst.msk [vmem:[#allocation3 + $0xf] sm:$0x1] %vm1120, %v1077
      %1124 = vst.msk [vmem:[#allocation3 + $0xf] sm:$0xfe] %vm1118, %v1079
      %1125 = vst.msk [vmem:[#allocation3 + $0x17] sm:$0x1] %vm1120, %v1081
      %1126 = vst.msk [vmem:[#allocation3 + $0x17] sm:$0xfe] %vm1118, %v1083
      %1127 = vst.msk [vmem:[#allocation3 + $0x1f] sm:$0x1] %vm1120, %v1085
      %1128 = vst.msk [vmem:[#allocation3 + $0x1f] sm:$0xfe] %vm1118, %v1087
      %1129 = vst.msk [vmem:[#allocation3 + $0x27] sm:$0x1] %vm1120, %v1089
      %1130 = vst.msk [vmem:[#allocation3 + $0x27] sm:$0xfe] %vm1118, %v1091
      %1131 = vst.msk [vmem:[#allocation3 + $0x2f] sm:$0x1] %vm1120, %v1093
      %1132 = vst.msk [vmem:[#allocation3 + $0x2f] sm:$0xfe] %vm1118, %v1095
      %1133 = vst.msk [vmem:[#allocation3 + $0x37] sm:$0x1] %vm1120, %v1097
      %1134 = vst.msk [vmem:[#allocation3 + $0x37] sm:$0xfe] %vm1118, %v1099
      %1135 = vst.msk [vmem:[#allocation3 + $0x3f] sm:$0x1] %vm1120, %v1101
      %1137 = vrot.lane.b32.xlu0 %v464, 48
      %v1138 = vpop.permute.xlu0 %1137
      %1139 = vrot.lane.b32.xlu0 %v466, 48
      %v1140 = vpop.permute.xlu0 %1139
      %1141 = vrot.lane.b32.xlu0 %v468, 48
      %v1142 = vpop.permute.xlu0 %1141
      %1143 = vrot.lane.b32.xlu0 %v470, 48
      %v1144 = vpop.permute.xlu0 %1143
      %1145 = vrot.lane.b32.xlu0 %v472, 48
      %v1146 = vpop.permute.xlu0 %1145
      %1147 = vrot.lane.b32.xlu0 %v474, 48
      %v1148 = vpop.permute.xlu0 %1147
      %1149 = vrot.lane.b32.xlu0 %v476, 48
      %v1150 = vpop.permute.xlu0 %1149
      %1151 = vrot.lane.b32.xlu0 %v478, 48
      %v1152 = vpop.permute.xlu0 %1151
      %vm1161 = vcmask 425344
      %1162 = vst.msk [vmem:[#allocation3] sm:$0xff] %vm1161, %v1138
      %1163 = vst.msk [vmem:[#allocation3 + $0x8] sm:$0xff] %vm1161, %v1140
      %1164 = vst.msk [vmem:[#allocation3 + $0x10] sm:$0xff] %vm1161, %v1142
      %1165 = vst.msk [vmem:[#allocation3 + $0x18] sm:$0xff] %vm1161, %v1144
      %1166 = vst.msk [vmem:[#allocation3 + $0x20] sm:$0xff] %vm1161, %v1146
      %1167 = vst.msk [vmem:[#allocation3 + $0x28] sm:$0xff] %vm1161, %v1148
      %1168 = vst.msk [vmem:[#allocation3 + $0x30] sm:$0xff] %vm1161, %v1150
      %1169 = vst.msk [vmem:[#allocation3 + $0x38] sm:$0xff] %vm1161, %v1152
      %1171 = vrot.lane.b32.xlu0 %v482, 52
      %v1172 = vpop.permute.xlu0 %1171
      %1173 = vrot.lane.b32.xlu0 %v484, 52
      %v1174 = vpop.permute.xlu0 %1173
      %1175 = vrot.lane.b32.xlu0 %v486, 52
      %v1176 = vpop.permute.xlu0 %1175
      %1177 = vrot.lane.b32.xlu0 %v488, 52
      %v1178 = vpop.permute.xlu0 %1177
      %1179 = vrot.lane.b32.xlu0 %v490, 52
      %v1180 = vpop.permute.xlu0 %1179
      %1181 = vrot.lane.b32.xlu0 %v492, 52
      %v1182 = vpop.permute.xlu0 %1181
      %1183 = vrot.lane.b32.xlu0 %v494, 52
      %v1184 = vpop.permute.xlu0 %1183
      %1185 = vrot.lane.b32.xlu0 %v496, 52
      %v1186 = vpop.permute.xlu0 %1185
      %vm1195 = vcmask 458144
      %1196 = vst.msk [vmem:[#allocation3] sm:$0xff] %vm1195, %v1172
      %1197 = vst.msk [vmem:[#allocation3 + $0x8] sm:$0xff] %vm1195, %v1174
      %1198 = vst.msk [vmem:[#allocation3 + $0x10] sm:$0xff] %vm1195, %v1176
      %1199 = vst.msk [vmem:[#allocation3 + $0x18] sm:$0xff] %vm1195, %v1178
      %1200 = vst.msk [vmem:[#allocation3 + $0x20] sm:$0xff] %vm1195, %v1180
      %1201 = vst.msk [vmem:[#allocation3 + $0x28] sm:$0xff] %vm1195, %v1182
      %1202 = vst.msk [vmem:[#allocation3 + $0x30] sm:$0xff] %vm1195, %v1184
      %1203 = vst.msk [vmem:[#allocation3 + $0x38] sm:$0xff] %vm1195, %v1186
      %1205 = vrot.lane.b32.xlu0 %v464, 56
      %v1206 = vpop.permute.xlu0 %1205
      %1207 = vrot.lane.b32.xlu0 %v465, 56
      %v1208 = vpop.permute.xlu0 %1207
      %1209 = vrot.lane.b32.xlu0 %v466, 56
      %v1210 = vpop.permute.xlu0 %1209
      %1211 = vrot.lane.b32.xlu0 %v467, 56
      %v1212 = vpop.permute.xlu0 %1211
      %1213 = vrot.lane.b32.xlu0 %v468, 56
      %v1214 = vpop.permute.xlu0 %1213
      %1215 = vrot.lane.b32.xlu0 %v469, 56
      %v1216 = vpop.permute.xlu0 %1215
      %1217 = vrot.lane.b32.xlu0 %v470, 56
      %v1218 = vpop.permute.xlu0 %1217
      %1219 = vrot.lane.b32.xlu0 %v471, 56
      %v1220 = vpop.permute.xlu0 %1219
      %1221 = vrot.lane.b32.xlu0 %v472, 56
      %v1222 = vpop.permute.xlu0 %1221
      %1223 = vrot.lane.b32.xlu0 %v473, 56
      %v1224 = vpop.permute.xlu0 %1223
      %1225 = vrot.lane.b32.xlu0 %v474, 56
      %v1226 = vpop.permute.xlu0 %1225
      %1227 = vrot.lane.b32.xlu0 %v475, 56
      %v1228 = vpop.permute.xlu0 %1227
      %1229 = vrot.lane.b32.xlu0 %v476, 56
      %v1230 = vpop.permute.xlu0 %1229
      %1231 = vrot.lane.b32.xlu0 %v477, 56
      %v1232 = vpop.permute.xlu0 %1231
      %1233 = vrot.lane.b32.xlu0 %v478, 56
      %v1234 = vpop.permute.xlu0 %1233
      %1235 = vrot.lane.b32.xlu0 %v479, 56
      %v1236 = vpop.permute.xlu0 %1235
      %vm1253 = vcmask 490945
      %1254 = vst.msk [vmem:[#allocation3 - $0x1] sm:$0xfe] %vm1253, %v1206
      %vm1255 = vcmask 483776
      %1256 = vst.msk [vmem:[#allocation3 + $0x7] sm:$0x1] %vm1255, %v1208
      %1257 = vst.msk [vmem:[#allocation3 + $0x7] sm:$0xfe] %vm1253, %v1210
      %1258 = vst.msk [vmem:[#allocation3 + $0xf] sm:$0x1] %vm1255, %v1212
      %1259 = vst.msk [vmem:[#allocation3 + $0xf] sm:$0xfe] %vm1253, %v1214
      %1260 = vst.msk [vmem:[#allocation3 + $0x17] sm:$0x1] %vm1255, %v1216
      %1261 = vst.msk [vmem:[#allocation3 + $0x17] sm:$0xfe] %vm1253, %v1218
      %1262 = vst.msk [vmem:[#allocation3 + $0x1f] sm:$0x1] %vm1255, %v1220
      %1263 = vst.msk [vmem:[#allocation3 + $0x1f] sm:$0xfe] %vm1253, %v1222
      %1264 = vst.msk [vmem:[#allocation3 + $0x27] sm:$0x1] %vm1255, %v1224
      %1265 = vst.msk [vmem:[#allocation3 + $0x27] sm:$0xfe] %vm1253, %v1226
      %1266 = vst.msk [vmem:[#allocation3 + $0x2f] sm:$0x1] %vm1255, %v1228
      %1267 = vst.msk [vmem:[#allocation3 + $0x2f] sm:$0xfe] %vm1253, %v1230
      %1268 = vst.msk [vmem:[#allocation3 + $0x37] sm:$0x1] %vm1255, %v1232
      %1269 = vst.msk [vmem:[#allocation3 + $0x37] sm:$0xfe] %vm1253, %v1234
      %1270 = vst.msk [vmem:[#allocation3 + $0x3f] sm:$0x1] %vm1255, %v1236
      %1272 = vrot.lane.b32.xlu0 %v482, 60
      %v1273 = vpop.permute.xlu0 %1272
      %1274 = vrot.lane.b32.xlu0 %v483, 60
      %v1275 = vpop.permute.xlu0 %1274
      %1276 = vrot.lane.b32.xlu0 %v484, 60
      %v1277 = vpop.permute.xlu0 %1276
      %1278 = vrot.lane.b32.xlu0 %v485, 60
      %v1279 = vpop.permute.xlu0 %1278
      %1280 = vrot.lane.b32.xlu0 %v486, 60
      %v1281 = vpop.permute.xlu0 %1280
      %1282 = vrot.lane.b32.xlu0 %v487, 60
      %v1283 = vpop.permute.xlu0 %1282
      %1284 = vrot.lane.b32.xlu0 %v488, 60
      %v1285 = vpop.permute.xlu0 %1284
      %1286 = vrot.lane.b32.xlu0 %v489, 60
      %v1287 = vpop.permute.xlu0 %1286
      %1288 = vrot.lane.b32.xlu0 %v490, 60
      %v1289 = vpop.permute.xlu0 %1288
      %1290 = vrot.lane.b32.xlu0 %v491, 60
      %v1291 = vpop.permute.xlu0 %1290
      %1292 = vrot.lane.b32.xlu0 %v492, 60
      %v1293 = vpop.permute.xlu0 %1292
      %1294 = vrot.lane.b32.xlu0 %v493, 60
      %v1295 = vpop.permute.xlu0 %1294
      %1296 = vrot.lane.b32.xlu0 %v494, 60
      %v1297 = vpop.permute.xlu0 %1296
      %1298 = vrot.lane.b32.xlu0 %v495, 60
      %v1299 = vpop.permute.xlu0 %1298
      %1300 = vrot.lane.b32.xlu0 %v496, 60
      %v1301 = vpop.permute.xlu0 %1300
      %1302 = vrot.lane.b32.xlu0 %v497, 60
      %v1303 = vpop.permute.xlu0 %1302
      %vm1320 = vcmask 523745
      %1321 = vst.msk [vmem:[#allocation3 - $0x1] sm:$0xfe] %vm1320, %v1273
      %vm1322 = vcmask 516576
      %1323 = vst.msk [vmem:[#allocation3 + $0x7] sm:$0x1] %vm1322, %v1275
      %1324 = vst.msk [vmem:[#allocation3 + $0x7] sm:$0xfe] %vm1320, %v1277
      %1325 = vst.msk [vmem:[#allocation3 + $0xf] sm:$0x1] %vm1322, %v1279
      %1326 = vst.msk [vmem:[#allocation3 + $0xf] sm:$0xfe] %vm1320, %v1281
      %1327 = vst.msk [vmem:[#allocation3 + $0x17] sm:$0x1] %vm1322, %v1283
      %1328 = vst.msk [vmem:[#allocation3 + $0x17] sm:$0xfe] %vm1320, %v1285
      %1329 = vst.msk [vmem:[#allocation3 + $0x1f] sm:$0x1] %vm1322, %v1287
      %1330 = vst.msk [vmem:[#allocation3 + $0x1f] sm:$0xfe] %vm1320, %v1289
      %1331 = vst.msk [vmem:[#allocation3 + $0x27] sm:$0x1] %vm1322, %v1291
      %1332 = vst.msk [vmem:[#allocation3 + $0x27] sm:$0xfe] %vm1320, %v1293
      %1333 = vst.msk [vmem:[#allocation3 + $0x2f] sm:$0x1] %vm1322, %v1295
      %1334 = vst.msk [vmem:[#allocation3 + $0x2f] sm:$0xfe] %vm1320, %v1297
      %1335 = vst.msk [vmem:[#allocation3 + $0x37] sm:$0x1] %vm1322, %v1299
      %1336 = vst.msk [vmem:[#allocation3 + $0x37] sm:$0xfe] %vm1320, %v1301
      %1337 = vst.msk [vmem:[#allocation3 + $0x3f] sm:$0x1] %vm1322, %v1303
      %v1338 = vld [vmem:[#allocation3] sm:$0xff]
      %v1339 = vld [vmem:[#allocation3 + $0x8] sm:$0xff]
      %v1340 = vld [vmem:[#allocation3 + $0x10] sm:$0xff]
      %v1341 = vld [vmem:[#allocation3 + $0x18] sm:$0xff]
      %v1342 = vld [vmem:[#allocation3 + $0x20] sm:$0xff]
      %v1343 = vld [vmem:[#allocation3 + $0x28] sm:$0xff]
      %v1344 = vld [vmem:[#allocation3 + $0x30] sm:$0xff]
      %v1345 = vld [vmem:[#allocation3 + $0x38] sm:$0xff]
      %v1346 = vpack.c.bf16 %v1339, %v1338
      %v1347 = vpack.c.bf16 %v1341, %v1340
      %v1348 = vpack.c.bf16 %v1343, %v1342
      %v1349 = vpack.c.bf16 %v1345, %v1344
      %v1350 = vld [vmem:[%s1] sm:$0xf]
      %v1351 = vld [vmem:[%s1 + $0x4] sm:$0xf]
      %v1352 = vld [vmem:[%s1 + $0x8] sm:$0xf]
      %v1353 = vld [vmem:[%s1 + $0xc] sm:$0xf]
      %v1354 = vld [vmem:[%s1 + $0x10] sm:$0xf]
      %v1355 = vld [vmem:[%s1 + $0x14] sm:$0xf]
      %v1356 = vld [vmem:[%s1 + $0x18] sm:$0xf]
      %v1357 = vld [vmem:[%s1 + $0x1c] sm:$0xf]
      %v1366 = vunpack.c.l.b16 %v1350
      %v1367 = vunpack.c.l.b16 %v1351
      %v1368 = vunpack.c.l.b16 %v1352
      %v1369 = vunpack.c.l.b16 %v1353
      %v1370 = vunpack.c.l.b16 %v1354
      %v1371 = vunpack.c.l.b16 %v1355
      %v1372 = vunpack.c.l.b16 %v1356
      %v1373 = vunpack.c.l.b16 %v1357
      %v1374 = vpack.c.b16 %v1367, %v1366
      %v1375 = vpack.c.b16 %v1369, %v1368
      %v1376 = vpack.c.b16 %v1371, %v1370
      %v1377 = vpack.c.b16 %v1373, %v1372
      %vm1382 = vcmask 523264
      %v1384 = vsel %vm1382, %v1346, 0
      %v1387 = vsel %vm1382, %v1347, 0
      %v1390 = vsel %vm1382, %v1348, 0
      %v1393 = vsel %vm1382, %v1349, 0
      %1395 = vmatprep.subr.bf16.mxu0 0
      %1396 = vmatpush1.bf16.msra.mxu0 %v1374
      %1397 = vmatprep.subr.bf16.mxu0 0
      %1398 = vmatpush1.bf16.msra.mxu0 %v1375
      %1399 = vmatprep.subr.bf16.mxu0 0
      %1400 = vmatpush1.bf16.msra.mxu0 %v1376
      %1401 = vmatprep.subr.bf16.mxu0 0
      %1402 = vmatpush1.bf16.msra.mxu0 %v1377
      %1403 = vmatprep.subr.bf16.mxu0 0
      %1404 = vmatpush1.bf16.msra.mxu0 0
      %1405 = vmatprep.subr.bf16.mxu0 0
      %1406 = vmatpush1.bf16.msra.mxu0 0
      %1407 = vmatprep.subr.bf16.mxu0 0
      %1408 = vmatpush1.bf16.msra.mxu0 0
      %1409 = vmatprep.subr.bf16.mxu0 0
      %1410 = vmatpush1.bf16.msra.mxu0 0
      %1411 = vmatprep.subr.bf16.mxu0 0
      %1412 = vmatpush1.bf16.msra.mxu0 0
      %1413 = vmatprep.subr.bf16.mxu0 0
      %1414 = vmatpush1.bf16.msra.mxu0 0
      %1415 = vmatprep.subr.bf16.mxu0 0
      %1416 = vmatpush1.bf16.msra.mxu0 0
      %1417 = vmatprep.subr.bf16.mxu0 0
      %1418 = vmatpush1.bf16.msra.mxu0 0
      %1419 = vmatprep.subr.bf16.mxu0 0
      %1420 = vmatpush1.bf16.msra.mxu0 0
      %1421 = vmatprep.subr.bf16.mxu0 0
      %1422 = vmatpush1.bf16.msra.mxu0 0
      %1423 = vmatprep.subr.bf16.mxu0 0
      %1424 = vmatpush1.bf16.msra.mxu0 0
      %1425 = vmatprep.subr.bf16.mxu0 0
      %1426 = vmatpush1.bf16.msra.mxu0 0
      %1427 = vmatprep.mubr.bf16.mxu0 0
      %1428 = vmatmul.mubr.bf16.gmra.mrb[0].mxu0 %v1384
      %v1429 = vpop.f32.mrb[0].mxu0
      %v1430 = vadd.f32 0.0, %v1429
      %v1431 = vpop.f32.mrb[0].mxu0
      %v1432 = vpop.f32.mrb[0].mxu0
      %v1433 = vadd.f32 0.0, %v1432
      %v1434 = vpop.f32.mrb[0].mxu0
      %1435 = vmatprep.mubr.bf16.mxu0 0
      %1436 = vmatmul.mubr.bf16.gmra.mrb[0].mxu0 %v1387
      %v1437 = vpop.f32.mrb[0].mxu0
      %v1438 = vadd.f32 0.0, %v1437
      %v1439 = vpop.f32.mrb[0].mxu0
      %v1440 = vpop.f32.mrb[0].mxu0
      %v1441 = vadd.f32 0.0, %v1440
      %v1442 = vpop.f32.mrb[0].mxu0
      %1443 = vmatprep.mubr.bf16.mxu0 0
      %1444 = vmatmul.mubr.bf16.gmra.mrb[0].mxu0 %v1390
      %v1445 = vpop.f32.mrb[0].mxu0
      %v1446 = vadd.f32 0.0, %v1445
      %v1447 = vpop.f32.mrb[0].mxu0
      %v1448 = vpop.f32.mrb[0].mxu0
      %v1449 = vadd.f32 0.0, %v1448
      %v1450 = vpop.f32.mrb[0].mxu0
      %1451 = vmatprep.mubr.bf16.mxu0 0
      %1452 = vmatmul.mubr.bf16.gmra.mrb[0].mxu0 %v1393
      %v1453 = vpop.f32.mrb[0].mxu0
      %v1454 = vadd.f32 0.0, %v1453
      %v1455 = vpop.f32.mrb[0].mxu0
      %v1456 = vpop.f32.mrb[0].mxu0
      %v1457 = vadd.f32 0.0, %v1456
      %v1458 = vpop.f32.mrb[0].mxu0
      %1459 = vdwg.mxu0
      %v1460 = vmax.f32 %v1430, 0.0
      %v1461 = vmax.f32 %v1433, 0.0
      %v1462 = vmax.f32 %v1438, 0.0
      %v1463 = vmax.f32 %v1441, 0.0
      %v1464 = vmax.f32 %v1446, 0.0
      %v1465 = vmax.f32 %v1449, 0.0
      %v1466 = vmax.f32 %v1454, 0.0
      %v1467 = vmax.f32 %v1457, 0.0
      %1468 = vst [vmem:[#allocation2] sm:$0xff] 0.0
      %1469 = vst [vmem:[#allocation2 + $0x8] sm:$0x3] 0.0
      %s1470 = scalar_lea.vmem [#allocation2], 144
      %1471 = vst [vmem:[%s1470] sm:$0xff] 0.0
      %1472 = vst [vmem:[%s1470 + $0x8] sm:$0x3] 0.0
      %1473 = vst [vmem:[#allocation2] sm:$0x1] 0.0
      %1474 = vst [vmem:[#allocation2 + $0x10] sm:$0x1] 0.0
      %1475 = vst [vmem:[#allocation2 + $0x20] sm:$0x1] 0.0
      %1476 = vst [vmem:[#allocation2 + $0x30] sm:$0x1] 0.0
      %1477 = vst [vmem:[#allocation2 + $0x40] sm:$0x1] 0.0
      %1478 = vst [vmem:[#allocation2 + $0x50] sm:$0x1] 0.0
      %1479 = vst [vmem:[#allocation2 + $0x60] sm:$0x1] 0.0
      %1480 = vst [vmem:[#allocation2 + $0x70] sm:$0x1] 0.0
      %1481 = vst [vmem:[#allocation2 + $0x80] sm:$0x1] 0.0
      %1482 = vst [vmem:[#allocation2 + $0x90] sm:$0x1] 0.0
      %1483 = vst [vmem:[#allocation2 + $0x9] sm:$0x1] 0.0
      %1484 = vst [vmem:[#allocation2 + $0x19] sm:$0x1] 0.0
      %1485 = vst [vmem:[#allocation2 + $0x29] sm:$0x1] 0.0
      %1486 = vst [vmem:[#allocation2 + $0x39] sm:$0x1] 0.0
      %1487 = vst [vmem:[#allocation2 + $0x49] sm:$0x1] 0.0
      %1488 = vst [vmem:[#allocation2 + $0x59] sm:$0x1] 0.0
      %1489 = vst [vmem:[#allocation2 + $0x69] sm:$0x1] 0.0
      %1490 = vst [vmem:[#allocation2 + $0x79] sm:$0x1] 0.0
      %1491 = vst [vmem:[#allocation2 + $0x89] sm:$0x1] 0.0
      %1492 = vst [vmem:[#allocation2 + $0x99] sm:$0x1] 0.0
      %s1493 = scalar_lea.vmem [#allocation2], 16
      %1494 = vst [vmem:[%s1493 + $0x1] sm:$0xff] %v1460
      %1495 = vst [vmem:[%s1493 + $0x11] sm:$0xff] %v1461
      %1496 = vst [vmem:[%s1493 + $0x21] sm:$0xff] %v1462
      %1497 = vst [vmem:[%s1493 + $0x31] sm:$0xff] %v1463
      %1498 = vst [vmem:[%s1493 + $0x41] sm:$0xff] %v1464
      %1499 = vst [vmem:[%s1493 + $0x51] sm:$0xff] %v1465
      %1500 = vst [vmem:[%s1493 + $0x61] sm:$0xff] %v1466
      %1501 = vst [vmem:[%s1493 + $0x71] sm:$0xff] %v1467
      %v1502 = vld [vmem:[#allocation2] sm:$0xff]
      %v1503 = vld [vmem:[#allocation2 + $0x10] sm:$0xff]
      %v1504 = vld [vmem:[#allocation2 + $0x20] sm:$0xff]
      %v1505 = vld [vmem:[#allocation2 + $0x30] sm:$0xff]
      %v1506 = vld [vmem:[#allocation2 + $0x40] sm:$0xff]
      %v1507 = vld [vmem:[#allocation2 + $0x50] sm:$0xff]
      %v1508 = vld [vmem:[#allocation2 + $0x60] sm:$0xff]
      %v1509 = vld [vmem:[#allocation2 + $0x70] sm:$0xff]
      %v1510 = vld [vmem:[#allocation2 + $0x1] sm:$0xff]
      %v1511 = vld [vmem:[#allocation2 + $0x11] sm:$0xff]
      %v1512 = vld [vmem:[#allocation2 + $0x21] sm:$0xff]
      %v1513 = vld [vmem:[#allocation2 + $0x31] sm:$0xff]
      %v1514 = vld [vmem:[#allocation2 + $0x41] sm:$0xff]
      %v1515 = vld [vmem:[#allocation2 + $0x51] sm:$0xff]
      %v1516 = vld [vmem:[#allocation2 + $0x61] sm:$0xff]
      %v1517 = vld [vmem:[#allocation2 + $0x71] sm:$0xff]
      %v1518 = vld [vmem:[%s1493] sm:$0xff]
      %v1519 = vld [vmem:[%s1493 + $0x10] sm:$0xff]
      %v1520 = vld [vmem:[%s1493 + $0x20] sm:$0xff]
      %v1521 = vld [vmem:[%s1493 + $0x30] sm:$0xff]
      %v1522 = vld [vmem:[%s1493 + $0x40] sm:$0xff]
      %v1523 = vld [vmem:[%s1493 + $0x50] sm:$0xff]
      %v1524 = vld [vmem:[%s1493 + $0x60] sm:$0xff]
      %v1525 = vld [vmem:[%s1493 + $0x70] sm:$0xff]
      %v1526 = vld [vmem:[%s1493 + $0x1] sm:$0xff]
      %v1527 = vld [vmem:[%s1493 + $0x11] sm:$0xff]
      %v1528 = vld [vmem:[%s1493 + $0x21] sm:$0xff]
      %v1529 = vld [vmem:[%s1493 + $0x31] sm:$0xff]
      %v1530 = vld [vmem:[%s1493 + $0x41] sm:$0xff]
      %v1531 = vld [vmem:[%s1493 + $0x51] sm:$0xff]
      %v1532 = vld [vmem:[%s1493 + $0x61] sm:$0xff]
      %v1533 = vld [vmem:[%s1493 + $0x71] sm:$0xff]
      %v1534 = vpack.c.bf16 %v1503, %v1502
      %v1535 = vpack.c.bf16 %v1511, %v1510
      %v1536 = vpack.c.bf16 %v1519, %v1518
      %v1537 = vpack.c.bf16 %v1527, %v1526
      %v1538 = vpack.c.bf16 %v1505, %v1504
      %v1539 = vpack.c.bf16 %v1513, %v1512
      %v1540 = vpack.c.bf16 %v1521, %v1520
      %v1541 = vpack.c.bf16 %v1529, %v1528
      %v1542 = vpack.c.bf16 %v1507, %v1506
      %v1543 = vpack.c.bf16 %v1515, %v1514
      %v1544 = vpack.c.bf16 %v1523, %v1522
      %v1545 = vpack.c.bf16 %v1531, %v1530
      %v1546 = vpack.c.bf16 %v1509, %v1508
      %v1547 = vpack.c.bf16 %v1517, %v1516
      %v1548 = vpack.c.bf16 %v1525, %v1524
      %v1549 = vpack.c.bf16 %v1533, %v1532
      %v1550 = vld [vmem:[%s2] sm:$0xf]
      %v1551 = vld [vmem:[%s2 + $0x4] sm:$0xf]
      %v1552 = vld [vmem:[%s2 + $0x8] sm:$0xf]
      %v1553 = vld [vmem:[%s2 + $0xc] sm:$0xf]
      %v1554 = vld [vmem:[%s2 + $0x10] sm:$0xf]
      %v1555 = vld [vmem:[%s2 + $0x14] sm:$0xf]
      %v1556 = vld [vmem:[%s2 + $0x18] sm:$0xf]
      %v1557 = vld [vmem:[%s2 + $0x1c] sm:$0xf]
      %v1558 = vld [vmem:[%s2 + $0x20] sm:$0xf]
      %v1559 = vld [vmem:[%s2 + $0x24] sm:$0xf]
      %v1560 = vld [vmem:[%s2 + $0x28] sm:$0xf]
      %v1561 = vld [vmem:[%s2 + $0x2c] sm:$0xf]
      %v1562 = vld [vmem:[%s2 + $0x30] sm:$0xf]
      %v1563 = vld [vmem:[%s2 + $0x34] sm:$0xf]
      %v1564 = vld [vmem:[%s2 + $0x38] sm:$0xf]
      %v1565 = vld [vmem:[%s2 + $0x3c] sm:$0xf]
      %v1566 = vld [vmem:[%s2 + $0x40] sm:$0xf]
      %v1567 = vld [vmem:[%s2 + $0x44] sm:$0xf]
      %v1568 = vld [vmem:[%s2 + $0x48] sm:$0xf]
      %v1569 = vld [vmem:[%s2 + $0x4c] sm:$0xf]
      %v1570 = vld [vmem:[%s2 + $0x50] sm:$0xf]
      %v1571 = vld [vmem:[%s2 + $0x54] sm:$0xf]
      %v1572 = vld [vmem:[%s2 + $0x58] sm:$0xf]
      %v1573 = vld [vmem:[%s2 + $0x5c] sm:$0xf]
      %v1574 = vld [vmem:[%s2 + $0x60] sm:$0xf]
      %v1575 = vld [vmem:[%s2 + $0x64] sm:$0xf]
      %v1576 = vld [vmem:[%s2 + $0x68] sm:$0xf]
      %v1577 = vld [vmem:[%s2 + $0x6c] sm:$0xf]
      %v1578 = vld [vmem:[%s2 + $0x70] sm:$0xf]
      %v1579 = vld [vmem:[%s2 + $0x74] sm:$0xf]
      %v1580 = vld [vmem:[%s2 + $0x78] sm:$0xf]
      %v1581 = vld [vmem:[%s2 + $0x7c] sm:$0xf]
      %v1582 = vld [vmem:[%s2 + $0x80] sm:$0xf]
      %v1583 = vld [vmem:[%s2 + $0x84] sm:$0xf]
      %v1584 = vld [vmem:[%s2 + $0x88] sm:$0xf]
      %v1585 = vld [vmem:[%s2 + $0x8c] sm:$0xf]
      %v1586 = vld [vmem:[%s2 + $0x90] sm:$0xf]
      %v1587 = vld [vmem:[%s2 + $0x94] sm:$0xf]
      %v1588 = vld [vmem:[%s2 + $0x98] sm:$0xf]
      %v1589 = vld [vmem:[%s2 + $0x9c] sm:$0xf]
      %v1590 = vld [vmem:[%s2 + $0xa0] sm:$0xf]
      %v1591 = vld [vmem:[%s2 + $0xa4] sm:$0xf]
      %v1592 = vld [vmem:[%s2 + $0xa8] sm:$0xf]
      %v1593 = vld [vmem:[%s2 + $0xac] sm:$0xf]
      %v1594 = vld [vmem:[%s2 + $0xb0] sm:$0xf]
      %v1595 = vld [vmem:[%s2 + $0xb4] sm:$0xf]
      %v1596 = vld [vmem:[%s2 + $0xb8] sm:$0xf]
      %v1597 = vld [vmem:[%s2 + $0xbc] sm:$0xf]
      %v1598 = vld [vmem:[%s2 + $0xc0] sm:$0xf]
      %v1599 = vld [vmem:[%s2 + $0xc4] sm:$0xf]
      %v1600 = vld [vmem:[%s2 + $0xc8] sm:$0xf]
      %v1601 = vld [vmem:[%s2 + $0xcc] sm:$0xf]
      %v1602 = vld [vmem:[%s2 + $0xd0] sm:$0xf]
      %v1603 = vld [vmem:[%s2 + $0xd4] sm:$0xf]
      %v1604 = vld [vmem:[%s2 + $0xd8] sm:$0xf]
      %v1605 = vld [vmem:[%s2 + $0xdc] sm:$0xf]
      %v1606 = vld [vmem:[%s2 + $0xe0] sm:$0xf]
      %v1607 = vld [vmem:[%s2 + $0xe4] sm:$0xf]
      %v1608 = vld [vmem:[%s2 + $0xe8] sm:$0xf]
      %v1609 = vld [vmem:[%s2 + $0xec] sm:$0xf]
      %v1610 = vld [vmem:[%s2 + $0xf0] sm:$0xf]
      %v1611 = vld [vmem:[%s2 + $0xf4] sm:$0xf]
      %v1612 = vld [vmem:[%s2 + $0xf8] sm:$0xf]
      %v1613 = vld [vmem:[%s2 + $0xfc] sm:$0xf]
      %v1678 = vunpack.c.l.b16 %v1550
      %v1679 = vunpack.c.l.b16 %v1551
      %v1680 = vunpack.c.l.b16 %v1552
      %v1681 = vunpack.c.l.b16 %v1553
      %v1682 = vunpack.c.l.b16 %v1554
      %v1683 = vunpack.c.l.b16 %v1555
      %v1684 = vunpack.c.l.b16 %v1556
      %v1685 = vunpack.c.l.b16 %v1557
      %v1686 = vunpack.c.l.b16 %v1558
      %v1687 = vunpack.c.l.b16 %v1559
      %v1688 = vunpack.c.l.b16 %v1560
      %v1689 = vunpack.c.l.b16 %v1561
      %v1690 = vunpack.c.l.b16 %v1562
      %v1691 = vunpack.c.l.b16 %v1563
      %v1692 = vunpack.c.l.b16 %v1564
      %v1693 = vunpack.c.l.b16 %v1565
      %v1694 = vunpack.c.l.b16 %v1566
      %v1695 = vunpack.c.l.b16 %v1567
      %v1696 = vunpack.c.l.b16 %v1568
      %v1697 = vunpack.c.l.b16 %v1569
      %v1698 = vunpack.c.l.b16 %v1570
      %v1699 = vunpack.c.l.b16 %v1571
      %v1700 = vunpack.c.l.b16 %v1572
      %v1701 = vunpack.c.l.b16 %v1573
      %v1702 = vunpack.c.l.b16 %v1574
      %v1703 = vunpack.c.l.b16 %v1575
      %v1704 = vunpack.c.l.b16 %v1576
      %v1705 = vunpack.c.l.b16 %v1577
      %v1706 = vunpack.c.l.b16 %v1578
      %v1707 = vunpack.c.l.b16 %v1579
      %v1708 = vunpack.c.l.b16 %v1580
      %v1709 = vunpack.c.l.b16 %v1581
      %v1710 = vunpack.c.l.b16 %v1582
      %v1711 = vunpack.c.l.b16 %v1583
      %v1712 = vunpack.c.l.b16 %v1584
      %v1713 = vunpack.c.l.b16 %v1585
      %v1714 = vunpack.c.l.b16 %v1586
      %v1715 = vunpack.c.l.b16 %v1587
      %v1716 = vunpack.c.l.b16 %v1588
      %v1717 = vunpack.c.l.b16 %v1589
      %v1718 = vunpack.c.l.b16 %v1590
      %v1719 = vunpack.c.l.b16 %v1591
      %v1720 = vunpack.c.l.b16 %v1592
      %v1721 = vunpack.c.l.b16 %v1593
      %v1722 = vunpack.c.l.b16 %v1594
      %v1723 = vunpack.c.l.b16 %v1595
      %v1724 = vunpack.c.l.b16 %v1596
      %v1725 = vunpack.c.l.b16 %v1597
      %v1726 = vunpack.c.l.b16 %v1598
      %v1727 = vunpack.c.l.b16 %v1599
      %v1728 = vunpack.c.l.b16 %v1600
      %v1729 = vunpack.c.l.b16 %v1601
      %v1730 = vunpack.c.l.b16 %v1602
      %v1731 = vunpack.c.l.b16 %v1603
      %v1732 = vunpack.c.l.b16 %v1604
      %v1733 = vunpack.c.l.b16 %v1605
      %v1734 = vunpack.c.l.b16 %v1606
      %v1735 = vunpack.c.l.b16 %v1607
      %v1736 = vunpack.c.l.b16 %v1608
      %v1737 = vunpack.c.l.b16 %v1609
      %v1738 = vunpack.c.l.b16 %v1610
      %v1739 = vunpack.c.l.b16 %v1611
      %v1740 = vunpack.c.l.b16 %v1612
      %v1741 = vunpack.c.l.b16 %v1613
      %v1742 = vpack.c.b16 %v1679, %v1678
      %v1743 = vpack.c.b16 %v1681, %v1680
      %v1744 = vpack.c.b16 %v1683, %v1682
      %v1745 = vpack.c.b16 %v1685, %v1684
      %v1746 = vpack.c.b16 %v1687, %v1686
      %v1747 = vpack.c.b16 %v1689, %v1688
      %v1748 = vpack.c.b16 %v1691, %v1690
      %v1749 = vpack.c.b16 %v1693, %v1692
      %v1750 = vpack.c.b16 %v1695, %v1694
      %v1751 = vpack.c.b16 %v1697, %v1696
      %v1752 = vpack.c.b16 %v1699, %v1698
      %v1753 = vpack.c.b16 %v1701, %v1700
      %v1754 = vpack.c.b16 %v1703, %v1702
      %v1755 = vpack.c.b16 %v1705, %v1704
      %v1756 = vpack.c.b16 %v1707, %v1706
      %v1757 = vpack.c.b16 %v1709, %v1708
      %v1758 = vpack.c.b16 %v1711, %v1710
      %v1759 = vpack.c.b16 %v1713, %v1712
      %v1760 = vpack.c.b16 %v1715, %v1714
      %v1761 = vpack.c.b16 %v1717, %v1716
      %v1762 = vpack.c.b16 %v1719, %v1718
      %v1763 = vpack.c.b16 %v1721, %v1720
      %v1764 = vpack.c.b16 %v1723, %v1722
      %v1765 = vpack.c.b16 %v1725, %v1724
      %v1766 = vpack.c.b16 %v1727, %v1726
      %v1767 = vpack.c.b16 %v1729, %v1728
      %v1768 = vpack.c.b16 %v1731, %v1730
      %v1769 = vpack.c.b16 %v1733, %v1732
      %v1770 = vpack.c.b16 %v1735, %v1734
      %v1771 = vpack.c.b16 %v1737, %v1736
      %v1772 = vpack.c.b16 %v1739, %v1738
      %v1773 = vpack.c.b16 %v1741, %v1740
      %1806 = vmatprep.subr.bf16.mxu0 0
      %1807 = vmatpush1.bf16.msra.mxu0 %v1742
      %1808 = vmatprep.subr.bf16.mxu0 0
      %1809 = vmatpush1.bf16.msra.mxu0 %v1743
      %1810 = vmatprep.subr.bf16.mxu0 0
      %1811 = vmatpush1.bf16.msra.mxu0 %v1744
      %1812 = vmatprep.subr.bf16.mxu0 0
      %1813 = vmatpush1.bf16.msra.mxu0 %v1745
      %1814 = vmatprep.subr.bf16.mxu0 0
      %1815 = vmatpush1.bf16.msra.mxu0 %v1746
      %1816 = vmatprep.subr.bf16.mxu0 0
      %1817 = vmatpush1.bf16.msra.mxu0 %v1747
      %1818 = vmatprep.subr.bf16.mxu0 0
      %1819 = vmatpush1.bf16.msra.mxu0 %v1748
      %1820 = vmatprep.subr.bf16.mxu0 0
      %1821 = vmatpush1.bf16.msra.mxu0 %v1749
      %1822 = vmatprep.subr.bf16.mxu0 0
      %1823 = vmatpush1.bf16.msra.mxu0 %v1750
      %1824 = vmatprep.subr.bf16.mxu0 0
      %1825 = vmatpush1.bf16.msra.mxu0 %v1751
      %1826 = vmatprep.subr.bf16.mxu0 0
      %1827 = vmatpush1.bf16.msra.mxu0 %v1752
      %1828 = vmatprep.subr.bf16.mxu0 0
      %1829 = vmatpush1.bf16.msra.mxu0 %v1753
      %1830 = vmatprep.subr.bf16.mxu0 0
      %1831 = vmatpush1.bf16.msra.mxu0 %v1754
      %1832 = vmatprep.subr.bf16.mxu0 0
      %1833 = vmatpush1.bf16.msra.mxu0 %v1755
      %1834 = vmatprep.subr.bf16.mxu0 0
      %1835 = vmatpush1.bf16.msra.mxu0 %v1756
      %1836 = vmatprep.subr.bf16.mxu0 0
      %1837 = vmatpush1.bf16.msra.mxu0 %v1757
      %1838 = vmatprep.mubr.bf16.mxu0 %v1535
      %1839 = vmatmul.mubr.bf16.gmra.mrb[0].mxu0 %v1534
      %v1840 = vpop.f32.mrb[0].mxu0
      %v1841 = vadd.f32 0.0, %v1840
      %v1842 = vpop.f32.mrb[0].mxu0
      %v1843 = vpop.f32.mrb[0].mxu0
      %v1844 = vadd.f32 0.0, %v1843
      %v1845 = vpop.f32.mrb[0].mxu0
      %1846 = vmatprep.mubr.bf16.mxu0 %v1539
      %1847 = vmatmul.mubr.bf16.gmra.mrb[0].mxu0 %v1538
      %v1848 = vpop.f32.mrb[0].mxu0
      %v1849 = vadd.f32 0.0, %v1848
      %v1850 = vpop.f32.mrb[0].mxu0
      %v1851 = vpop.f32.mrb[0].mxu0
      %v1852 = vadd.f32 0.0, %v1851
      %v1853 = vpop.f32.mrb[0].mxu0
      %1854 = vmatprep.mubr.bf16.mxu0 %v1543
      %1855 = vmatmul.mubr.bf16.gmra.mrb[0].mxu0 %v1542
      %v1856 = vpop.f32.mrb[0].mxu0
      %v1857 = vadd.f32 0.0, %v1856
      %v1858 = vpop.f32.mrb[0].mxu0
      %v1859 = vpop.f32.mrb[0].mxu0
      %v1860 = vadd.f32 0.0, %v1859
      %v1861 = vpop.f32.mrb[0].mxu0
      %1862 = vmatprep.mubr.bf16.mxu0 %v1547
      %1863 = vmatmul.mubr.bf16.gmra.mrb[0].mxu0 %v1546
      %v1864 = vpop.f32.mrb[0].mxu0
      %v1865 = vadd.f32 0.0, %v1864
      %v1866 = vpop.f32.mrb[0].mxu0
      %v1867 = vpop.f32.mrb[0].mxu0
      %v1868 = vadd.f32 0.0, %v1867
      %v1869 = vpop.f32.mrb[0].mxu0
      %1870 = vdwg.mxu0
      %1871 = vmatprep.subr.bf16.mxu0 0
      %1872 = vmatpush1.bf16.msra.mxu0 %v1758
      %1873 = vmatprep.subr.bf16.mxu0 0
      %1874 = vmatpush1.bf16.msra.mxu0 %v1759
      %1875 = vmatprep.subr.bf16.mxu0 0
      %1876 = vmatpush1.bf16.msra.mxu0 %v1760
      %1877 = vmatprep.subr.bf16.mxu0 0
      %1878 = vmatpush1.bf16.msra.mxu0 %v1761
      %1879 = vmatprep.subr.bf16.mxu0 0
      %1880 = vmatpush1.bf16.msra.mxu0 %v1762
      %1881 = vmatprep.subr.bf16.mxu0 0
      %1882 = vmatpush1.bf16.msra.mxu0 %v1763
      %1883 = vmatprep.subr.bf16.mxu0 0
      %1884 = vmatpush1.bf16.msra.mxu0 %v1764
      %1885 = vmatprep.subr.bf16.mxu0 0
      %1886 = vmatpush1.bf16.msra.mxu0 %v1765
      %1887 = vmatprep.subr.bf16.mxu0 0
      %1888 = vmatpush1.bf16.msra.mxu0 %v1766
      %1889 = vmatprep.subr.bf16.mxu0 0
      %1890 = vmatpush1.bf16.msra.mxu0 %v1767
      %1891 = vmatprep.subr.bf16.mxu0 0
      %1892 = vmatpush1.bf16.msra.mxu0 %v1768
      %1893 = vmatprep.subr.bf16.mxu0 0
      %1894 = vmatpush1.bf16.msra.mxu0 %v1769
      %1895 = vmatprep.subr.bf16.mxu0 0
      %1896 = vmatpush1.bf16.msra.mxu0 %v1770
      %1897 = vmatprep.subr.bf16.mxu0 0
      %1898 = vmatpush1.bf16.msra.mxu0 %v1771
      %1899 = vmatprep.subr.bf16.mxu0 0
      %1900 = vmatpush1.bf16.msra.mxu0 %v1772
      %1901 = vmatprep.subr.bf16.mxu0 0
      %1902 = vmatpush1.bf16.msra.mxu0 %v1773
      %1903 = vmatprep.mubr.bf16.mxu0 %v1537
      %1904 = vmatmul.mubr.bf16.gmra.mrb[0].mxu0 %v1536
      %v1905 = vpop.f32.mrb[0].mxu0
      %v1906 = vadd.f32 %v1841, %v1905
      %v1907 = vpop.f32.mrb[0].mxu0
      %v1908 = vpop.f32.mrb[0].mxu0
      %v1909 = vadd.f32 %v1844, %v1908
      %v1910 = vpop.f32.mrb[0].mxu0
      %1911 = vmatprep.mubr.bf16.mxu0 %v1541
      %1912 = vmatmul.mubr.bf16.gmra.mrb[0].mxu0 %v1540
      %v1913 = vpop.f32.mrb[0].mxu0
      %v1914 = vadd.f32 %v1849, %v1913
      %v1915 = vpop.f32.mrb[0].mxu0
      %v1916 = vpop.f32.mrb[0].mxu0
      %v1917 = vadd.f32 %v1852, %v1916
      %v1918 = vpop.f32.mrb[0].mxu0
      %1919 = vmatprep.mubr.bf16.mxu0 %v1545
      %1920 = vmatmul.mubr.bf16.gmra.mrb[0].mxu0 %v1544
      %v1921 = vpop.f32.mrb[0].mxu0
      %v1922 = vadd.f32 %v1857, %v1921
      %v1923 = vpop.f32.mrb[0].mxu0
      %v1924 = vpop.f32.mrb[0].mxu0
      %v1925 = vadd.f32 %v1860, %v1924
      %v1926 = vpop.f32.mrb[0].mxu0
      %1927 = vmatprep.mubr.bf16.mxu0 %v1549
      %1928 = vmatmul.mubr.bf16.gmra.mrb[0].mxu0 %v1548
      %v1929 = vpop.f32.mrb[0].mxu0
      %v1930 = vadd.f32 %v1865, %v1929
      %v1931 = vpop.f32.mrb[0].mxu0
      %v1932 = vpop.f32.mrb[0].mxu0
      %v1933 = vadd.f32 %v1868, %v1932
      %v1934 = vpop.f32.mrb[0].mxu0
      %1935 = vdwg.mxu0
      %1936 = vst [vmem:[%s204] sm:$0xff] %v1906
      %1937 = vst [vmem:[%s204 + $0x8] sm:$0xff] %v1909
      %1938 = vst [vmem:[%s204 + $0x10] sm:$0xff] %v1914
      %1939 = vst [vmem:[%s204 + $0x18] sm:$0xff] %v1917
      %1940 = vst [vmem:[%s204 + $0x20] sm:$0xff] %v1922
      %1941 = vst [vmem:[%s204 + $0x28] sm:$0xff] %v1925
      %1942 = vst [vmem:[%s204 + $0x30] sm:$0xff] %v1930
      %1943 = vst [vmem:[%s204 + $0x38] sm:$0xff] %v1933
      %v1944 = vadd.f32 %v1906, %v1909
      %v1945 = vadd.f32 %v1944, %v1914
      %v1946 = vadd.f32 %v1945, %v1917
      %v1947 = vadd.f32 %v1946, %v1922
      %v1948 = vadd.f32 %v1947, %v1925
      %v1949 = vadd.f32 %v1948, %v1930
      %v1950 = vadd.f32 %v1949, %v1933
      %v1951 = vrot.slane %v1950, 4
      %v1952 = vadd.f32 %v1950, %v1951
      %v1953 = vrot.slane %v1952, 2
      %v1954 = vadd.f32 %v1952, %v1953
      %v1955 = vrot.slane %v1954, 1
      %v1956 = vadd.f32 %v1954, %v1955
      %v1957 = vadd.f32 %v1956, 0.0
      %v1958 = vmul.f32 %v1906, %v1906
      %v1959 = vmul.f32 %v1909, %v1909
      %v1960 = vmul.f32 %v1914, %v1914
      %v1961 = vmul.f32 %v1917, %v1917
      %v1962 = vmul.f32 %v1922, %v1922
      %v1963 = vmul.f32 %v1925, %v1925
      %v1964 = vmul.f32 %v1930, %v1930
      %v1965 = vmul.f32 %v1933, %v1933
      %v1966 = vadd.f32 %v1958, %v1959
      %v1967 = vadd.f32 %v1966, %v1960
      %v1968 = vadd.f32 %v1967, %v1961
      %v1969 = vadd.f32 %v1968, %v1962
      %v1970 = vadd.f32 %v1969, %v1963
      %v1971 = vadd.f32 %v1970, %v1964
      %v1972 = vadd.f32 %v1971, %v1965
      %v1973 = vrot.slane %v1972, 4
      %v1974 = vadd.f32 %v1972, %v1973
      %v1975 = vrot.slane %v1974, 2
      %v1976 = vadd.f32 %v1974, %v1975
      %v1977 = vrot.slane %v1976, 1
      %v1978 = vadd.f32 %v1976, %v1977
      %v1979 = vadd.f32 %v1978, 0.0
      %v1980 = vld [vmem:[#allocation2 + $0x1] sm:$0xff]
      %v1981 = vld [vmem:[#allocation2 + $0x11] sm:$0xff]
      %v1982 = vld [vmem:[#allocation2 + $0x21] sm:$0xff]
      %v1983 = vld [vmem:[#allocation2 + $0x31] sm:$0xff]
      %v1984 = vld [vmem:[#allocation2 + $0x41] sm:$0xff]
      %v1985 = vld [vmem:[#allocation2 + $0x51] sm:$0xff]
      %v1986 = vld [vmem:[#allocation2 + $0x61] sm:$0xff]
      %v1987 = vld [vmem:[#allocation2 + $0x71] sm:$0xff]
      %v1988 = vld [vmem:[#allocation2 + $0x2] sm:$0xff]
      %v1989 = vld [vmem:[#allocation2 + $0x12] sm:$0xff]
      %v1990 = vld [vmem:[#allocation2 + $0x22] sm:$0xff]
      %v1991 = vld [vmem:[#allocation2 + $0x32] sm:$0xff]
      %v1992 = vld [vmem:[#allocation2 + $0x42] sm:$0xff]
      %v1993 = vld [vmem:[#allocation2 + $0x52] sm:$0xff]
      %v1994 = vld [vmem:[#allocation2 + $0x62] sm:$0xff]
      %v1995 = vld [vmem:[#allocation2 + $0x72] sm:$0xff]
      %v1996 = vld [vmem:[%s1493 + $0x1] sm:$0xff]
      %v1997 = vld [vmem:[%s1493 + $0x11] sm:$0xff]
      %v1998 = vld [vmem:[%s1493 + $0x21] sm:$0xff]
      %v1999 = vld [vmem:[%s1493 + $0x31] sm:$0xff]
      %v2000 = vld [vmem:[%s1493 + $0x41] sm:$0xff]
      %v2001 = vld [vmem:[%s1493 + $0x51] sm:$0xff]
      %v2002 = vld [vmem:[%s1493 + $0x61] sm:$0xff]
      %v2003 = vld [vmem:[%s1493 + $0x71] sm:$0xff]
      %v2004 = vld [vmem:[%s1493 + $0x2] sm:$0xff]
      %v2005 = vld [vmem:[%s1493 + $0x12] sm:$0xff]
      %v2006 = vld [vmem:[%s1493 + $0x22] sm:$0xff]
      %v2007 = vld [vmem:[%s1493 + $0x32] sm:$0xff]
      %v2008 = vld [vmem:[%s1493 + $0x42] sm:$0xff]
      %v2009 = vld [vmem:[%s1493 + $0x52] sm:$0xff]
      %v2010 = vld [vmem:[%s1493 + $0x62] sm:$0xff]
      %v2011 = vld [vmem:[%s1493 + $0x72] sm:$0xff]
      %v2012 = vpack.c.bf16 %v1981, %v1980
      %v2013 = vpack.c.bf16 %v1989, %v1988
      %v2014 = vpack.c.bf16 %v1997, %v1996
      %v2015 = vpack.c.bf16 %v2005, %v2004
      %v2016 = vpack.c.bf16 %v1983, %v1982
      %v2017 = vpack.c.bf16 %v1991, %v1990
      %v2018 = vpack.c.bf16 %v1999, %v1998
      %v2019 = vpack.c.bf16 %v2007, %v2006
      %v2020 = vpack.c.bf16 %v1985, %v1984
      %v2021 = vpack.c.bf16 %v1993, %v1992
      %v2022 = vpack.c.bf16 %v2001, %v2000
      %v2023 = vpack.c.bf16 %v2009, %v2008
      %v2024 = vpack.c.bf16 %v1987, %v1986
      %v2025 = vpack.c.bf16 %v1995, %v1994
      %v2026 = vpack.c.bf16 %v2003, %v2002
      %v2027 = vpack.c.bf16 %v2011, %v2010
      %s2028 = scalar_lea.vmem %s2, 256
      %v2029 = vld [vmem:[%s2028] sm:$0xf]
      %v2030 = vld [vmem:[%s2028 + $0x4] sm:$0xf]
      %v2031 = vld [vmem:[%s2028 + $0x8] sm:$0xf]
      %v2032 = vld [vmem:[%s2028 + $0xc] sm:$0xf]
      %v2033 = vld [vmem:[%s2028 + $0x10] sm:$0xf]
      %v2034 = vld [vmem:[%s2028 + $0x14] sm:$0xf]
      %v2035 = vld [vmem:[%s2028 + $0x18] sm:$0xf]
      %v2036 = vld [vmem:[%s2028 + $0x1c] sm:$0xf]
      %v2037 = vld [vmem:[%s2028 + $0x20] sm:$0xf]
      %v2038 = vld [vmem:[%s2028 + $0x24] sm:$0xf]
      %v2039 = vld [vmem:[%s2028 + $0x28] sm:$0xf]
      %v2040 = vld [vmem:[%s2028 + $0x2c] sm:$0xf]
      %v2041 = vld [vmem:[%s2028 + $0x30] sm:$0xf]
      %v2042 = vld [vmem:[%s2028 + $0x34] sm:$0xf]
      %v2043 = vld [vmem:[%s2028 + $0x38] sm:$0xf]
      %v2044 = vld [vmem:[%s2028 + $0x3c] sm:$0xf]
      %v2045 = vld [vmem:[%s2028 + $0x40] sm:$0xf]
      %v2046 = vld [vmem:[%s2028 + $0x44] sm:$0xf]
      %v2047 = vld [vmem:[%s2028 + $0x48] sm:$0xf]
      %v2048 = vld [vmem:[%s2028 + $0x4c] sm:$0xf]
      %v2049 = vld [vmem:[%s2028 + $0x50] sm:$0xf]
      %v2050 = vld [vmem:[%s2028 + $0x54] sm:$0xf]
      %v2051 = vld [vmem:[%s2028 + $0x58] sm:$0xf]
      %v2052 = vld [vmem:[%s2028 + $0x5c] sm:$0xf]
      %v2053 = vld [vmem:[%s2028 + $0x60] sm:$0xf]
      %v2054 = vld [vmem:[%s2028 + $0x64] sm:$0xf]
      %v2055 = vld [vmem:[%s2028 + $0x68] sm:$0xf]
      %v2056 = vld [vmem:[%s2028 + $0x6c] sm:$0xf]
      %v2057 = vld [vmem:[%s2028 + $0x70] sm:$0xf]
      %v2058 = vld [vmem:[%s2028 + $0x74] sm:$0xf]
      %v2059 = vld [vmem:[%s2028 + $0x78] sm:$0xf]
      %v2060 = vld [vmem:[%s2028 + $0x7c] sm:$0xf]
      %v2061 = vld [vmem:[%s2028 + $0x80] sm:$0xf]
      %v2062 = vld [vmem:[%s2028 + $0x84] sm:$0xf]
      %v2063 = vld [vmem:[%s2028 + $0x88] sm:$0xf]
      %v2064 = vld [vmem:[%s2028 + $0x8c] sm:$0xf]
      %v2065 = vld [vmem:[%s2028 + $0x90] sm:$0xf]
      %v2066 = vld [vmem:[%s2028 + $0x94] sm:$0xf]
      %v2067 = vld [vmem:[%s2028 + $0x98] sm:$0xf]
      %v2068 = vld [vmem:[%s2028 + $0x9c] sm:$0xf]
      %v2069 = vld [vmem:[%s2028 + $0xa0] sm:$0xf]
      %v2070 = vld [vmem:[%s2028 + $0xa4] sm:$0xf]
      %v2071 = vld [vmem:[%s2028 + $0xa8] sm:$0xf]
      %v2072 = vld [vmem:[%s2028 + $0xac] sm:$0xf]
      %v2073 = vld [vmem:[%s2028 + $0xb0] sm:$0xf]
      %v2074 = vld [vmem:[%s2028 + $0xb4] sm:$0xf]
      %v2075 = vld [vmem:[%s2028 + $0xb8] sm:$0xf]
      %v2076 = vld [vmem:[%s2028 + $0xbc] sm:$0xf]
      %v2077 = vld [vmem:[%s2028 + $0xc0] sm:$0xf]
      %v2078 = vld [vmem:[%s2028 + $0xc4] sm:$0xf]
      %v2079 = vld [vmem:[%s2028 + $0xc8] sm:$0xf]
      %v2080 = vld [vmem:[%s2028 + $0xcc] sm:$0xf]
      %v2081 = vld [vmem:[%s2028 + $0xd0] sm:$0xf]
      %v2082 = vld [vmem:[%s2028 + $0xd4] sm:$0xf]
      %v2083 = vld [vmem:[%s2028 + $0xd8] sm:$0xf]
      %v2084 = vld [vmem:[%s2028 + $0xdc] sm:$0xf]
      %v2085 = vld [vmem:[%s2028 + $0xe0] sm:$0xf]
      %v2086 = vld [vmem:[%s2028 + $0xe4] sm:$0xf]
      %v2087 = vld [vmem:[%s2028 + $0xe8] sm:$0xf]
      %v2088 = vld [vmem:[%s2028 + $0xec] sm:$0xf]
      %v2089 = vld [vmem:[%s2028 + $0xf0] sm:$0xf]
      %v2090 = vld [vmem:[%s2028 + $0xf4] sm:$0xf]
      %v2091 = vld [vmem:[%s2028 + $0xf8] sm:$0xf]
      %v2092 = vld [vmem:[%s2028 + $0xfc] sm:$0xf]
      %v2157 = vunpack.c.l.b16 %v2029
      %v2158 = vunpack.c.l.b16 %v2030
      %v2159 = vunpack.c.l.b16 %v2031
      %v2160 = vunpack.c.l.b16 %v2032
      %v2161 = vunpack.c.l.b16 %v2033
      %v2162 = vunpack.c.l.b16 %v2034
      %v2163 = vunpack.c.l.b16 %v2035
      %v2164 = vunpack.c.l.b16 %v2036
      %v2165 = vunpack.c.l.b16 %v2037
      %v2166 = vunpack.c.l.b16 %v2038
      %v2167 = vunpack.c.l.b16 %v2039
      %v2168 = vunpack.c.l.b16 %v2040
      %v2169 = vunpack.c.l.b16 %v2041
      %v2170 = vunpack.c.l.b16 %v2042
      %v2171 = vunpack.c.l.b16 %v2043
      %v2172 = vunpack.c.l.b16 %v2044
      %v2173 = vunpack.c.l.b16 %v2045
      %v2174 = vunpack.c.l.b16 %v2046
      %v2175 = vunpack.c.l.b16 %v2047
      %v2176 = vunpack.c.l.b16 %v2048
      %v2177 = vunpack.c.l.b16 %v2049
      %v2178 = vunpack.c.l.b16 %v2050
      %v2179 = vunpack.c.l.b16 %v2051
      %v2180 = vunpack.c.l.b16 %v2052
      %v2181 = vunpack.c.l.b16 %v2053
      %v2182 = vunpack.c.l.b16 %v2054
      %v2183 = vunpack.c.l.b16 %v2055
      %v2184 = vunpack.c.l.b16 %v2056
      %v2185 = vunpack.c.l.b16 %v2057
      %v2186 = vunpack.c.l.b16 %v2058
      %v2187 = vunpack.c.l.b16 %v2059
      %v2188 = vunpack.c.l.b16 %v2060
      %v2189 = vunpack.c.l.b16 %v2061
      %v2190 = vunpack.c.l.b16 %v2062
      %v2191 = vunpack.c.l.b16 %v2063
      %v2192 = vunpack.c.l.b16 %v2064
      %v2193 = vunpack.c.l.b16 %v2065
      %v2194 = vunpack.c.l.b16 %v2066
      %v2195 = vunpack.c.l.b16 %v2067
      %v2196 = vunpack.c.l.b16 %v2068
      %v2197 = vunpack.c.l.b16 %v2069
      %v2198 = vunpack.c.l.b16 %v2070
      %v2199 = vunpack.c.l.b16 %v2071
      %v2200 = vunpack.c.l.b16 %v2072
      %v2201 = vunpack.c.l.b16 %v2073
      %v2202 = vunpack.c.l.b16 %v2074
      %v2203 = vunpack.c.l.b16 %v2075
      %v2204 = vunpack.c.l.b16 %v2076
      %v2205 = vunpack.c.l.b16 %v2077
      %v2206 = vunpack.c.l.b16 %v2078
      %v2207 = vunpack.c.l.b16 %v2079
      %v2208 = vunpack.c.l.b16 %v2080
      %v2209 = vunpack.c.l.b16 %v2081
      %v2210 = vunpack.c.l.b16 %v2082
      %v2211 = vunpack.c.l.b16 %v2083
      %v2212 = vunpack.c.l.b16 %v2084
      %v2213 = vunpack.c.l.b16 %v2085
      %v2214 = vunpack.c.l.b16 %v2086
      %v2215 = vunpack.c.l.b16 %v2087
      %v2216 = vunpack.c.l.b16 %v2088
      %v2217 = vunpack.c.l.b16 %v2089
      %v2218 = vunpack.c.l.b16 %v2090
      %v2219 = vunpack.c.l.b16 %v2091
      %v2220 = vunpack.c.l.b16 %v2092
      %v2221 = vpack.c.b16 %v2158, %v2157
      %v2222 = vpack.c.b16 %v2160, %v2159
      %v2223 = vpack.c.b16 %v2162, %v2161
      %v2224 = vpack.c.b16 %v2164, %v2163
      %v2225 = vpack.c.b16 %v2166, %v2165
      %v2226 = vpack.c.b16 %v2168, %v2167
      %v2227 = vpack.c.b16 %v2170, %v2169
      %v2228 = vpack.c.b16 %v2172, %v2171
      %v2229 = vpack.c.b16 %v2174, %v2173
      %v2230 = vpack.c.b16 %v2176, %v2175
      %v2231 = vpack.c.b16 %v2178, %v2177
      %v2232 = vpack.c.b16 %v2180, %v2179
      %v2233 = vpack.c.b16 %v2182, %v2181
      %v2234 = vpack.c.b16 %v2184, %v2183
      %v2235 = vpack.c.b16 %v2186, %v2185
      %v2236 = vpack.c.b16 %v2188, %v2187
      %v2237 = vpack.c.b16 %v2190, %v2189
      %v2238 = vpack.c.b16 %v2192, %v2191
      %v2239 = vpack.c.b16 %v2194, %v2193
      %v2240 = vpack.c.b16 %v2196, %v2195
      %v2241 = vpack.c.b16 %v2198, %v2197
      %v2242 = vpack.c.b16 %v2200, %v2199
      %v2243 = vpack.c.b16 %v2202, %v2201
      %v2244 = vpack.c.b16 %v2204, %v2203
      %v2245 = vpack.c.b16 %v2206, %v2205
      %v2246 = vpack.c.b16 %v2208, %v2207
      %v2247 = vpack.c.b16 %v2210, %v2209
      %v2248 = vpack.c.b16 %v2212, %v2211
      %v2249 = vpack.c.b16 %v2214, %v2213
      %v2250 = vpack.c.b16 %v2216, %v2215
      %v2251 = vpack.c.b16 %v2218, %v2217
      %v2252 = vpack.c.b16 %v2220, %v2219
      %2285 = vmatprep.subr.bf16.mxu0 0
      %2286 = vmatpush1.bf16.msra.mxu0 %v2221
      %2287 = vmatprep.subr.bf16.mxu0 0
      %2288 = vmatpush1.bf16.msra.mxu0 %v2222
      %2289 = vmatprep.subr.bf16.mxu0 0
      %2290 = vmatpush1.bf16.msra.mxu0 %v2223
      %2291 = vmatprep.subr.bf16.mxu0 0
      %2292 = vmatpush1.bf16.msra.mxu0 %v2224
      %2293 = vmatprep.subr.bf16.mxu0 0
      %2294 = vmatpush1.bf16.msra.mxu0 %v2225
      %2295 = vmatprep.subr.bf16.mxu0 0
      %2296 = vmatpush1.bf16.msra.mxu0 %v2226
      %2297 = vmatprep.subr.bf16.mxu0 0
      %2298 = vmatpush1.bf16.msra.mxu0 %v2227
      %2299 = vmatprep.subr.bf16.mxu0 0
      %2300 = vmatpush1.bf16.msra.mxu0 %v2228
      %2301 = vmatprep.subr.bf16.mxu0 0
      %2302 = vmatpush1.bf16.msra.mxu0 %v2229
      %2303 = vmatprep.subr.bf16.mxu0 0
      %2304 = vmatpush1.bf16.msra.mxu0 %v2230
      %2305 = vmatprep.subr.bf16.mxu0 0
      %2306 = vmatpush1.bf16.msra.mxu0 %v2231
      %2307 = vmatprep.subr.bf16.mxu0 0
      %2308 = vmatpush1.bf16.msra.mxu0 %v2232
      %2309 = vmatprep.subr.bf16.mxu0 0
      %2310 = vmatpush1.bf16.msra.mxu0 %v2233
      %2311 = vmatprep.subr.bf16.mxu0 0
      %2312 = vmatpush1.bf16.msra.mxu0 %v2234
      %2313 = vmatprep.subr.bf16.mxu0 0
      %2314 = vmatpush1.bf16.msra.mxu0 %v2235
      %2315 = vmatprep.subr.bf16.mxu0 0
      %2316 = vmatpush1.bf16.msra.mxu0 %v2236
      %2317 = vmatprep.mubr.bf16.mxu0 %v2013
      %2318 = vmatmul.mubr.bf16.gmra.mrb[0].mxu0 %v2012
      %v2319 = vpop.f32.mrb[0].mxu0
      %v2320 = vadd.f32 0.0, %v2319
      %v2321 = vpop.f32.mrb[0].mxu0
      %v2322 = vpop.f32.mrb[0].mxu0
      %v2323 = vadd.f32 0.0, %v2322
      %v2324 = vpop.f32.mrb[0].mxu0
      %2325 = vmatprep.mubr.bf16.mxu0 %v2017
      %2326 = vmatmul.mubr.bf16.gmra.mrb[0].mxu0 %v2016
      %v2327 = vpop.f32.mrb[0].mxu0
      %v2328 = vadd.f32 0.0, %v2327
      %v2329 = vpop.f32.mrb[0].mxu0
      %v2330 = vpop.f32.mrb[0].mxu0
      %v2331 = vadd.f32 0.0, %v2330
      %v2332 = vpop.f32.mrb[0].mxu0
      %2333 = vmatprep.mubr.bf16.mxu0 %v2021
      %2334 = vmatmul.mubr.bf16.gmra.mrb[0].mxu0 %v2020
      %v2335 = vpop.f32.mrb[0].mxu0
      %v2336 = vadd.f32 0.0, %v2335
      %v2337 = vpop.f32.mrb[0].mxu0
      %v2338 = vpop.f32.mrb[0].mxu0
      %v2339 = vadd.f32 0.0, %v2338
      %v2340 = vpop.f32.mrb[0].mxu0
      %2341 = vmatprep.mubr.bf16.mxu0 %v2025
      %2342 = vmatmul.mubr.bf16.gmra.mrb[0].mxu0 %v2024
      %v2343 = vpop.f32.mrb[0].mxu0
      %v2344 = vadd.f32 0.0, %v2343
      %v2345 = vpop.f32.mrb[0].mxu0
      %v2346 = vpop.f32.mrb[0].mxu0
      %v2347 = vadd.f32 0.0, %v2346
      %v2348 = vpop.f32.mrb[0].mxu0
      %2349 = vdwg.mxu0
      %2350 = vmatprep.subr.bf16.mxu0 0
      %2351 = vmatpush1.bf16.msra.mxu0 %v2237
      %2352 = vmatprep.subr.bf16.mxu0 0
      %2353 = vmatpush1.bf16.msra.mxu0 %v2238
      %2354 = vmatprep.subr.bf16.mxu0 0
      %2355 = vmatpush1.bf16.msra.mxu0 %v2239
      %2356 = vmatprep.subr.bf16.mxu0 0
      %2357 = vmatpush1.bf16.msra.mxu0 %v2240
      %2358 = vmatprep.subr.bf16.mxu0 0
      %2359 = vmatpush1.bf16.msra.mxu0 %v2241
      %2360 = vmatprep.subr.bf16.mxu0 0
      %2361 = vmatpush1.bf16.msra.mxu0 %v2242
      %2362 = vmatprep.subr.bf16.mxu0 0
      %2363 = vmatpush1.bf16.msra.mxu0 %v2243
      %2364 = vmatprep.subr.bf16.mxu0 0
      %2365 = vmatpush1.bf16.msra.mxu0 %v2244
      %2366 = vmatprep.subr.bf16.mxu0 0
      %2367 = vmatpush1.bf16.msra.mxu0 %v2245
      %2368 = vmatprep.subr.bf16.mxu0 0
      %2369 = vmatpush1.bf16.msra.mxu0 %v2246
      %2370 = vmatprep.subr.bf16.mxu0 0
      %2371 = vmatpush1.bf16.msra.mxu0 %v2247
      %2372 = vmatprep.subr.bf16.mxu0 0
      %2373 = vmatpush1.bf16.msra.mxu0 %v2248
      %2374 = vmatprep.subr.bf16.mxu0 0
      %2375 = vmatpush1.bf16.msra.mxu0 %v2249
      %2376 = vmatprep.subr.bf16.mxu0 0
      %2377 = vmatpush1.bf16.msra.mxu0 %v2250
      %2378 = vmatprep.subr.bf16.mxu0 0
      %2379 = vmatpush1.bf16.msra.mxu0 %v2251
      %2380 = vmatprep.subr.bf16.mxu0 0
      %2381 = vmatpush1.bf16.msra.mxu0 %v2252
      %2382 = vmatprep.mubr.bf16.mxu0 %v2015
      %2383 = vmatmul.mubr.bf16.gmra.mrb[0].mxu0 %v2014
      %v2384 = vpop.f32.mrb[0].mxu0
      %v2385 = vadd.f32 %v2320, %v2384
      %v2386 = vpop.f32.mrb[0].mxu0
      %v2387 = vpop.f32.mrb[0].mxu0
      %v2388 = vadd.f32 %v2323, %v2387
      %v2389 = vpop.f32.mrb[0].mxu0
      %2390 = vmatprep.mubr.bf16.mxu0 %v2019
      %2391 = vmatmul.mubr.bf16.gmra.mrb[0].mxu0 %v2018
      %v2392 = vpop.f32.mrb[0].mxu0
      %v2393 = vadd.f32 %v2328, %v2392
      %v2394 = vpop.f32.mrb[0].mxu0
      %v2395 = vpop.f32.mrb[0].mxu0
      %v2396 = vadd.f32 %v2331, %v2395
      %v2397 = vpop.f32.mrb[0].mxu0
      %2398 = vmatprep.mubr.bf16.mxu0 %v2023
      %2399 = vmatmul.mubr.bf16.gmra.mrb[0].mxu0 %v2022
      %v2400 = vpop.f32.mrb[0].mxu0
      %v2401 = vadd.f32 %v2336, %v2400
      %v2402 = vpop.f32.mrb[0].mxu0
      %v2403 = vpop.f32.mrb[0].mxu0
      %v2404 = vadd.f32 %v2339, %v2403
      %v2405 = vpop.f32.mrb[0].mxu0
      %2406 = vmatprep.mubr.bf16.mxu0 %v2027
      %2407 = vmatmul.mubr.bf16.gmra.mrb[0].mxu0 %v2026
      %v2408 = vpop.f32.mrb[0].mxu0
      %v2409 = vadd.f32 %v2344, %v2408
      %v2410 = vpop.f32.mrb[0].mxu0
      %v2411 = vpop.f32.mrb[0].mxu0
      %v2412 = vadd.f32 %v2347, %v2411
      %v2413 = vpop.f32.mrb[0].mxu0
      %2414 = vdwg.mxu0
      %s2415 = scalar_lea.vmem %s204, 64
      %2416 = vst [vmem:[%s2415] sm:$0xff] %v2385
      %2417 = vst [vmem:[%s2415 + $0x8] sm:$0xff] %v2388
      %2418 = vst [vmem:[%s2415 + $0x10] sm:$0xff] %v2393
      %2419 = vst [vmem:[%s2415 + $0x18] sm:$0xff] %v2396
      %2420 = vst [vmem:[%s2415 + $0x20] sm:$0xff] %v2401
      %2421 = vst [vmem:[%s2415 + $0x28] sm:$0xff] %v2404
      %2422 = vst [vmem:[%s2415 + $0x30] sm:$0xff] %v2409
      %2423 = vst [vmem:[%s2415 + $0x38] sm:$0xff] %v2412
      %v2424 = vadd.f32 %v2385, %v2388
      %v2425 = vadd.f32 %v2424, %v2393
      %v2426 = vadd.f32 %v2425, %v2396
      %v2427 = vadd.f32 %v2426, %v2401
      %v2428 = vadd.f32 %v2427, %v2404
      %v2429 = vadd.f32 %v2428, %v2409
      %v2430 = vadd.f32 %v2429, %v2412
      %v2431 = vrot.slane %v2430, 4
      %v2432 = vadd.f32 %v2430, %v2431
      %v2433 = vrot.slane %v2432, 2
      %v2434 = vadd.f32 %v2432, %v2433
      %v2435 = vrot.slane %v2434, 1
      %v2436 = vadd.f32 %v2434, %v2435
      %v2437 = vadd.f32 %v1957, %v2436
      %v2438 = vmul.f32 %v2385, %v2385
      %v2439 = vmul.f32 %v2388, %v2388
      %v2440 = vmul.f32 %v2393, %v2393
      %v2441 = vmul.f32 %v2396, %v2396
      %v2442 = vmul.f32 %v2401, %v2401
      %v2443 = vmul.f32 %v2404, %v2404
      %v2444 = vmul.f32 %v2409, %v2409
      %v2445 = vmul.f32 %v2412, %v2412
      %v2446 = vadd.f32 %v2438, %v2439
      %v2447 = vadd.f32 %v2446, %v2440
      %v2448 = vadd.f32 %v2447, %v2441
      %v2449 = vadd.f32 %v2448, %v2442
      %v2450 = vadd.f32 %v2449, %v2443
      %v2451 = vadd.f32 %v2450, %v2444
      %v2452 = vadd.f32 %v2451, %v2445
      %v2453 = vrot.slane %v2452, 4
      %v2454 = vadd.f32 %v2452, %v2453
      %v2455 = vrot.slane %v2454, 2
      %v2456 = vadd.f32 %v2454, %v2455
      %v2457 = vrot.slane %v2456, 1
      %v2458 = vadd.f32 %v2456, %v2457
      %v2459 = vadd.f32 %v1979, %v2458
      %v2460 = vld [vmem:[%s1493] sm:$0xff]
      %v2461 = vld [vmem:[%s1493 + $0x10] sm:$0xff]
      %v2462 = vld [vmem:[%s1493 + $0x20] sm:$0xff]
      %v2463 = vld [vmem:[%s1493 + $0x30] sm:$0xff]
      %v2464 = vld [vmem:[%s1493 + $0x40] sm:$0xff]
      %v2465 = vld [vmem:[%s1493 + $0x50] sm:$0xff]
      %v2466 = vld [vmem:[%s1493 + $0x60] sm:$0xff]
      %v2467 = vld [vmem:[%s1493 + $0x70] sm:$0xff]
      %v2468 = vld [vmem:[%s1493 + $0x1] sm:$0xff]
      %v2469 = vld [vmem:[%s1493 + $0x11] sm:$0xff]
      %v2470 = vld [vmem:[%s1493 + $0x21] sm:$0xff]
      %v2471 = vld [vmem:[%s1493 + $0x31] sm:$0xff]
      %v2472 = vld [vmem:[%s1493 + $0x41] sm:$0xff]
      %v2473 = vld [vmem:[%s1493 + $0x51] sm:$0xff]
      %v2474 = vld [vmem:[%s1493 + $0x61] sm:$0xff]
      %v2475 = vld [vmem:[%s1493 + $0x71] sm:$0xff]
      %s2476 = scalar_lea.vmem [#allocation2], 32
      %v2477 = vld [vmem:[%s2476] sm:$0xff]
      %v2478 = vld [vmem:[%s2476 + $0x10] sm:$0xff]
      %v2479 = vld [vmem:[%s2476 + $0x20] sm:$0xff]
      %v2480 = vld [vmem:[%s2476 + $0x30] sm:$0xff]
      %v2481 = vld [vmem:[%s2476 + $0x40] sm:$0xff]
      %v2482 = vld [vmem:[%s2476 + $0x50] sm:$0xff]
      %v2483 = vld [vmem:[%s2476 + $0x60] sm:$0xff]
      %v2484 = vld [vmem:[%s2476 + $0x70] sm:$0xff]
      %v2485 = vld [vmem:[%s2476 + $0x1] sm:$0xff]
      %v2486 = vld [vmem:[%s2476 + $0x11] sm:$0xff]
      %v2487 = vld [vmem:[%s2476 + $0x21] sm:$0xff]
      %v2488 = vld [vmem:[%s2476 + $0x31] sm:$0xff]
      %v2489 = vld [vmem:[%s2476 + $0x41] sm:$0xff]
      %v2490 = vld [vmem:[%s2476 + $0x51] sm:$0xff]
      %v2491 = vld [vmem:[%s2476 + $0x61] sm:$0xff]
      %v2492 = vld [vmem:[%s2476 + $0x71] sm:$0xff]
      %v2493 = vpack.c.bf16 %v2461, %v2460
      %v2494 = vpack.c.bf16 %v2469, %v2468
      %v2495 = vpack.c.bf16 %v2478, %v2477
      %v2496 = vpack.c.bf16 %v2486, %v2485
      %v2497 = vpack.c.bf16 %v2463, %v2462
      %v2498 = vpack.c.bf16 %v2471, %v2470
      %v2499 = vpack.c.bf16 %v2480, %v2479
      %v2500 = vpack.c.bf16 %v2488, %v2487
      %v2501 = vpack.c.bf16 %v2465, %v2464
      %v2502 = vpack.c.bf16 %v2473, %v2472
      %v2503 = vpack.c.bf16 %v2482, %v2481
      %v2504 = vpack.c.bf16 %v2490, %v2489
      %v2505 = vpack.c.bf16 %v2467, %v2466
      %v2506 = vpack.c.bf16 %v2475, %v2474
      %v2507 = vpack.c.bf16 %v2484, %v2483
      %v2508 = vpack.c.bf16 %v2492, %v2491
      %s2509 = scalar_lea.vmem %s2, 512
      %v2510 = vld [vmem:[%s2509] sm:$0xf]
      %v2511 = vld [vmem:[%s2509 + $0x4] sm:$0xf]
      %v2512 = vld [vmem:[%s2509 + $0x8] sm:$0xf]
      %v2513 = vld [vmem:[%s2509 + $0xc] sm:$0xf]
      %v2514 = vld [vmem:[%s2509 + $0x10] sm:$0xf]
      %v2515 = vld [vmem:[%s2509 + $0x14] sm:$0xf]
      %v2516 = vld [vmem:[%s2509 + $0x18] sm:$0xf]
      %v2517 = vld [vmem:[%s2509 + $0x1c] sm:$0xf]
      %v2518 = vld [vmem:[%s2509 + $0x20] sm:$0xf]
      %v2519 = vld [vmem:[%s2509 + $0x24] sm:$0xf]
      %v2520 = vld [vmem:[%s2509 + $0x28] sm:$0xf]
      %v2521 = vld [vmem:[%s2509 + $0x2c] sm:$0xf]
      %v2522 = vld [vmem:[%s2509 + $0x30] sm:$0xf]
      %v2523 = vld [vmem:[%s2509 + $0x34] sm:$0xf]
      %v2524 = vld [vmem:[%s2509 + $0x38] sm:$0xf]
      %v2525 = vld [vmem:[%s2509 + $0x3c] sm:$0xf]
      %v2526 = vld [vmem:[%s2509 + $0x40] sm:$0xf]
      %v2527 = vld [vmem:[%s2509 + $0x44] sm:$0xf]
      %v2528 = vld [vmem:[%s2509 + $0x48] sm:$0xf]
      %v2529 = vld [vmem:[%s2509 + $0x4c] sm:$0xf]
      %v2530 = vld [vmem:[%s2509 + $0x50] sm:$0xf]
      %v2531 = vld [vmem:[%s2509 + $0x54] sm:$0xf]
      %v2532 = vld [vmem:[%s2509 + $0x58] sm:$0xf]
      %v2533 = vld [vmem:[%s2509 + $0x5c] sm:$0xf]
      %v2534 = vld [vmem:[%s2509 + $0x60] sm:$0xf]
      %v2535 = vld [vmem:[%s2509 + $0x64] sm:$0xf]
      %v2536 = vld [vmem:[%s2509 + $0x68] sm:$0xf]
      %v2537 = vld [vmem:[%s2509 + $0x6c] sm:$0xf]
      %v2538 = vld [vmem:[%s2509 + $0x70] sm:$0xf]
      %v2539 = vld [vmem:[%s2509 + $0x74] sm:$0xf]
      %v2540 = vld [vmem:[%s2509 + $0x78] sm:$0xf]
      %v2541 = vld [vmem:[%s2509 + $0x7c] sm:$0xf]
      %v2542 = vld [vmem:[%s2509 + $0x80] sm:$0xf]
      %v2543 = vld [vmem:[%s2509 + $0x84] sm:$0xf]
      %v2544 = vld [vmem:[%s2509 + $0x88] sm:$0xf]
      %v2545 = vld [vmem:[%s2509 + $0x8c] sm:$0xf]
      %v2546 = vld [vmem:[%s2509 + $0x90] sm:$0xf]
      %v2547 = vld [vmem:[%s2509 + $0x94] sm:$0xf]
      %v2548 = vld [vmem:[%s2509 + $0x98] sm:$0xf]
      %v2549 = vld [vmem:[%s2509 + $0x9c] sm:$0xf]
      %v2550 = vld [vmem:[%s2509 + $0xa0] sm:$0xf]
      %v2551 = vld [vmem:[%s2509 + $0xa4] sm:$0xf]
      %v2552 = vld [vmem:[%s2509 + $0xa8] sm:$0xf]
      %v2553 = vld [vmem:[%s2509 + $0xac] sm:$0xf]
      %v2554 = vld [vmem:[%s2509 + $0xb0] sm:$0xf]
      %v2555 = vld [vmem:[%s2509 + $0xb4] sm:$0xf]
      %v2556 = vld [vmem:[%s2509 + $0xb8] sm:$0xf]
      %v2557 = vld [vmem:[%s2509 + $0xbc] sm:$0xf]
      %v2558 = vld [vmem:[%s2509 + $0xc0] sm:$0xf]
      %v2559 = vld [vmem:[%s2509 + $0xc4] sm:$0xf]
      %v2560 = vld [vmem:[%s2509 + $0xc8] sm:$0xf]
      %v2561 = vld [vmem:[%s2509 + $0xcc] sm:$0xf]
      %v2562 = vld [vmem:[%s2509 + $0xd0] sm:$0xf]
      %v2563 = vld [vmem:[%s2509 + $0xd4] sm:$0xf]
      %v2564 = vld [vmem:[%s2509 + $0xd8] sm:$0xf]
      %v2565 = vld [vmem:[%s2509 + $0xdc] sm:$0xf]
      %v2566 = vld [vmem:[%s2509 + $0xe0] sm:$0xf]
      %v2567 = vld [vmem:[%s2509 + $0xe4] sm:$0xf]
      %v2568 = vld [vmem:[%s2509 + $0xe8] sm:$0xf]
      %v2569 = vld [vmem:[%s2509 + $0xec] sm:$0xf]
      %v2570 = vld [vmem:[%s2509 + $0xf0] sm:$0xf]
      %v2571 = vld [vmem:[%s2509 + $0xf4] sm:$0xf]
      %v2572 = vld [vmem:[%s2509 + $0xf8] sm:$0xf]
      %v2573 = vld [vmem:[%s2509 + $0xfc] sm:$0xf]
      %v2638 = vunpack.c.l.b16 %v2510
      %v2639 = vunpack.c.l.b16 %v2511
      %v2640 = vunpack.c.l.b16 %v2512
      %v2641 = vunpack.c.l.b16 %v2513
      %v2642 = vunpack.c.l.b16 %v2514
      %v2643 = vunpack.c.l.b16 %v2515
      %v2644 = vunpack.c.l.b16 %v2516
      %v2645 = vunpack.c.l.b16 %v2517
      %v2646 = vunpack.c.l.b16 %v2518
      %v2647 = vunpack.c.l.b16 %v2519
      %v2648 = vunpack.c.l.b16 %v2520
      %v2649 = vunpack.c.l.b16 %v2521
      %v2650 = vunpack.c.l.b16 %v2522
      %v2651 = vunpack.c.l.b16 %v2523
      %v2652 = vunpack.c.l.b16 %v2524
      %v2653 = vunpack.c.l.b16 %v2525
      %v2654 = vunpack.c.l.b16 %v2526
      %v2655 = vunpack.c.l.b16 %v2527
      %v2656 = vunpack.c.l.b16 %v2528
      %v2657 = vunpack.c.l.b16 %v2529
      %v2658 = vunpack.c.l.b16 %v2530
      %v2659 = vunpack.c.l.b16 %v2531
      %v2660 = vunpack.c.l.b16 %v2532
      %v2661 = vunpack.c.l.b16 %v2533
      %v2662 = vunpack.c.l.b16 %v2534
      %v2663 = vunpack.c.l.b16 %v2535
      %v2664 = vunpack.c.l.b16 %v2536
      %v2665 = vunpack.c.l.b16 %v2537
      %v2666 = vunpack.c.l.b16 %v2538
      %v2667 = vunpack.c.l.b16 %v2539
      %v2668 = vunpack.c.l.b16 %v2540
      %v2669 = vunpack.c.l.b16 %v2541
      %v2670 = vunpack.c.l.b16 %v2542
      %v2671 = vunpack.c.l.b16 %v2543
      %v2672 = vunpack.c.l.b16 %v2544
      %v2673 = vunpack.c.l.b16 %v2545
      %v2674 = vunpack.c.l.b16 %v2546
      %v2675 = vunpack.c.l.b16 %v2547
      %v2676 = vunpack.c.l.b16 %v2548
      %v2677 = vunpack.c.l.b16 %v2549
      %v2678 = vunpack.c.l.b16 %v2550
      %v2679 = vunpack.c.l.b16 %v2551
      %v2680 = vunpack.c.l.b16 %v2552
      %v2681 = vunpack.c.l.b16 %v2553
      %v2682 = vunpack.c.l.b16 %v2554
      %v2683 = vunpack.c.l.b16 %v2555
      %v2684 = vunpack.c.l.b16 %v2556
      %v2685 = vunpack.c.l.b16 %v2557
      %v2686 = vunpack.c.l.b16 %v2558
      %v2687 = vunpack.c.l.b16 %v2559
      %v2688 = vunpack.c.l.b16 %v2560
      %v2689 = vunpack.c.l.b16 %v2561
      %v2690 = vunpack.c.l.b16 %v2562
      %v2691 = vunpack.c.l.b16 %v2563
      %v2692 = vunpack.c.l.b16 %v2564
      %v2693 = vunpack.c.l.b16 %v2565
      %v2694 = vunpack.c.l.b16 %v2566
      %v2695 = vunpack.c.l.b16 %v2567
      %v2696 = vunpack.c.l.b16 %v2568
      %v2697 = vunpack.c.l.b16 %v2569
      %v2698 = vunpack.c.l.b16 %v2570
      %v2699 = vunpack.c.l.b16 %v2571
      %v2700 = vunpack.c.l.b16 %v2572
      %v2701 = vunpack.c.l.b16 %v2573
      %v2702 = vpack.c.b16 %v2639, %v2638
      %v2703 = vpack.c.b16 %v2641, %v2640
      %v2704 = vpack.c.b16 %v2643, %v2642
      %v2705 = vpack.c.b16 %v2645, %v2644
      %v2706 = vpack.c.b16 %v2647, %v2646
      %v2707 = vpack.c.b16 %v2649, %v2648
      %v2708 = vpack.c.b16 %v2651, %v2650
      %v2709 = vpack.c.b16 %v2653, %v2652
      %v2710 = vpack.c.b16 %v2655, %v2654
      %v2711 = vpack.c.b16 %v2657, %v2656
      %v2712 = vpack.c.b16 %v2659, %v2658
      %v2713 = vpack.c.b16 %v2661, %v2660
      %v2714 = vpack.c.b16 %v2663, %v2662
      %v2715 = vpack.c.b16 %v2665, %v2664
      %v2716 = vpack.c.b16 %v2667, %v2666
      %v2717 = vpack.c.b16 %v2669, %v2668
      %v2718 = vpack.c.b16 %v2671, %v2670
      %v2719 = vpack.c.b16 %v2673, %v2672
      %v2720 = vpack.c.b16 %v2675, %v2674
      %v2721 = vpack.c.b16 %v2677, %v2676
      %v2722 = vpack.c.b16 %v2679, %v2678
      %v2723 = vpack.c.b16 %v2681, %v2680
      %v2724 = vpack.c.b16 %v2683, %v2682
      %v2725 = vpack.c.b16 %v2685, %v2684
      %v2726 = vpack.c.b16 %v2687, %v2686
      %v2727 = vpack.c.b16 %v2689, %v2688
      %v2728 = vpack.c.b16 %v2691, %v2690
      %v2729 = vpack.c.b16 %v2693, %v2692
      %v2730 = vpack.c.b16 %v2695, %v2694
      %v2731 = vpack.c.b16 %v2697, %v2696
      %v2732 = vpack.c.b16 %v2699, %v2698
      %v2733 = vpack.c.b16 %v2701, %v2700
      %2766 = vmatprep.subr.bf16.mxu0 0
      %2767 = vmatpush1.bf16.msra.mxu0 %v2702
      %2768 = vmatprep.subr.bf16.mxu0 0
      %2769 = vmatpush1.bf16.msra.mxu0 %v2703
      %2770 = vmatprep.subr.bf16.mxu0 0
      %2771 = vmatpush1.bf16.msra.mxu0 %v2704
      %2772 = vmatprep.subr.bf16.mxu0 0
      %2773 = vmatpush1.bf16.msra.mxu0 %v2705
      %2774 = vmatprep.subr.bf16.mxu0 0
      %2775 = vmatpush1.bf16.msra.mxu0 %v2706
      %2776 = vmatprep.subr.bf16.mxu0 0
      %2777 = vmatpush1.bf16.msra.mxu0 %v2707
      %2778 = vmatprep.subr.bf16.mxu0 0
      %2779 = vmatpush1.bf16.msra.mxu0 %v2708
      %2780 = vmatprep.subr.bf16.mxu0 0
      %2781 = vmatpush1.bf16.msra.mxu0 %v2709
      %2782 = vmatprep.subr.bf16.mxu0 0
      %2783 = vmatpush1.bf16.msra.mxu0 %v2710
      %2784 = vmatprep.subr.bf16.mxu0 0
      %2785 = vmatpush1.bf16.msra.mxu0 %v2711
      %2786 = vmatprep.subr.bf16.mxu0 0
      %2787 = vmatpush1.bf16.msra.mxu0 %v2712
      %2788 = vmatprep.subr.bf16.mxu0 0
      %2789 = vmatpush1.bf16.msra.mxu0 %v2713
      %2790 = vmatprep.subr.bf16.mxu0 0
      %2791 = vmatpush1.bf16.msra.mxu0 %v2714
      %2792 = vmatprep.subr.bf16.mxu0 0
      %2793 = vmatpush1.bf16.msra.mxu0 %v2715
      %2794 = vmatprep.subr.bf16.mxu0 0
      %2795 = vmatpush1.bf16.msra.mxu0 %v2716
      %2796 = vmatprep.subr.bf16.mxu0 0
      %2797 = vmatpush1.bf16.msra.mxu0 %v2717
      %2798 = vmatprep.mubr.bf16.mxu0 %v2494
      %2799 = vmatmul.mubr.bf16.gmra.mrb[0].mxu0 %v2493
      %v2800 = vpop.f32.mrb[0].mxu0
      %v2801 = vadd.f32 0.0, %v2800
      %v2802 = vpop.f32.mrb[0].mxu0
      %v2803 = vpop.f32.mrb[0].mxu0
      %v2804 = vadd.f32 0.0, %v2803
      %v2805 = vpop.f32.mrb[0].mxu0
      %2806 = vmatprep.mubr.bf16.mxu0 %v2498
      %2807 = vmatmul.mubr.bf16.gmra.mrb[0].mxu0 %v2497
      %v2808 = vpop.f32.mrb[0].mxu0
      %v2809 = vadd.f32 0.0, %v2808
      %v2810 = vpop.f32.mrb[0].mxu0
      %v2811 = vpop.f32.mrb[0].mxu0
      %v2812 = vadd.f32 0.0, %v2811
      %v2813 = vpop.f32.mrb[0].mxu0
      %2814 = vmatprep.mubr.bf16.mxu0 %v2502
      %2815 = vmatmul.mubr.bf16.gmra.mrb[0].mxu0 %v2501
      %v2816 = vpop.f32.mrb[0].mxu0
      %v2817 = vadd.f32 0.0, %v2816
      %v2818 = vpop.f32.mrb[0].mxu0
      %v2819 = vpop.f32.mrb[0].mxu0
      %v2820 = vadd.f32 0.0, %v2819
      %v2821 = vpop.f32.mrb[0].mxu0
      %2822 = vmatprep.mubr.bf16.mxu0 %v2506
      %2823 = vmatmul.mubr.bf16.gmra.mrb[0].mxu0 %v2505
      %v2824 = vpop.f32.mrb[0].mxu0
      %v2825 = vadd.f32 0.0, %v2824
      %v2826 = vpop.f32.mrb[0].mxu0
      %v2827 = vpop.f32.mrb[0].mxu0
      %v2828 = vadd.f32 0.0, %v2827
      %v2829 = vpop.f32.mrb[0].mxu0
      %2830 = vdwg.mxu0
      %2831 = vmatprep.subr.bf16.mxu0 0
      %2832 = vmatpush1.bf16.msra.mxu0 %v2718
      %2833 = vmatprep.subr.bf16.mxu0 0
      %2834 = vmatpush1.bf16.msra.mxu0 %v2719
      %2835 = vmatprep.subr.bf16.mxu0 0
      %2836 = vmatpush1.bf16.msra.mxu0 %v2720
      %2837 = vmatprep.subr.bf16.mxu0 0
      %2838 = vmatpush1.bf16.msra.mxu0 %v2721
      %2839 = vmatprep.subr.bf16.mxu0 0
      %2840 = vmatpush1.bf16.msra.mxu0 %v2722
      %2841 = vmatprep.subr.bf16.mxu0 0
      %2842 = vmatpush1.bf16.msra.mxu0 %v2723
      %2843 = vmatprep.subr.bf16.mxu0 0
      %2844 = vmatpush1.bf16.msra.mxu0 %v2724
      %2845 = vmatprep.subr.bf16.mxu0 0
      %2846 = vmatpush1.bf16.msra.mxu0 %v2725
      %2847 = vmatprep.subr.bf16.mxu0 0
      %2848 = vmatpush1.bf16.msra.mxu0 %v2726
      %2849 = vmatprep.subr.bf16.mxu0 0
      %2850 = vmatpush1.bf16.msra.mxu0 %v2727
      %2851 = vmatprep.subr.bf16.mxu0 0
      %2852 = vmatpush1.bf16.msra.mxu0 %v2728
      %2853 = vmatprep.subr.bf16.mxu0 0
      %2854 = vmatpush1.bf16.msra.mxu0 %v2729
      %2855 = vmatprep.subr.bf16.mxu0 0
      %2856 = vmatpush1.bf16.msra.mxu0 %v2730
      %2857 = vmatprep.subr.bf16.mxu0 0
      %2858 = vmatpush1.bf16.msra.mxu0 %v2731
      %2859 = vmatprep.subr.bf16.mxu0 0
      %2860 = vmatpush1.bf16.msra.mxu0 %v2732
      %2861 = vmatprep.subr.bf16.mxu0 0
      %2862 = vmatpush1.bf16.msra.mxu0 %v2733
      %2863 = vmatprep.mubr.bf16.mxu0 %v2496
      %2864 = vmatmul.mubr.bf16.gmra.mrb[0].mxu0 %v2495
      %v2865 = vpop.f32.mrb[0].mxu0
      %v2866 = vadd.f32 %v2801, %v2865
      %v2867 = vpop.f32.mrb[0].mxu0
      %v2868 = vpop.f32.mrb[0].mxu0
      %v2869 = vadd.f32 %v2804, %v2868
      %v2870 = vpop.f32.mrb[0].mxu0
      %2871 = vmatprep.mubr.bf16.mxu0 %v2500
      %2872 = vmatmul.mubr.bf16.gmra.mrb[0].mxu0 %v2499
      %v2873 = vpop.f32.mrb[0].mxu0
      %v2874 = vadd.f32 %v2809, %v2873
      %v2875 = vpop.f32.mrb[0].mxu0
      %v2876 = vpop.f32.mrb[0].mxu0
      %v2877 = vadd.f32 %v2812, %v2876
      %v2878 = vpop.f32.mrb[0].mxu0
      %2879 = vmatprep.mubr.bf16.mxu0 %v2504
      %2880 = vmatmul.mubr.bf16.gmra.mrb[0].mxu0 %v2503
      %v2881 = vpop.f32.mrb[0].mxu0
      %v2882 = vadd.f32 %v2817, %v2881
      %v2883 = vpop.f32.mrb[0].mxu0
      %v2884 = vpop.f32.mrb[0].mxu0
      %v2885 = vadd.f32 %v2820, %v2884
      %v2886 = vpop.f32.mrb[0].mxu0
      %2887 = vmatprep.mubr.bf16.mxu0 %v2508
      %2888 = vmatmul.mubr.bf16.gmra.mrb[0].mxu0 %v2507
      %v2889 = vpop.f32.mrb[0].mxu0
      %v2890 = vadd.f32 %v2825, %v2889
      %v2891 = vpop.f32.mrb[0].mxu0
      %v2892 = vpop.f32.mrb[0].mxu0
      %v2893 = vadd.f32 %v2828, %v2892
      %v2894 = vpop.f32.mrb[0].mxu0
      %2895 = vdwg.mxu0
      %s2896 = scalar_lea.vmem %s204, 128
      %2897 = vst [vmem:[%s2896] sm:$0xff] %v2866
      %2898 = vst [vmem:[%s2896 + $0x8] sm:$0xff] %v2869
      %2899 = vst [vmem:[%s2896 + $0x10] sm:$0xff] %v2874
      %2900 = vst [vmem:[%s2896 + $0x18] sm:$0xff] %v2877
      %2901 = vst [vmem:[%s2896 + $0x20] sm:$0xff] %v2882
      %2902 = vst [vmem:[%s2896 + $0x28] sm:$0xff] %v2885
      %2903 = vst [vmem:[%s2896 + $0x30] sm:$0xff] %v2890
      %2904 = vst [vmem:[%s2896 + $0x38] sm:$0xff] %v2893
      %v2905 = vadd.f32 %v2866, %v2869
      %v2906 = vadd.f32 %v2905, %v2874
      %v2907 = vadd.f32 %v2906, %v2877
      %v2908 = vadd.f32 %v2907, %v2882
      %v2909 = vadd.f32 %v2908, %v2885
      %v2910 = vadd.f32 %v2909, %v2890
      %v2911 = vadd.f32 %v2910, %v2893
      %v2912 = vrot.slane %v2911, 4
      %v2913 = vadd.f32 %v2911, %v2912
      %v2914 = vrot.slane %v2913, 2
      %v2915 = vadd.f32 %v2913, %v2914
      %v2916 = vrot.slane %v2915, 1
      %v2917 = vadd.f32 %v2915, %v2916
      %v2918 = vadd.f32 %v2437, %v2917
      %v2919 = vmul.f32 %v2866, %v2866
      %v2920 = vmul.f32 %v2869, %v2869
      %v2921 = vmul.f32 %v2874, %v2874
      %v2922 = vmul.f32 %v2877, %v2877
      %v2923 = vmul.f32 %v2882, %v2882
      %v2924 = vmul.f32 %v2885, %v2885
      %v2925 = vmul.f32 %v2890, %v2890
      %v2926 = vmul.f32 %v2893, %v2893
      %v2927 = vadd.f32 %v2919, %v2920
      %v2928 = vadd.f32 %v2927, %v2921
      %v2929 = vadd.f32 %v2928, %v2922
      %v2930 = vadd.f32 %v2929, %v2923
      %v2931 = vadd.f32 %v2930, %v2924
      %v2932 = vadd.f32 %v2931, %v2925
      %v2933 = vadd.f32 %v2932, %v2926
      %v2934 = vrot.slane %v2933, 4
      %v2935 = vadd.f32 %v2933, %v2934
      %v2936 = vrot.slane %v2935, 2
      %v2937 = vadd.f32 %v2935, %v2936
      %v2938 = vrot.slane %v2937, 1
      %v2939 = vadd.f32 %v2937, %v2938
      %v2940 = vadd.f32 %v2459, %v2939
      %v2941 = vld [vmem:[%s1493 + $0x1] sm:$0xff]
      %v2942 = vld [vmem:[%s1493 + $0x11] sm:$0xff]
      %v2943 = vld [vmem:[%s1493 + $0x21] sm:$0xff]
      %v2944 = vld [vmem:[%s1493 + $0x31] sm:$0xff]
      %v2945 = vld [vmem:[%s1493 + $0x41] sm:$0xff]
      %v2946 = vld [vmem:[%s1493 + $0x51] sm:$0xff]
      %v2947 = vld [vmem:[%s1493 + $0x61] sm:$0xff]
      %v2948 = vld [vmem:[%s1493 + $0x71] sm:$0xff]
      %v2949 = vld [vmem:[%s1493 + $0x2] sm:$0xff]
      %v2950 = vld [vmem:[%s1493 + $0x12] sm:$0xff]
      %v2951 = vld [vmem:[%s1493 + $0x22] sm:$0xff]
      %v2952 = vld [vmem:[%s1493 + $0x32] sm:$0xff]
      %v2953 = vld [vmem:[%s1493 + $0x42] sm:$0xff]
      %v2954 = vld [vmem:[%s1493 + $0x52] sm:$0xff]
      %v2955 = vld [vmem:[%s1493 + $0x62] sm:$0xff]
      %v2956 = vld [vmem:[%s1493 + $0x72] sm:$0xff]
      %v2957 = vld [vmem:[%s2476 + $0x1] sm:$0xff]
      %v2958 = vld [vmem:[%s2476 + $0x11] sm:$0xff]
      %v2959 = vld [vmem:[%s2476 + $0x21] sm:$0xff]
      %v2960 = vld [vmem:[%s2476 + $0x31] sm:$0xff]
      %v2961 = vld [vmem:[%s2476 + $0x41] sm:$0xff]
      %v2962 = vld [vmem:[%s2476 + $0x51] sm:$0xff]
      %v2963 = vld [vmem:[%s2476 + $0x61] sm:$0xff]
      %v2964 = vld [vmem:[%s2476 + $0x71] sm:$0xff]
      %v2965 = vld [vmem:[%s2476 + $0x2] sm:$0xff]
      %v2966 = vld [vmem:[%s2476 + $0x12] sm:$0xff]
      %v2967 = vld [vmem:[%s2476 + $0x22] sm:$0xff]
      %v2968 = vld [vmem:[%s2476 + $0x32] sm:$0xff]
      %v2969 = vld [vmem:[%s2476 + $0x42] sm:$0xff]
      %v2970 = vld [vmem:[%s2476 + $0x52] sm:$0xff]
      %v2971 = vld [vmem:[%s2476 + $0x62] sm:$0xff]
      %v2972 = vld [vmem:[%s2476 + $0x72] sm:$0xff]
      %v2973 = vpack.c.bf16 %v2942, %v2941
      %v2974 = vpack.c.bf16 %v2950, %v2949
      %v2975 = vpack.c.bf16 %v2958, %v2957
      %v2976 = vpack.c.bf16 %v2966, %v2965
      %v2977 = vpack.c.bf16 %v2944, %v2943
      %v2978 = vpack.c.bf16 %v2952, %v2951
      %v2979 = vpack.c.bf16 %v2960, %v2959
      %v2980 = vpack.c.bf16 %v2968, %v2967
      %v2981 = vpack.c.bf16 %v2946, %v2945
      %v2982 = vpack.c.bf16 %v2954, %v2953
      %v2983 = vpack.c.bf16 %v2962, %v2961
      %v2984 = vpack.c.bf16 %v2970, %v2969
      %v2985 = vpack.c.bf16 %v2948, %v2947
      %v2986 = vpack.c.bf16 %v2956, %v2955
      %v2987 = vpack.c.bf16 %v2964, %v2963
      %v2988 = vpack.c.bf16 %v2972, %v2971
      %s2989 = scalar_lea.vmem %s2, 768
      %v2990 = vld [vmem:[%s2989] sm:$0xf]
      %v2991 = vld [vmem:[%s2989 + $0x4] sm:$0xf]
      %v2992 = vld [vmem:[%s2989 + $0x8] sm:$0xf]
      %v2993 = vld [vmem:[%s2989 + $0xc] sm:$0xf]
      %v2994 = vld [vmem:[%s2989 + $0x10] sm:$0xf]
      %v2995 = vld [vmem:[%s2989 + $0x14] sm:$0xf]
      %v2996 = vld [vmem:[%s2989 + $0x18] sm:$0xf]
      %v2997 = vld [vmem:[%s2989 + $0x1c] sm:$0xf]
      %v2998 = vld [vmem:[%s2989 + $0x20] sm:$0xf]
      %v2999 = vld [vmem:[%s2989 + $0x24] sm:$0xf]
      %v3000 = vld [vmem:[%s2989 + $0x28] sm:$0xf]
      %v3001 = vld [vmem:[%s2989 + $0x2c] sm:$0xf]
      %v3002 = vld [vmem:[%s2989 + $0x30] sm:$0xf]
      %v3003 = vld [vmem:[%s2989 + $0x34] sm:$0xf]
      %v3004 = vld [vmem:[%s2989 + $0x38] sm:$0xf]
      %v3005 = vld [vmem:[%s2989 + $0x3c] sm:$0xf]
      %v3006 = vld [vmem:[%s2989 + $0x40] sm:$0xf]
      %v3007 = vld [vmem:[%s2989 + $0x44] sm:$0xf]
      %v3008 = vld [vmem:[%s2989 + $0x48] sm:$0xf]
      %v3009 = vld [vmem:[%s2989 + $0x4c] sm:$0xf]
      %v3010 = vld [vmem:[%s2989 + $0x50] sm:$0xf]
      %v3011 = vld [vmem:[%s2989 + $0x54] sm:$0xf]
      %v3012 = vld [vmem:[%s2989 + $0x58] sm:$0xf]
      %v3013 = vld [vmem:[%s2989 + $0x5c] sm:$0xf]
      %v3014 = vld [vmem:[%s2989 + $0x60] sm:$0xf]
      %v3015 = vld [vmem:[%s2989 + $0x64] sm:$0xf]
      %v3016 = vld [vmem:[%s2989 + $0x68] sm:$0xf]
      %v3017 = vld [vmem:[%s2989 + $0x6c] sm:$0xf]
      %v3018 = vld [vmem:[%s2989 + $0x70] sm:$0xf]
      %v3019 = vld [vmem:[%s2989 + $0x74] sm:$0xf]
      %v3020 = vld [vmem:[%s2989 + $0x78] sm:$0xf]
      %v3021 = vld [vmem:[%s2989 + $0x7c] sm:$0xf]
      %v3022 = vld [vmem:[%s2989 + $0x80] sm:$0xf]
      %v3023 = vld [vmem:[%s2989 + $0x84] sm:$0xf]
      %v3024 = vld [vmem:[%s2989 + $0x88] sm:$0xf]
      %v3025 = vld [vmem:[%s2989 + $0x8c] sm:$0xf]
      %v3026 = vld [vmem:[%s2989 + $0x90] sm:$0xf]
      %v3027 = vld [vmem:[%s2989 + $0x94] sm:$0xf]
      %v3028 = vld [vmem:[%s2989 + $0x98] sm:$0xf]
      %v3029 = vld [vmem:[%s2989 + $0x9c] sm:$0xf]
      %v3030 = vld [vmem:[%s2989 + $0xa0] sm:$0xf]
      %v3031 = vld [vmem:[%s2989 + $0xa4] sm:$0xf]
      %v3032 = vld [vmem:[%s2989 + $0xa8] sm:$0xf]
      %v3033 = vld [vmem:[%s2989 + $0xac] sm:$0xf]
      %v3034 = vld [vmem:[%s2989 + $0xb0] sm:$0xf]
      %v3035 = vld [vmem:[%s2989 + $0xb4] sm:$0xf]
      %v3036 = vld [vmem:[%s2989 + $0xb8] sm:$0xf]
      %v3037 = vld [vmem:[%s2989 + $0xbc] sm:$0xf]
      %v3038 = vld [vmem:[%s2989 + $0xc0] sm:$0xf]
      %v3039 = vld [vmem:[%s2989 + $0xc4] sm:$0xf]
      %v3040 = vld [vmem:[%s2989 + $0xc8] sm:$0xf]
      %v3041 = vld [vmem:[%s2989 + $0xcc] sm:$0xf]
      %v3042 = vld [vmem:[%s2989 + $0xd0] sm:$0xf]
      %v3043 = vld [vmem:[%s2989 + $0xd4] sm:$0xf]
      %v3044 = vld [vmem:[%s2989 + $0xd8] sm:$0xf]
      %v3045 = vld [vmem:[%s2989 + $0xdc] sm:$0xf]
      %v3046 = vld [vmem:[%s2989 + $0xe0] sm:$0xf]
      %v3047 = vld [vmem:[%s2989 + $0xe4] sm:$0xf]
      %v3048 = vld [vmem:[%s2989 + $0xe8] sm:$0xf]
      %v3049 = vld [vmem:[%s2989 + $0xec] sm:$0xf]
      %v3050 = vld [vmem:[%s2989 + $0xf0] sm:$0xf]
      %v3051 = vld [vmem:[%s2989 + $0xf4] sm:$0xf]
      %v3052 = vld [vmem:[%s2989 + $0xf8] sm:$0xf]
      %v3053 = vld [vmem:[%s2989 + $0xfc] sm:$0xf]
      %v3118 = vunpack.c.l.b16 %v2990
      %v3119 = vunpack.c.l.b16 %v2991
      %v3120 = vunpack.c.l.b16 %v2992
      %v3121 = vunpack.c.l.b16 %v2993
      %v3122 = vunpack.c.l.b16 %v2994
      %v3123 = vunpack.c.l.b16 %v2995
      %v3124 = vunpack.c.l.b16 %v2996
      %v3125 = vunpack.c.l.b16 %v2997
      %v3126 = vunpack.c.l.b16 %v2998
      %v3127 = vunpack.c.l.b16 %v2999
      %v3128 = vunpack.c.l.b16 %v3000
      %v3129 = vunpack.c.l.b16 %v3001
      %v3130 = vunpack.c.l.b16 %v3002
      %v3131 = vunpack.c.l.b16 %v3003
      %v3132 = vunpack.c.l.b16 %v3004
      %v3133 = vunpack.c.l.b16 %v3005
      %v3134 = vunpack.c.l.b16 %v3006
      %v3135 = vunpack.c.l.b16 %v3007
      %v3136 = vunpack.c.l.b16 %v3008
      %v3137 = vunpack.c.l.b16 %v3009
      %v3138 = vunpack.c.l.b16 %v3010
      %v3139 = vunpack.c.l.b16 %v3011
      %v3140 = vunpack.c.l.b16 %v3012
      %v3141 = vunpack.c.l.b16 %v3013
      %v3142 = vunpack.c.l.b16 %v3014
      %v3143 = vunpack.c.l.b16 %v3015
      %v3144 = vunpack.c.l.b16 %v3016
      %v3145 = vunpack.c.l.b16 %v3017
      %v3146 = vunpack.c.l.b16 %v3018
      %v3147 = vunpack.c.l.b16 %v3019
      %v3148 = vunpack.c.l.b16 %v3020
      %v3149 = vunpack.c.l.b16 %v3021
      %v3150 = vunpack.c.l.b16 %v3022
      %v3151 = vunpack.c.l.b16 %v3023
      %v3152 = vunpack.c.l.b16 %v3024
      %v3153 = vunpack.c.l.b16 %v3025
      %v3154 = vunpack.c.l.b16 %v3026
      %v3155 = vunpack.c.l.b16 %v3027
      %v3156 = vunpack.c.l.b16 %v3028
      %v3157 = vunpack.c.l.b16 %v3029
      %v3158 = vunpack.c.l.b16 %v3030
      %v3159 = vunpack.c.l.b16 %v3031
      %v3160 = vunpack.c.l.b16 %v3032
      %v3161 = vunpack.c.l.b16 %v3033
      %v3162 = vunpack.c.l.b16 %v3034
      %v3163 = vunpack.c.l.b16 %v3035
      %v3164 = vunpack.c.l.b16 %v3036
      %v3165 = vunpack.c.l.b16 %v3037
      %v3166 = vunpack.c.l.b16 %v3038
      %v3167 = vunpack.c.l.b16 %v3039
      %v3168 = vunpack.c.l.b16 %v3040
      %v3169 = vunpack.c.l.b16 %v3041
      %v3170 = vunpack.c.l.b16 %v3042
      %v3171 = vunpack.c.l.b16 %v3043
      %v3172 = vunpack.c.l.b16 %v3044
      %v3173 = vunpack.c.l.b16 %v3045
      %v3174 = vunpack.c.l.b16 %v3046
      %v3175 = vunpack.c.l.b16 %v3047
      %v3176 = vunpack.c.l.b16 %v3048
      %v3177 = vunpack.c.l.b16 %v3049
      %v3178 = vunpack.c.l.b16 %v3050
      %v3179 = vunpack.c.l.b16 %v3051
      %v3180 = vunpack.c.l.b16 %v3052
      %v3181 = vunpack.c.l.b16 %v3053
      %v3182 = vpack.c.b16 %v3119, %v3118
      %v3183 = vpack.c.b16 %v3121, %v3120
      %v3184 = vpack.c.b16 %v3123, %v3122
      %v3185 = vpack.c.b16 %v3125, %v3124
      %v3186 = vpack.c.b16 %v3127, %v3126
      %v3187 = vpack.c.b16 %v3129, %v3128
      %v3188 = vpack.c.b16 %v3131, %v3130
      %v3189 = vpack.c.b16 %v3133, %v3132
      %v3190 = vpack.c.b16 %v3135, %v3134
      %v3191 = vpack.c.b16 %v3137, %v3136
      %v3192 = vpack.c.b16 %v3139, %v3138
      %v3193 = vpack.c.b16 %v3141, %v3140
      %v3194 = vpack.c.b16 %v3143, %v3142
      %v3195 = vpack.c.b16 %v3145, %v3144
      %v3196 = vpack.c.b16 %v3147, %v3146
      %v3197 = vpack.c.b16 %v3149, %v3148
      %v3198 = vpack.c.b16 %v3151, %v3150
      %v3199 = vpack.c.b16 %v3153, %v3152
      %v3200 = vpack.c.b16 %v3155, %v3154
      %v3201 = vpack.c.b16 %v3157, %v3156
      %v3202 = vpack.c.b16 %v3159, %v3158
      %v3203 = vpack.c.b16 %v3161, %v3160
      %v3204 = vpack.c.b16 %v3163, %v3162
      %v3205 = vpack.c.b16 %v3165, %v3164
      %v3206 = vpack.c.b16 %v3167, %v3166
      %v3207 = vpack.c.b16 %v3169, %v3168
      %v3208 = vpack.c.b16 %v3171, %v3170
      %v3209 = vpack.c.b16 %v3173, %v3172
      %v3210 = vpack.c.b16 %v3175, %v3174
      %v3211 = vpack.c.b16 %v3177, %v3176
      %v3212 = vpack.c.b16 %v3179, %v3178
      %v3213 = vpack.c.b16 %v3181, %v3180
      %3246 = vmatprep.subr.bf16.mxu0 0
      %3247 = vmatpush1.bf16.msra.mxu0 %v3182
      %3248 = vmatprep.subr.bf16.mxu0 0
      %3249 = vmatpush1.bf16.msra.mxu0 %v3183
      %3250 = vmatprep.subr.bf16.mxu0 0
      %3251 = vmatpush1.bf16.msra.mxu0 %v3184
      %3252 = vmatprep.subr.bf16.mxu0 0
      %3253 = vmatpush1.bf16.msra.mxu0 %v3185
      %3254 = vmatprep.subr.bf16.mxu0 0
      %3255 = vmatpush1.bf16.msra.mxu0 %v3186
      %3256 = vmatprep.subr.bf16.mxu0 0
      %3257 = vmatpush1.bf16.msra.mxu0 %v3187
      %3258 = vmatprep.subr.bf16.mxu0 0
      %3259 = vmatpush1.bf16.msra.mxu0 %v3188
      %3260 = vmatprep.subr.bf16.mxu0 0
      %3261 = vmatpush1.bf16.msra.mxu0 %v3189
      %3262 = vmatprep.subr.bf16.mxu0 0
      %3263 = vmatpush1.bf16.msra.mxu0 %v3190
      %3264 = vmatprep.subr.bf16.mxu0 0
      %3265 = vmatpush1.bf16.msra.mxu0 %v3191
      %3266 = vmatprep.subr.bf16.mxu0 0
      %3267 = vmatpush1.bf16.msra.mxu0 %v3192
      %3268 = vmatprep.subr.bf16.mxu0 0
      %3269 = vmatpush1.bf16.msra.mxu0 %v3193
      %3270 = vmatprep.subr.bf16.mxu0 0
      %3271 = vmatpush1.bf16.msra.mxu0 %v3194
      %3272 = vmatprep.subr.bf16.mxu0 0
      %3273 = vmatpush1.bf16.msra.mxu0 %v3195
      %3274 = vmatprep.subr.bf16.mxu0 0
      %3275 = vmatpush1.bf16.msra.mxu0 %v3196
      %3276 = vmatprep.subr.bf16.mxu0 0
      %3277 = vmatpush1.bf16.msra.mxu0 %v3197
      %3278 = vmatprep.mubr.bf16.mxu0 %v2974
      %3279 = vmatmul.mubr.bf16.gmra.mrb[0].mxu0 %v2973
      %v3280 = vpop.f32.mrb[0].mxu0
      %v3281 = vadd.f32 0.0, %v3280
      %v3282 = vpop.f32.mrb[0].mxu0
      %v3283 = vpop.f32.mrb[0].mxu0
      %v3284 = vadd.f32 0.0, %v3283
      %v3285 = vpop.f32.mrb[0].mxu0
      %3286 = vmatprep.mubr.bf16.mxu0 %v2978
      %3287 = vmatmul.mubr.bf16.gmra.mrb[0].mxu0 %v2977
      %v3288 = vpop.f32.mrb[0].mxu0
      %v3289 = vadd.f32 0.0, %v3288
      %v3290 = vpop.f32.mrb[0].mxu0
      %v3291 = vpop.f32.mrb[0].mxu0
      %v3292 = vadd.f32 0.0, %v3291
      %v3293 = vpop.f32.mrb[0].mxu0
      %3294 = vmatprep.mubr.bf16.mxu0 %v2982
      %3295 = vmatmul.mubr.bf16.gmra.mrb[0].mxu0 %v2981
      %v3296 = vpop.f32.mrb[0].mxu0
      %v3297 = vadd.f32 0.0, %v3296
      %v3298 = vpop.f32.mrb[0].mxu0
      %v3299 = vpop.f32.mrb[0].mxu0
      %v3300 = vadd.f32 0.0, %v3299
      %v3301 = vpop.f32.mrb[0].mxu0
      %3302 = vmatprep.mubr.bf16.mxu0 %v2986
      %3303 = vmatmul.mubr.bf16.gmra.mrb[0].mxu0 %v2985
      %v3304 = vpop.f32.mrb[0].mxu0
      %v3305 = vadd.f32 0.0, %v3304
      %v3306 = vpop.f32.mrb[0].mxu0
      %v3307 = vpop.f32.mrb[0].mxu0
      %v3308 = vadd.f32 0.0, %v3307
      %v3309 = vpop.f32.mrb[0].mxu0
      %3310 = vdwg.mxu0
      %3311 = vmatprep.subr.bf16.mxu0 0
      %3312 = vmatpush1.bf16.msra.mxu0 %v3198
      %3313 = vmatprep.subr.bf16.mxu0 0
      %3314 = vmatpush1.bf16.msra.mxu0 %v3199
      %3315 = vmatprep.subr.bf16.mxu0 0
      %3316 = vmatpush1.bf16.msra.mxu0 %v3200
      %3317 = vmatprep.subr.bf16.mxu0 0
      %3318 = vmatpush1.bf16.msra.mxu0 %v3201
      %3319 = vmatprep.subr.bf16.mxu0 0
      %3320 = vmatpush1.bf16.msra.mxu0 %v3202
      %3321 = vmatprep.subr.bf16.mxu0 0
      %3322 = vmatpush1.bf16.msra.mxu0 %v3203
      %3323 = vmatprep.subr.bf16.mxu0 0
      %3324 = vmatpush1.bf16.msra.mxu0 %v3204
      %3325 = vmatprep.subr.bf16.mxu0 0
      %3326 = vmatpush1.bf16.msra.mxu0 %v3205
      %3327 = vmatprep.subr.bf16.mxu0 0
      %3328 = vmatpush1.bf16.msra.mxu0 %v3206
      %3329 = vmatprep.subr.bf16.mxu0 0
      %3330 = vmatpush1.bf16.msra.mxu0 %v3207
      %3331 = vmatprep.subr.bf16.mxu0 0
      %3332 = vmatpush1.bf16.msra.mxu0 %v3208
      %3333 = vmatprep.subr.bf16.mxu0 0
      %3334 = vmatpush1.bf16.msra.mxu0 %v3209
      %3335 = vmatprep.subr.bf16.mxu0 0
      %3336 = vmatpush1.bf16.msra.mxu0 %v3210
      %3337 = vmatprep.subr.bf16.mxu0 0
      %3338 = vmatpush1.bf16.msra.mxu0 %v3211
      %3339 = vmatprep.subr.bf16.mxu0 0
      %3340 = vmatpush1.bf16.msra.mxu0 %v3212
      %3341 = vmatprep.subr.bf16.mxu0 0
      %3342 = vmatpush1.bf16.msra.mxu0 %v3213
      %3343 = vmatprep.mubr.bf16.mxu0 %v2976
      %3344 = vmatmul.mubr.bf16.gmra.mrb[0].mxu0 %v2975
      %v3345 = vpop.f32.mrb[0].mxu0
      %v3346 = vadd.f32 %v3281, %v3345
      %v3347 = vpop.f32.mrb[0].mxu0
      %v3348 = vpop.f32.mrb[0].mxu0
      %v3349 = vadd.f32 %v3284, %v3348
      %v3350 = vpop.f32.mrb[0].mxu0
      %3351 = vmatprep.mubr.bf16.mxu0 %v2980
      %3352 = vmatmul.mubr.bf16.gmra.mrb[0].mxu0 %v2979
      %v3353 = vpop.f32.mrb[0].mxu0
      %v3354 = vadd.f32 %v3289, %v3353
      %v3355 = vpop.f32.mrb[0].mxu0
      %v3356 = vpop.f32.mrb[0].mxu0
      %v3357 = vadd.f32 %v3292, %v3356
      %v3358 = vpop.f32.mrb[0].mxu0
      %3359 = vmatprep.mubr.bf16.mxu0 %v2984
      %3360 = vmatmul.mubr.bf16.gmra.mrb[0].mxu0 %v2983
      %v3361 = vpop.f32.mrb[0].mxu0
      %v3362 = vadd.f32 %v3297, %v3361
      %v3363 = vpop.f32.mrb[0].mxu0
      %v3364 = vpop.f32.mrb[0].mxu0
      %v3365 = vadd.f32 %v3300, %v3364
      %v3366 = vpop.f32.mrb[0].mxu0
      %3367 = vmatprep.mubr.bf16.mxu0 %v2988
      %3368 = vmatmul.mubr.bf16.gmra.mrb[0].mxu0 %v2987
      %v3369 = vpop.f32.mrb[0].mxu0
      %v3370 = vadd.f32 %v3305, %v3369
      %v3371 = vpop.f32.mrb[0].mxu0
      %v3372 = vpop.f32.mrb[0].mxu0
      %v3373 = vadd.f32 %v3308, %v3372
      %v3374 = vpop.f32.mrb[0].mxu0
      %3375 = vdwg.mxu0
      %s3376 = scalar_lea.vmem %s204, 192
      %3377 = vst [vmem:[%s3376] sm:$0xff] %v3346
      %3378 = vst [vmem:[%s3376 + $0x8] sm:$0xff] %v3349
      %3379 = vst [vmem:[%s3376 + $0x10] sm:$0xff] %v3354
      %3380 = vst [vmem:[%s3376 + $0x18] sm:$0xff] %v3357
      %3381 = vst [vmem:[%s3376 + $0x20] sm:$0xff] %v3362
      %3382 = vst [vmem:[%s3376 + $0x28] sm:$0xff] %v3365
      %3383 = vst [vmem:[%s3376 + $0x30] sm:$0xff] %v3370
      %3384 = vst [vmem:[%s3376 + $0x38] sm:$0xff] %v3373
      %v3385 = vadd.f32 %v3346, %v3349
      %v3386 = vadd.f32 %v3385, %v3354
      %v3387 = vadd.f32 %v3386, %v3357
      %v3388 = vadd.f32 %v3387, %v3362
      %v3389 = vadd.f32 %v3388, %v3365
      %v3390 = vadd.f32 %v3389, %v3370
      %v3391 = vadd.f32 %v3390, %v3373
      %v3392 = vrot.slane %v3391, 4
      %v3393 = vadd.f32 %v3391, %v3392
      %v3394 = vrot.slane %v3393, 2
      %v3395 = vadd.f32 %v3393, %v3394
      %v3396 = vrot.slane %v3395, 1
      %v3397 = vadd.f32 %v3395, %v3396
      %v3398 = vadd.f32 %v2918, %v3397
      %v3399 = vmul.f32 %v3346, %v3346
      %v3400 = vmul.f32 %v3349, %v3349
      %v3401 = vmul.f32 %v3354, %v3354
      %v3402 = vmul.f32 %v3357, %v3357
      %v3403 = vmul.f32 %v3362, %v3362
      %v3404 = vmul.f32 %v3365, %v3365
      %v3405 = vmul.f32 %v3370, %v3370
      %v3406 = vmul.f32 %v3373, %v3373
      %v3407 = vadd.f32 %v3399, %v3400
      %v3408 = vadd.f32 %v3407, %v3401
      %v3409 = vadd.f32 %v3408, %v3402
      %v3410 = vadd.f32 %v3409, %v3403
      %v3411 = vadd.f32 %v3410, %v3404
      %v3412 = vadd.f32 %v3411, %v3405
      %v3413 = vadd.f32 %v3412, %v3406
      %v3414 = vrot.slane %v3413, 4
      %v3415 = vadd.f32 %v3413, %v3414
      %v3416 = vrot.slane %v3415, 2
      %v3417 = vadd.f32 %v3415, %v3416
      %v3418 = vrot.slane %v3417, 1
      %v3419 = vadd.f32 %v3417, %v3418
      %v3420 = vadd.f32 %v2940, %v3419
      %3421 = vst [vmem:[%s208] sm:$0x1] %v3398
      %3422 = vst [vmem:[%s208 + $0x1] sm:$0x1] %v3420
      %p3423 = scmp.lt.s32.totalorder %s16, 1
      %s3424 = scalar_select %p3423, %s16, 1
      %s3425 = smul.addr %s3424, 32
      %s3426 = smul.addr %s3425, 8
      %s3427 = scalar_lea.vmem %s3, %s3426
      %p3428 = scmp.lt.s32.totalorder %s16, 1
      %s3429 = scalar_select %p3428, %s16, 1
      %s3430 = smul.addr %s3429, 2
      %s3431 = scalar_lea.vmem %s4, %s3430
      // Predicated region
      $region33: #{unet_innermost_forward.2} parent=31 // pred_check
        %p3432 = pneg %p102
      $region34: #{unet_innermost_forward.2} parent=31 // pred_check_branch
        %3434 = sbr.rel (%p3432) target = $region36
      $region35: #{unet_innermost_forward.2} parent=31 // pred_region
        _
      $region36: #{unet_innermost_forward.2} parent=31 // pred_fallthru
        _
      // Predicated region
      $region37: #{unet_innermost_forward.2} parent=31 // pred_check
        %p3435 = pneg %p128
      $region38: #{unet_innermost_forward.2} parent=31 // pred_check_branch
        %3437 = sbr.rel (%p3435) target = $region40
      $region39: #{unet_innermost_forward.2} parent=31 // pred_region
        _
      $region40: #{unet_innermost_forward.2} parent=31 // pred_fallthru
        _
    $region32: #{unet_innermost_forward.2} parent=5 // pred_fallthru
      _
    %p3438 = scmp.le.s32.totalorder 2, %s11
    // Predicated region
    $region41: #{unet_innermost_forward.2} parent=5 // pred_check
      %p3439 = pneg %p3438
    $region42: #{unet_innermost_forward.2} parent=5 // pred_check_branch
      %3441 = sbr.rel (%p3439) target = $region44
    $region43: #{unet_innermost_forward.2} parent=5 // pred_region
      %s3442 = ssub.s32 %s11, 2
      // Predicated region
      $region45: #{unet_innermost_forward.2} parent=43 // pred_check
        %p3443 = pneg %p108
      $region46: #{unet_innermost_forward.2} parent=43 // pred_check_branch
        %3445 = sbr.rel (%p3443) target = $region48
      $region47: #{unet_innermost_forward.2} parent=43 // pred_region
        %p3446 = scmp.lt.s32.totalorder %s17, 1
        %s3447 = scalar_select %p3446, %s17, 1
        %s3448 = smul.addr %s3447, 32
        %s3449 = smul.addr %s3448, 8
        %s3450 = scalar_lea.vmem %s3, %s3449
      $region48: #{unet_innermost_forward.2} parent=43 // pred_fallthru
        _
      // Predicated region
      $region49: #{unet_innermost_forward.2} parent=43 // pred_check
        %p3451 = pneg %p134
      $region50: #{unet_innermost_forward.2} parent=43 // pred_check_branch
        %3453 = sbr.rel (%p3451) target = $region52
      $region51: #{unet_innermost_forward.2} parent=43 // pred_region
        %p3454 = scmp.lt.s32.totalorder %s17, 1
        %s3455 = scalar_select %p3454, %s17, 1
        %s3456 = smul.addr %s3455, 2
        %s3457 = scalar_lea.vmem %s4, %s3456
      $region52: #{unet_innermost_forward.2} parent=43 // pred_fallthru
        _
    $region44: #{unet_innermost_forward.2} parent=5 // pred_fallthru
      _
  $region6: #{unet_innermost_forward.2} parent=0 // loop_footer
    %s15 = sadd.s32 1, %s11
  $region7: #{unet_innermost_forward.2} parent=0 // loop_footer_branch
    %10 = sbr.rel target = $region3
  $region8: #{unet_innermost_forward.2} parent=0 // loop_exit
    _

</llo_original>
